<compile_context>
chip_gen: v7x
topology: tpu7x:2x2x1
jax: 0.10.0
libtpu: 0.0.40
codegen_flags: <defaults>
</compile_context>

<pallas_src>
import functools
import math

import numpy as np
import jax
import jax.numpy as jnp
from jax.experimental import pallas as pl
from jax.experimental.pallas import tpu as pltpu


# ----------------------------------------------------------------------------
# Fused Pallas kernel
# ----------------------------------------------------------------------------
def _fused_forward_kernel(const_names, dims, *refs):
    """refs = [maps2, hl2, vl2, hl1, vl1, *consts, out].

    Activations are lane-dense slabs  x[b*H + y, x*C + c]  with batch folded
    into rows.  Every conv / upsample / filter-broadcast is a 2-D MXU matmul
    against a host-precomputed structured matrix; row shifts are XLU rolls.
    """
    h0, h2, h1, t2, t1, wc2, wc1 = dims
    n_act = 5
    maps_ref, hl2_ref, vl2_ref, hl1_ref, vl1_ref = refs[:n_act]
    n_c = len(const_names)
    c = dict(zip(const_names, refs[n_act:n_act + n_c]))
    out_ref = refs[n_act + n_c]
    f32 = jnp.float32

    def shifted_triple(x, im_h):
        # [x shifted by dy=-1, x, x shifted by dy=+1]; zero-padding is enforced
        # at per-image row boundaries (batch is folded into rows).
        rows = x.shape[0]
        up = pltpu.roll(x, shift=1, axis=0) * c["mt%d" % im_h][...]
        dn = pltpu.roll(x, shift=rows - 1, axis=0) * c["mb%d" % im_h][...]
        return [up, x, dn]

    def conv(pieces, im_h, a_name, b_name):
        # 3x3 conv (stride 1, pad 1) + folded eval-BN + ReLU over the channel
        # concat of `pieces`, as a single matmul against the K-stacked A.
        cols = []
        for xj in pieces:
            cols.extend(shifted_triple(xj, im_h))
        xb = jnp.concatenate(cols, axis=1)
        o = jnp.dot(xb, c[a_name][...], preferred_element_type=f32) + c[b_name][...]
        return jnp.maximum(o, 0.0)

    def row_upsample(x, l_name):
        # bilinear x2 (align_corners=True) row interpolation; the column
        # interpolation is pre-folded into the consumers' A matrices.
        return jnp.dot(c[l_name][...], x, preferred_element_type=f32)

    def df_weighted_sums(d, e_name, h_ref, v_ref, T, wc):
        # sum_t filter_t (broadcast over channels) * maps[t], for hl and vl.
        # One matmul against the t-stacked 0/1 expansion matrix, then
        # 128-lane-aligned slices feed the VPU multiply-adds.
        dt_all = jnp.dot(d, c[e_name][...], preferred_element_type=f32)
        hs = None
        vs = None
        for t in range(T):
            dt = dt_all[:, t * wc:(t + 1) * wc]
            ht = dt * h_ref[t]
            vt = dt * v_ref[t]
            hs = ht if hs is None else hs + ht
            vs = vt if vs is None else vs + vt
        return hs, vs

    # ---- decoderLayer1 (image height h0) ---------------------------------
    x = maps_ref[...]
    x = conv([x], h0, "d1c1_A", "d1c1_b")
    x = conv([x], h0, "d1c2_A", "d1c2_b")
    v = row_upsample(x, "up2_L")                       # rows now at height h2

    # ---- dfNet2 + dynamic-filter weighted sums (height h2) ---------------
    d = conv([v], h2, "df2c1_A", "df2c1_b")
    d = conv([d], h2, "df2c2_A", "df2c2_b")
    hl2s, vl2s = df_weighted_sums(d, "df2_E", hl2_ref, vl2_ref, t2, wc2)

    # ---- decoderLayer2 (channel concat folded into the K-stacked A) ------
    x = conv([v, hl2s, vl2s], h2, "d2c1_A", "d2c1_b")
    x = conv([x], h2, "d2c2_A", "d2c2_b")
    v = row_upsample(x, "up1_L")                       # rows now at height h1

    # ---- dfNet1 + dynamic-filter weighted sums (height h1) ---------------
    d = conv([v], h1, "df1c1_A", "df1c1_b")
    d = conv([d], h1, "df1c2_A", "df1c2_b")
    hl1s, vl1s = df_weighted_sums(d, "df1_E", hl1_ref, vl1_ref, t1, wc1)

    # ---- decoderLayer3 (output channels zero-padded to 128-lane multiple) -
    x = conv([v, hl1s, vl1s], h1, "d3c1_A", "d3c1_b")
    x = conv([x], h1, "d3c2_A", "d3c2_b")
    out_ref[...] = x


# ----------------------------------------------------------------------------
# Host-side structured-matrix construction
# ----------------------------------------------------------------------------
def _interp_matrix_1d(n_in, n_out):
    """nn.Upsample(mode='bilinear', align_corners=True) 1-D interpolation matrix."""
    L = np.zeros((n_out, n_in), np.float32)
    if n_in == 1:
        L[:, 0] = 1.0
        return L
    for o in range(n_out):
        p = o * (n_in - 1) / (n_out - 1)
        i0 = min(int(math.floor(p)), n_in - 2)
        w = p - i0
        L[o, i0] += 1.0 - w
        L[o, i0 + 1] += w
    return L


def _conv_A_dy(w, w_spatial, dy):
    """w: (3,3,Cin,Cout) HWIO.  A_dy[x'*Cin+ci, x*Cout+co] = w[dy+1, (x'-x)+1, ci, co]
    (zero outside |x'-x|<=1), so a zero-padded 3x3 conv in (rows, W*C) layout is
    sum_dy shift_dy(x) @ A_dy."""
    cin, cout = w.shape[2], w.shape[3]
    a = np.zeros((w_spatial * cin, w_spatial * cout), np.float32)
    for dx in (-1, 0, 1):
        cdx_t = np.eye(w_spatial, w_spatial, k=dx).T.astype(np.float32)
        a += np.kron(cdx_t, np.asarray(w[dy + 1, dx + 1], np.float32))
    return a


def _stacked_conv_A(w_spatial, pieces):
    """K-stack of (pre_j @ A^{j}_dy) over pieces j and dy in (-1,0,1).  The order
    must match the kernel's lane-concat [per piece: shift(-1), x, shift(+1)]."""
    blocks = []
    for w, pre in pieces:
        for dy in (-1, 0, 1):
            a = _conv_A_dy(w, w_spatial, dy)
            if pre is not None:
                a = pre @ a
            blocks.append(a)
    return jnp.asarray(np.concatenate(blocks, axis=0))


def _bias_row(b, w_spatial):
    return jnp.asarray(np.tile(np.asarray(b, np.float32), w_spatial)[None, :])


def _expand_stacked(w_spatial, t_frames, c_chan):
    """E[x'*T+t', t*W*C + x*C + c] = (x'==x)&(t'==t): broadcasts filter t over
    channels for every t with a single matmul."""
    e = np.zeros((w_spatial * t_frames, t_frames * w_spatial * c_chan), np.float32)
    for t in range(t_frames):
        for x in range(w_spatial):
            base = t * w_spatial * c_chan + x * c_chan
            e[x * t_frames + t, base:base + c_chan] = 1.0
    return jnp.asarray(e)


# ----------------------------------------------------------------------------
# Parameters (deterministic, synthetic) + per-channel eval-BatchNorm fold
# ----------------------------------------------------------------------------
def make_block_params(key, cin, cout):
    kw, kb, kg, kbe, km, kv = jax.random.split(key, 6)
    fan_in = cin * 9
    return dict(
        w=jax.random.normal(kw, (3, 3, cin, cout), jnp.float32) / math.sqrt(fan_in),
        b=jax.random.normal(kb, (cout,), jnp.float32) * 0.01,
        gamma=1.0 + 0.25 * jax.random.normal(kg, (cout,), jnp.float32),
        beta=0.1 * jax.random.normal(kbe, (cout,), jnp.float32),
        mean=0.1 * jax.random.normal(km, (cout,), jnp.float32),
        var=1.0 + 0.25 * jax.random.uniform(kv, (cout,), jnp.float32),
    )


def fold_bn(p, eps=1e-5):
    """Per-channel eval-mode BatchNorm fold into conv weight / bias."""
    scale = np.asarray(p["gamma"]) / np.sqrt(np.asarray(p["var"]) + eps)
    w = np.asarray(p["w"]) * scale[None, None, None, :]
    b = (np.asarray(p["b"]) - np.asarray(p["mean"])) * scale + np.asarray(p["beta"])
    return w.astype(np.float32), b.astype(np.float32)


def init_params(key, nf, ngf, nkpt):
    nf8, nf4, nf2 = nf * 8, nf * 4, nf * 2
    keys = jax.random.split(key, 10)
    return {
        "d1c1": make_block_params(keys[0], nf8 * 2, nf8),
        "d1c2": make_block_params(keys[1], nf8, nf4),
        "df2c1": make_block_params(keys[2], nf4, nf4),
        "df2c2": make_block_params(keys[3], nf4, ngf // 2),
        "d2c1": make_block_params(keys[4], nf4 * 3, nf4),
        "d2c2": make_block_params(keys[5], nf4, nf2),
        "df1c1": make_block_params(keys[6], nf2, nf2),
        "df1c2": make_block_params(keys[7], nf2, ngf),
        "d3c1": make_block_params(keys[8], nf2 * 3, nf2),
        "d3c2": make_block_params(keys[9], nf2, nkpt),
    }


def build_constants(params, numFilters, numGroupFrames, heatmapSize, numKeypoints, batch):
    """Host-side structured matrices.

    Scaling guard (perf-review item): the dense A matrices are
    O((W*Cin)*(W*Cout)) and grow quadratically with heatmapSize / numFilters;
    at this config they total < 3 MiB, but switch to per-(dy,dx) dense weights
    + lane rolls (or tile A along W) before scaling the config up, or v7x's
    64 MiB VMEM will overflow.
    TODO(synk): casting these constants (and the activation slabs) to bf16
    with f32 accumulation would halve DMA/VMEM and speed up the MXU further.
    """
    nf8, nf4, nf2 = numFilters * 8, numFilters * 4, numFilters * 2
    s0 = heatmapSize // 4
    w0, w2, w1 = s0, 2 * s0, 4 * s0
    t2, t1 = numGroupFrames // 2, numGroupFrames
    c = {}

    # Bilinear x2 (align_corners=True): row interpolation stays an explicit
    # block-diagonal-over-batch matmul; the column interpolation K_up is folded
    # into the consumers' A matrices.
    L2 = _interp_matrix_1d(w0, w2)
    L1 = _interp_matrix_1d(w2, w1)
    kup2 = np.kron(L2.T, np.eye(nf4, dtype=np.float32))      # (w0*nf4, w2*nf4)
    kup1 = np.kron(L1.T, np.eye(nf2, dtype=np.float32))      # (w2*nf2, w1*nf2)
    c["up2_L"] = jnp.asarray(np.kron(np.eye(batch, dtype=np.float32), L2))
    c["up1_L"] = jnp.asarray(np.kron(np.eye(batch, dtype=np.float32), L1))

    def add(name, w_spatial, pieces, b):
        c[name + "_A"] = _stacked_conv_A(w_spatial, pieces)
        c[name + "_b"] = _bias_row(b, w_spatial)

    # decoderLayer1 (spatial w0)
    w, b = fold_bn(params["d1c1"]); add("d1c1", w0, [(w, None)], b)
    w, b = fold_bn(params["d1c2"]); add("d1c2", w0, [(w, None)], b)

    # dfNet2 + decoderLayer2 (spatial w2); upsampled-x pieces get K_up2 folded in
    w, b = fold_bn(params["df2c1"]); add("df2c1", w2, [(w, kup2)], b)
    w, b = fold_bn(params["df2c2"]); add("df2c2", w2, [(w, None)], b)
    c["df2_E"] = _expand_stacked(w2, t2, nf4)
    w, b = fold_bn(params["d2c1"])
    add("d2c1", w2, [(w[:, :, :nf4, :], kup2),
                     (w[:, :, nf4:2 * nf4, :], None),
                     (w[:, :, 2 * nf4:, :], None)], b)
    w, b = fold_bn(params["d2c2"]); add("d2c2", w2, [(w, None)], b)

    # dfNet1 + decoderLayer3 (spatial w1)
    w, b = fold_bn(params["df1c1"]); add("df1c1", w1, [(w, kup1)], b)
    w, b = fold_bn(params["df1c2"]); add("df1c2", w1, [(w, None)], b)
    c["df1_E"] = _expand_stacked(w1, t1, nf2)
    w, b = fold_bn(params["d3c1"])
    add("d3c1", w1, [(w[:, :, :nf2, :], kup1),
                     (w[:, :, nf2:2 * nf2, :], None),
                     (w[:, :, 2 * nf2:, :], None)], b)

    # Final conv: zero-pad output channels so the output slab is a multiple of
    # 128 lanes (full-width vst); the pad channels are sliced off in XLA.
    w, b = fold_bn(params["d3c2"])
    g = 128 // math.gcd(w1, 128)
    kpad = ((numKeypoints + g - 1) // g) * g
    wp = np.zeros((3, 3, nf2, kpad), np.float32); wp[..., :numKeypoints] = w
    bp = np.zeros((kpad,), np.float32); bp[:numKeypoints] = b
    add("d3c2", w1, [(wp, None)], bp)

    # Per-image row-boundary masks for the dy=+-1 shifts (batch folded in rows).
    for imh in (w0, w2, w1):
        rows = batch * imh
        mt = np.ones((rows, 1), np.float32); mt[0::imh] = 0.0          # dy = -1
        mb = np.ones((rows, 1), np.float32); mb[imh - 1::imh] = 0.0    # dy = +1
        c["mt%d" % imh] = jnp.asarray(mt)
        c["mb%d" % imh] = jnp.asarray(mb)
    return c


# ----------------------------------------------------------------------------
# Forward pass (modelType == 'heatmapMSE')
# ----------------------------------------------------------------------------
def forward(constants, hl1maps, hl2maps, vl1maps, vl2maps, maps, num_keypoints=14):
    B, C0, H0, W0 = maps.shape                    # (B, 2*nf8, s0, s0)   NCHW
    _, C2, T2, H2, W2 = hl2maps.shape             # (B, nf4, T/2, 2s0, 2s0)
    _, C1, T1, H1, W1 = hl1maps.shape             # (B, nf2, T,   4s0, 4s0)
    kpad = constants["d3c2_b"].shape[1] // W1

    # Lane-dense slabs with batch folded into rows: x[b*H + y, x*C + c].
    maps2 = maps.transpose(0, 2, 3, 1).reshape(B * H0, W0 * C0)
    hl2 = hl2maps.transpose(2, 0, 3, 4, 1).reshape(T2, B * H2, W2 * C2)
    vl2 = vl2maps.transpose(2, 0, 3, 4, 1).reshape(T2, B * H2, W2 * C2)
    hl1 = hl1maps.transpose(2, 0, 3, 4, 1).reshape(T1, B * H1, W1 * C1)
    vl1 = vl1maps.transpose(2, 0, 3, 4, 1).reshape(T1, B * H1, W1 * C1)

    acts = [maps2, hl2, vl2, hl1, vl1]
    const_names = tuple(constants.keys())
    const_arrays = [constants[k] for k in const_names]
    dims = (H0, H2, H1, T2, T1, W2 * C2, W1 * C1)

    def full_spec(a):
        nd = a.ndim
        return pl.BlockSpec(tuple(a.shape), lambda i, _n=nd: (0,) * _n)

    out_rows, out_lanes = B * H1, W1 * kpad
    out2 = pl.pallas_call(
        functools.partial(_fused_forward_kernel, const_names, dims),
        out_shape=jax.ShapeDtypeStruct((out_rows, out_lanes), jnp.float32),
        grid=(1,),
        in_specs=[full_spec(a) for a in acts] + [full_spec(a) for a in const_arrays],
        out_specs=pl.BlockSpec((out_rows, out_lanes), lambda i: (0, 0)),
        compiler_params=pltpu.CompilerParams(
            dimension_semantics=("arbitrary",),
            vmem_limit_bytes=32 * 1024 * 1024),
    )(*acts, *const_arrays)

    # Un-fold: (B*H1, W1*kpad) -> (B, nkpt, H1, W1); drop the pad channels.
    out = out2.reshape(B, H1, W1, kpad)[..., :num_keypoints].transpose(0, 3, 1, 2)

    # TODO(synk): GCN1/GCN2 (self.gcn) are not defined in the reference module
    # and do not feed the modelType=='heatmapMSE' return value, so the GCN
    # branch is intentionally omitted.

    # modelType == 'heatmapMSE'  ->  output.unsqueeze(2)
    return out[:, :, None, :, :]


# ----------------------------------------------------------------------------
# Pure-JAX NCHW reference of the module forward (un-folded conv + eval BN)
# ----------------------------------------------------------------------------
def reference_forward(params, hl1maps, hl2maps, vl1maps, vl2maps, maps, eps=1e-5):
    hi = jax.lax.Precision.HIGHEST

    def block(x, p):
        y = jax.lax.conv_general_dilated(
            x, p["w"], window_strides=(1, 1), padding=((1, 1), (1, 1)),
            dimension_numbers=("NCHW", "HWIO", "NCHW"), precision=hi)
        y = y + p["b"][None, :, None, None]
        y = (y - p["mean"][None, :, None, None]) * (
            p["gamma"] / jnp.sqrt(p["var"] + eps))[None, :, None, None]
        y = y + p["beta"][None, :, None, None]
        return jnp.maximum(y, 0.0)

    def up2x(x):
        _, _, Hq, Wq = x.shape
        Lh = jnp.asarray(_interp_matrix_1d(Hq, 2 * Hq))
        Lw = jnp.asarray(_interp_matrix_1d(Wq, 2 * Wq))
        y = jnp.einsum("oy,bcyx->bcox", Lh, x, precision=hi)
        return jnp.einsum("px,bcox->bcop", Lw, y, precision=hi)

    x = block(maps, params["d1c1"])
    x = block(x, params["d1c2"])
    x = up2x(x)
    d = block(x, params["df2c1"])
    d = block(d, params["df2c2"])
    hl2s = jnp.sum(d[:, None] * hl2maps, axis=2)
    vl2s = jnp.sum(d[:, None] * vl2maps, axis=2)
    x = block(jnp.concatenate([x, hl2s, vl2s], axis=1), params["d2c1"])
    x = block(x, params["d2c2"])
    x = up2x(x)
    d = block(x, params["df1c1"])
    d = block(d, params["df1c2"])
    hl1s = jnp.sum(d[:, None] * hl1maps, axis=2)
    vl1s = jnp.sum(d[:, None] * vl1maps, axis=2)
    x = block(jnp.concatenate([x, hl1s, vl1s], axis=1), params["d3c1"])
    x = block(x, params["d3c2"])
    return x[:, :, None, :, :]


if __name__ == "__main__":
    # Small config consistent with the module.
    B = 2
    numFilters = 4            # nf8=32, nf4=16, nf2=8
    numGroupFrames = 8        # T1=8, T2=4
    heatmapSize = 16          # decoder input spatial = 16 // 4 = 4
    numKeypoints = 14
    s0 = heatmapSize // 4
    nf8, nf4, nf2 = numFilters * 8, numFilters * 4, numFilters * 2

    key = jax.random.PRNGKey(0)
    k_par, k1, k2, k3, k4, k5 = jax.random.split(key, 6)
    params = init_params(k_par, numFilters, numGroupFrames, numKeypoints)
    constants = build_constants(params, numFilters, numGroupFrames,
                                heatmapSize, numKeypoints, B)

    maps = jax.random.normal(k1, (B, nf8 * 2, s0, s0), jnp.float32)
    hl2maps = jax.random.normal(k2, (B, nf4, numGroupFrames // 2, 2 * s0, 2 * s0), jnp.float32)
    vl2maps = jax.random.normal(k3, (B, nf4, numGroupFrames // 2, 2 * s0, 2 * s0), jnp.float32)
    hl1maps = jax.random.normal(k4, (B, nf2, numGroupFrames, 4 * s0, 4 * s0), jnp.float32)
    vl1maps = jax.random.normal(k5, (B, nf2, numGroupFrames, 4 * s0, 4 * s0), jnp.float32)

    fwd = jax.jit(functools.partial(forward, num_keypoints=numKeypoints))
    out = jax.block_until_ready(fwd(constants, hl1maps, hl2maps, vl1maps, vl2maps, maps))
    assert out.shape == (B, numKeypoints, 1, heatmapSize, heatmapSize), out.shape
    assert bool(jnp.all(jnp.isfinite(out)))

    # Correctness check: fused Pallas kernel vs. pure-JAX NCHW reference.
    ref = reference_forward(params, hl1maps, hl2maps, vl1maps, vl2maps, maps)
    np.testing.assert_allclose(np.asarray(out), np.asarray(ref), rtol=5e-2, atol=5e-2)
    print("KERNEL_OK")
</pallas_src>

<mosaic_0001>
module attributes {stable_mosaic.version = 11 : i64} {
  func.func @_fused_forward_kernel(%arg0: i32, %arg1: memref<8x256xf32, #tpu.memory_space<vmem>>, %arg2: memref<4x16x128xf32, #tpu.memory_space<vmem>>, %arg3: memref<4x16x128xf32, #tpu.memory_space<vmem>>, %arg4: memref<8x32x128xf32, #tpu.memory_space<vmem>>, %arg5: memref<8x32x128xf32, #tpu.memory_space<vmem>>, %arg6: memref<768x128xf32, #tpu.memory_space<vmem>>, %arg7: memref<1x128xf32, #tpu.memory_space<vmem>>, %arg8: memref<384x64xf32, #tpu.memory_space<vmem>>, %arg9: memref<1x64xf32, #tpu.memory_space<vmem>>, %arg10: memref<960x128xf32, #tpu.memory_space<vmem>>, %arg11: memref<1x128xf32, #tpu.memory_space<vmem>>, %arg12: memref<384x64xf32, #tpu.memory_space<vmem>>, %arg13: memref<1x64xf32, #tpu.memory_space<vmem>>, %arg14: memref<960x128xf32, #tpu.memory_space<vmem>>, %arg15: memref<1x128xf32, #tpu.memory_space<vmem>>, %arg16: memref<384x256xf32, #tpu.memory_space<vmem>>, %arg17: memref<1x256xf32, #tpu.memory_space<vmem>>, %arg18: memref<128x1024xf32, #tpu.memory_space<vmem>>, %arg19: memref<192x128xf32, #tpu.memory_space<vmem>>, %arg20: memref<1x128xf32, #tpu.memory_space<vmem>>, %arg21: memref<384x128xf32, #tpu.memory_space<vmem>>, %arg22: memref<1x128xf32, #tpu.memory_space<vmem>>, %arg23: memref<32x512xf32, #tpu.memory_space<vmem>>, %arg24: memref<192x128xf32, #tpu.memory_space<vmem>>, %arg25: memref<1x128xf32, #tpu.memory_space<vmem>>, %arg26: memref<384x32xf32, #tpu.memory_space<vmem>>, %arg27: memref<1x32xf32, #tpu.memory_space<vmem>>, %arg28: memref<32x1xf32, #tpu.memory_space<vmem>>, %arg29: memref<8x1xf32, #tpu.memory_space<vmem>>, %arg30: memref<16x1xf32, #tpu.memory_space<vmem>>, %arg31: memref<32x1xf32, #tpu.memory_space<vmem>>, %arg32: memref<8x1xf32, #tpu.memory_space<vmem>>, %arg33: memref<16x1xf32, #tpu.memory_space<vmem>>, %arg34: memref<32x16xf32, #tpu.memory_space<vmem>>, %arg35: memref<16x8xf32, #tpu.memory_space<vmem>>, %arg36: memref<32x256xf32, #tpu.memory_space<vmem>>) attributes {dimension_semantics = [#tpu.dimension_semantics<arbitrary>], iteration_bounds = array<i64: 1>, scalar_prefetch = 0 : i64, scratch_operands = 0 : i64, tpu.core_type = #tpu.core_type<tc>, window_params = [{pipeline_mode = #tpu.pipeline_mode<synchronous>, transform_indices = @transform_0, window_bounds = array<i64: 8, 256>}, {pipeline_mode = #tpu.pipeline_mode<synchronous>, transform_indices = @transform_1, window_bounds = array<i64: 4, 16, 128>}, {pipeline_mode = #tpu.pipeline_mode<synchronous>, transform_indices = @transform_2, window_bounds = array<i64: 4, 16, 128>}, {pipeline_mode = #tpu.pipeline_mode<synchronous>, transform_indices = @transform_3, window_bounds = array<i64: 8, 32, 128>}, {pipeline_mode = #tpu.pipeline_mode<synchronous>, transform_indices = @transform_4, window_bounds = array<i64: 8, 32, 128>}, {pipeline_mode = #tpu.pipeline_mode<synchronous>, transform_indices = @transform_5, window_bounds = array<i64: 768, 128>}, {pipeline_mode = #tpu.pipeline_mode<synchronous>, transform_indices = @transform_6, window_bounds = array<i64: 1, 128>}, {pipeline_mode = #tpu.pipeline_mode<synchronous>, transform_indices = @transform_7, window_bounds = array<i64: 384, 64>}, {pipeline_mode = #tpu.pipeline_mode<synchronous>, transform_indices = @transform_8, window_bounds = array<i64: 1, 64>}, {pipeline_mode = #tpu.pipeline_mode<synchronous>, transform_indices = @transform_9, window_bounds = array<i64: 960, 128>}, {pipeline_mode = #tpu.pipeline_mode<synchronous>, transform_indices = @transform_10, window_bounds = array<i64: 1, 128>}, {pipeline_mode = #tpu.pipeline_mode<synchronous>, transform_indices = @transform_11, window_bounds = array<i64: 384, 64>}, {pipeline_mode = #tpu.pipeline_mode<synchronous>, transform_indices = @transform_12, window_bounds = array<i64: 1, 64>}, {pipeline_mode = #tpu.pipeline_mode<synchronous>, transform_indices = @transform_13, window_bounds = array<i64: 960, 128>}, {pipeline_mode = #tpu.pipeline_mode<synchronous>, transform_indices = @transform_14, window_bounds = array<i64: 1, 128>}, {pipeline_mode = #tpu.pipeline_mode<synchronous>, transform_indices = @transform_15, window_bounds = array<i64: 384, 256>}, {pipeline_mode = #tpu.pipeline_mode<synchronous>, transform_indices = @transform_16, window_bounds = array<i64: 1, 256>}, {pipeline_mode = #tpu.pipeline_mode<synchronous>, transform_indices = @transform_17, window_bounds = array<i64: 128, 1024>}, {pipeline_mode = #tpu.pipeline_mode<synchronous>, transform_indices = @transform_18, window_bounds = array<i64: 192, 128>}, {pipeline_mode = #tpu.pipeline_mode<synchronous>, transform_indices = @transform_19, window_bounds = array<i64: 1, 128>}, {pipeline_mode = #tpu.pipeline_mode<synchronous>, transform_indices = @transform_20, window_bounds = array<i64: 384, 128>}, {pipeline_mode = #tpu.pipeline_mode<synchronous>, transform_indices = @transform_21, window_bounds = array<i64: 1, 128>}, {pipeline_mode = #tpu.pipeline_mode<synchronous>, transform_indices = @transform_22, window_bounds = array<i64: 32, 512>}, {pipeline_mode = #tpu.pipeline_mode<synchronous>, transform_indices = @transform_23, window_bounds = array<i64: 192, 128>}, {pipeline_mode = #tpu.pipeline_mode<synchronous>, transform_indices = @transform_24, window_bounds = array<i64: 1, 128>}, {pipeline_mode = #tpu.pipeline_mode<synchronous>, transform_indices = @transform_25, window_bounds = array<i64: 384, 32>}, {pipeline_mode = #tpu.pipeline_mode<synchronous>, transform_indices = @transform_26, window_bounds = array<i64: 1, 32>}, {pipeline_mode = #tpu.pipeline_mode<synchronous>, transform_indices = @transform_27, window_bounds = array<i64: 32, 1>}, {pipeline_mode = #tpu.pipeline_mode<synchronous>, transform_indices = @transform_28, window_bounds = array<i64: 8, 1>}, {pipeline_mode = #tpu.pipeline_mode<synchronous>, transform_indices = @transform_29, window_bounds = array<i64: 16, 1>}, {pipeline_mode = #tpu.pipeline_mode<synchronous>, transform_indices = @transform_30, window_bounds = array<i64: 32, 1>}, {pipeline_mode = #tpu.pipeline_mode<synchronous>, transform_indices = @transform_31, window_bounds = array<i64: 8, 1>}, {pipeline_mode = #tpu.pipeline_mode<synchronous>, transform_indices = @transform_32, window_bounds = array<i64: 16, 1>}, {pipeline_mode = #tpu.pipeline_mode<synchronous>, transform_indices = @transform_33, window_bounds = array<i64: 32, 16>}, {pipeline_mode = #tpu.pipeline_mode<synchronous>, transform_indices = @transform_34, window_bounds = array<i64: 16, 8>}, {pipeline_mode = #tpu.pipeline_mode<synchronous>, transform_indices = @transform_35, window_bounds = array<i64: 32, 256>}]} {
    %c0 = arith.constant 0 : index
    %c0_0 = arith.constant 0 : index
    %0 = vector.load %arg1[%c0, %c0_0] : memref<8x256xf32, #tpu.memory_space<vmem>>, vector<8x256xf32>
    %c1_i32 = arith.constant 1 : i32
    %1 = tpu.dynamic_rotate %0 by %c1_i32 dim 0 : vector<8x256xf32>, i32 -> vector<8x256xf32>
    %c0_1 = arith.constant 0 : index
    %c0_2 = arith.constant 0 : index
    %2 = vector.load %arg32[%c0_1, %c0_2] : memref<8x1xf32, #tpu.memory_space<vmem>>, vector<8x1xf32>
    %3 = vector.broadcast %2 : vector<8x1xf32> to vector<8x256xf32>
    %4 = arith.mulf %1, %3 : vector<8x256xf32>
    %c7_i32 = arith.constant 7 : i32
    %5 = tpu.dynamic_rotate %0 by %c7_i32 dim 0 : vector<8x256xf32>, i32 -> vector<8x256xf32>
    %c0_3 = arith.constant 0 : index
    %c0_4 = arith.constant 0 : index
    %6 = vector.load %arg29[%c0_3, %c0_4] : memref<8x1xf32, #tpu.memory_space<vmem>>, vector<8x1xf32>
    %7 = vector.broadcast %6 : vector<8x1xf32> to vector<8x256xf32>
    %8 = arith.mulf %5, %7 : vector<8x256xf32>
    %9 = tpu.concatenate %4, %0, %8 in 1 : vector<8x256xf32>, vector<8x256xf32>, vector<8x256xf32> -> vector<8x768xf32>
    %c0_5 = arith.constant 0 : index
    %c0_6 = arith.constant 0 : index
    %10 = vector.load %arg6[%c0_5, %c0_6] : memref<768x128xf32, #tpu.memory_space<vmem>>, vector<768x128xf32>
    %cst = arith.constant dense<0.000000e+00> : vector<8x128xf32>
    %11 = tpu.matmul %9, %10, %cst {dimension_numbers = #tpu.dot_dimension_numbers<[1], [0], [0], [1], [0, 0, 1, 1], [], []>} : vector<8x768xf32>, vector<768x128xf32>, vector<8x128xf32> -> vector<8x128xf32>
    %c0_7 = arith.constant 0 : index
    %c0_8 = arith.constant 0 : index
    %12 = vector.load %arg7[%c0_7, %c0_8] : memref<1x128xf32, #tpu.memory_space<vmem>>, vector<1x128xf32>
    %13 = vector.broadcast %12 : vector<1x128xf32> to vector<8x128xf32>
    %14 = arith.addf %11, %13 : vector<8x128xf32>
    %cst_9 = arith.constant 0.000000e+00 : f32
    %15 = vector.broadcast %cst_9 : f32 to vector<8x128xf32>
    %16 = arith.maximumf %14, %15 : vector<8x128xf32>
    %c1_i32_10 = arith.constant 1 : i32
    %17 = tpu.dynamic_rotate %16 by %c1_i32_10 dim 0 : vector<8x128xf32>, i32 -> vector<8x128xf32>
    %c0_11 = arith.constant 0 : index
    %c0_12 = arith.constant 0 : index
    %18 = vector.load %arg32[%c0_11, %c0_12] : memref<8x1xf32, #tpu.memory_space<vmem>>, vector<8x1xf32>
    %19 = vector.broadcast %18 : vector<8x1xf32> to vector<8x128xf32>
    %20 = arith.mulf %17, %19 : vector<8x128xf32>
    %c7_i32_13 = arith.constant 7 : i32
    %21 = tpu.dynamic_rotate %16 by %c7_i32_13 dim 0 : vector<8x128xf32>, i32 -> vector<8x128xf32>
    %c0_14 = arith.constant 0 : index
    %c0_15 = arith.constant 0 : index
    %22 = vector.load %arg29[%c0_14, %c0_15] : memref<8x1xf32, #tpu.memory_space<vmem>>, vector<8x1xf32>
    %23 = vector.broadcast %22 : vector<8x1xf32> to vector<8x128xf32>
    %24 = arith.mulf %21, %23 : vector<8x128xf32>
    %25 = tpu.concatenate %20, %16, %24 in 1 : vector<8x128xf32>, vector<8x128xf32>, vector<8x128xf32> -> vector<8x384xf32>
    %c0_16 = arith.constant 0 : index
    %c0_17 = arith.constant 0 : index
    %26 = vector.load %arg8[%c0_16, %c0_17] : memref<384x64xf32, #tpu.memory_space<vmem>>, vector<384x64xf32>
    %cst_18 = arith.constant dense<0.000000e+00> : vector<8x64xf32>
    %27 = tpu.matmul %25, %26, %cst_18 {dimension_numbers = #tpu.dot_dimension_numbers<[1], [0], [0], [1], [0, 0, 1, 1], [], []>} : vector<8x384xf32>, vector<384x64xf32>, vector<8x64xf32> -> vector<8x64xf32>
    %c0_19 = arith.constant 0 : index
    %c0_20 = arith.constant 0 : index
    %28 = vector.load %arg9[%c0_19, %c0_20] : memref<1x64xf32, #tpu.memory_space<vmem>>, vector<1x64xf32>
    %29 = vector.broadcast %28 : vector<1x64xf32> to vector<8x64xf32>
    %30 = arith.addf %27, %29 : vector<8x64xf32>
    %cst_21 = arith.constant 0.000000e+00 : f32
    %31 = vector.broadcast %cst_21 : f32 to vector<8x64xf32>
    %32 = arith.maximumf %30, %31 : vector<8x64xf32>
    %c0_22 = arith.constant 0 : index
    %c0_23 = arith.constant 0 : index
    %33 = vector.load %arg35[%c0_22, %c0_23] : memref<16x8xf32, #tpu.memory_space<vmem>>, vector<16x8xf32>
    %cst_24 = arith.constant dense<0.000000e+00> : vector<16x64xf32>
    %34 = tpu.matmul %33, %32, %cst_24 {dimension_numbers = #tpu.dot_dimension_numbers<[1], [0], [0], [1], [0, 0, 1, 1], [], []>} : vector<16x8xf32>, vector<8x64xf32>, vector<16x64xf32> -> vector<16x64xf32>
    %c1_i32_25 = arith.constant 1 : i32
    %35 = tpu.dynamic_rotate %34 by %c1_i32_25 dim 0 : vector<16x64xf32>, i32 -> vector<16x64xf32>
    %c0_26 = arith.constant 0 : index
    %c0_27 = arith.constant 0 : index
    %36 = vector.load %arg33[%c0_26, %c0_27] : memref<16x1xf32, #tpu.memory_space<vmem>>, vector<16x1xf32>
    %37 = vector.broadcast %36 : vector<16x1xf32> to vector<16x64xf32>
    %38 = arith.mulf %35, %37 : vector<16x64xf32>
    %c15_i32 = arith.constant 15 : i32
    %39 = tpu.dynamic_rotate %34 by %c15_i32 dim 0 : vector<16x64xf32>, i32 -> vector<16x64xf32>
    %c0_28 = arith.constant 0 : index
    %c0_29 = arith.constant 0 : index
    %40 = vector.load %arg30[%c0_28, %c0_29] : memref<16x1xf32, #tpu.memory_space<vmem>>, vector<16x1xf32>
    %41 = vector.broadcast %40 : vector<16x1xf32> to vector<16x64xf32>
    %42 = arith.mulf %39, %41 : vector<16x64xf32>
    %43 = tpu.concatenate %38, %34, %42 in 1 : vector<16x64xf32>, vector<16x64xf32>, vector<16x64xf32> -> vector<16x192xf32>
    %c0_30 = arith.constant 0 : index
    %c0_31 = arith.constant 0 : index
    %44 = vector.load %arg24[%c0_30, %c0_31] : memref<192x128xf32, #tpu.memory_space<vmem>>, vector<192x128xf32>
    %cst_32 = arith.constant dense<0.000000e+00> : vector<16x128xf32>
    %45 = tpu.matmul %43, %44, %cst_32 {dimension_numbers = #tpu.dot_dimension_numbers<[1], [0], [0], [1], [0, 0, 1, 1], [], []>} : vector<16x192xf32>, vector<192x128xf32>, vector<16x128xf32> -> vector<16x128xf32>
    %c0_33 = arith.constant 0 : index
    %c0_34 = arith.constant 0 : index
    %46 = vector.load %arg25[%c0_33, %c0_34] : memref<1x128xf32, #tpu.memory_space<vmem>>, vector<1x128xf32>
    %47 = vector.broadcast %46 : vector<1x128xf32> to vector<16x128xf32>
    %48 = arith.addf %45, %47 : vector<16x128xf32>
    %cst_35 = arith.constant 0.000000e+00 : f32
    %49 = vector.broadcast %cst_35 : f32 to vector<16x128xf32>
    %50 = arith.maximumf %48, %49 : vector<16x128xf32>
    %c1_i32_36 = arith.constant 1 : i32
    %51 = tpu.dynamic_rotate %50 by %c1_i32_36 dim 0 : vector<16x128xf32>, i32 -> vector<16x128xf32>
    %c0_37 = arith.constant 0 : index
    %c0_38 = arith.constant 0 : index
    %52 = vector.load %arg33[%c0_37, %c0_38] : memref<16x1xf32, #tpu.memory_space<vmem>>, vector<16x1xf32>
    %53 = vector.broadcast %52 : vector<16x1xf32> to vector<16x128xf32>
    %54 = arith.mulf %51, %53 : vector<16x128xf32>
    %c15_i32_39 = arith.constant 15 : i32
    %55 = tpu.dynamic_rotate %50 by %c15_i32_39 dim 0 : vector<16x128xf32>, i32 -> vector<16x128xf32>
    %c0_40 = arith.constant 0 : index
    %c0_41 = arith.constant 0 : index
    %56 = vector.load %arg30[%c0_40, %c0_41] : memref<16x1xf32, #tpu.memory_space<vmem>>, vector<16x1xf32>
    %57 = vector.broadcast %56 : vector<16x1xf32> to vector<16x128xf32>
    %58 = arith.mulf %55, %57 : vector<16x128xf32>
    %59 = tpu.concatenate %54, %50, %58 in 1 : vector<16x128xf32>, vector<16x128xf32>, vector<16x128xf32> -> vector<16x384xf32>
    %c0_42 = arith.constant 0 : index
    %c0_43 = arith.constant 0 : index
    %60 = vector.load %arg26[%c0_42, %c0_43] : memref<384x32xf32, #tpu.memory_space<vmem>>, vector<384x32xf32>
    %cst_44 = arith.constant dense<0.000000e+00> : vector<16x32xf32>
    %61 = tpu.matmul %59, %60, %cst_44 {dimension_numbers = #tpu.dot_dimension_numbers<[1], [0], [0], [1], [0, 0, 1, 1], [], []>} : vector<16x384xf32>, vector<384x32xf32>, vector<16x32xf32> -> vector<16x32xf32>
    %c0_45 = arith.constant 0 : index
    %c0_46 = arith.constant 0 : index
    %62 = vector.load %arg27[%c0_45, %c0_46] : memref<1x32xf32, #tpu.memory_space<vmem>>, vector<1x32xf32>
    %63 = vector.broadcast %62 : vector<1x32xf32> to vector<16x32xf32>
    %64 = arith.addf %61, %63 : vector<16x32xf32>
    %cst_47 = arith.constant 0.000000e+00 : f32
    %65 = vector.broadcast %cst_47 : f32 to vector<16x32xf32>
    %66 = arith.maximumf %64, %65 : vector<16x32xf32>
    %c0_48 = arith.constant 0 : index
    %c0_49 = arith.constant 0 : index
    %67 = vector.load %arg23[%c0_48, %c0_49] : memref<32x512xf32, #tpu.memory_space<vmem>>, vector<32x512xf32>
    %cst_50 = arith.constant dense<0.000000e+00> : vector<16x512xf32>
    %68 = tpu.matmul %66, %67, %cst_50 {dimension_numbers = #tpu.dot_dimension_numbers<[1], [0], [0], [1], [0, 0, 1, 1], [], []>} : vector<16x32xf32>, vector<32x512xf32>, vector<16x512xf32> -> vector<16x512xf32>
    %69 = vector.extract_strided_slice %68 {offsets = [0, 0], sizes = [16, 128], strides = [1, 1]} : vector<16x512xf32> to vector<16x128xf32>
    %c0_51 = arith.constant 0 : index
    %c0_52 = arith.constant 0 : index
    %c0_53 = arith.constant 0 : index
    %70 = vector.load %arg2[%c0_51, %c0_52, %c0_53] : memref<4x16x128xf32, #tpu.memory_space<vmem>>, vector<1x16x128xf32>
    %71 = vector.shape_cast %70 : vector<1x16x128xf32> to vector<16x128xf32>
    %72 = arith.mulf %69, %71 : vector<16x128xf32>
    %c0_54 = arith.constant 0 : index
    %c0_55 = arith.constant 0 : index
    %c0_56 = arith.constant 0 : index
    %73 = vector.load %arg3[%c0_54, %c0_55, %c0_56] : memref<4x16x128xf32, #tpu.memory_space<vmem>>, vector<1x16x128xf32>
    %74 = vector.shape_cast %73 : vector<1x16x128xf32> to vector<16x128xf32>
    %75 = arith.mulf %69, %74 : vector<16x128xf32>
    %76 = vector.extract_strided_slice %68 {offsets = [0, 128], sizes = [16, 128], strides = [1, 1]} : vector<16x512xf32> to vector<16x128xf32>
    %c1 = arith.constant 1 : index
    %c0_57 = arith.constant 0 : index
    %c0_58 = arith.constant 0 : index
    %77 = vector.load %arg2[%c1, %c0_57, %c0_58] : memref<4x16x128xf32, #tpu.memory_space<vmem>>, vector<1x16x128xf32>
    %78 = vector.shape_cast %77 : vector<1x16x128xf32> to vector<16x128xf32>
    %79 = arith.mulf %76, %78 : vector<16x128xf32>
    %c1_59 = arith.constant 1 : index
    %c0_60 = arith.constant 0 : index
    %c0_61 = arith.constant 0 : index
    %80 = vector.load %arg3[%c1_59, %c0_60, %c0_61] : memref<4x16x128xf32, #tpu.memory_space<vmem>>, vector<1x16x128xf32>
    %81 = vector.shape_cast %80 : vector<1x16x128xf32> to vector<16x128xf32>
    %82 = arith.mulf %76, %81 : vector<16x128xf32>
    %83 = arith.addf %72, %79 : vector<16x128xf32>
    %84 = arith.addf %75, %82 : vector<16x128xf32>
    %85 = vector.extract_strided_slice %68 {offsets = [0, 256], sizes = [16, 128], strides = [1, 1]} : vector<16x512xf32> to vector<16x128xf32>
    %c2 = arith.constant 2 : index
    %c0_62 = arith.constant 0 : index
    %c0_63 = arith.constant 0 : index
    %86 = vector.load %arg2[%c2, %c0_62, %c0_63] : memref<4x16x128xf32, #tpu.memory_space<vmem>>, vector<1x16x128xf32>
    %87 = vector.shape_cast %86 : vector<1x16x128xf32> to vector<16x128xf32>
    %88 = arith.mulf %85, %87 : vector<16x128xf32>
    %c2_64 = arith.constant 2 : index
    %c0_65 = arith.constant 0 : index
    %c0_66 = arith.constant 0 : index
    %89 = vector.load %arg3[%c2_64, %c0_65, %c0_66] : memref<4x16x128xf32, #tpu.memory_space<vmem>>, vector<1x16x128xf32>
    %90 = vector.shape_cast %89 : vector<1x16x128xf32> to vector<16x128xf32>
    %91 = arith.mulf %85, %90 : vector<16x128xf32>
    %92 = arith.addf %83, %88 : vector<16x128xf32>
    %93 = arith.addf %84, %91 : vector<16x128xf32>
    %94 = vector.extract_strided_slice %68 {offsets = [0, 384], sizes = [16, 128], strides = [1, 1]} : vector<16x512xf32> to vector<16x128xf32>
    %c3 = arith.constant 3 : index
    %c0_67 = arith.constant 0 : index
    %c0_68 = arith.constant 0 : index
    %95 = vector.load %arg2[%c3, %c0_67, %c0_68] : memref<4x16x128xf32, #tpu.memory_space<vmem>>, vector<1x16x128xf32>
    %96 = vector.shape_cast %95 : vector<1x16x128xf32> to vector<16x128xf32>
    %97 = arith.mulf %94, %96 : vector<16x128xf32>
    %c3_69 = arith.constant 3 : index
    %c0_70 = arith.constant 0 : index
    %c0_71 = arith.constant 0 : index
    %98 = vector.load %arg3[%c3_69, %c0_70, %c0_71] : memref<4x16x128xf32, #tpu.memory_space<vmem>>, vector<1x16x128xf32>
    %99 = vector.shape_cast %98 : vector<1x16x128xf32> to vector<16x128xf32>
    %100 = arith.mulf %94, %99 : vector<16x128xf32>
    %101 = arith.addf %92, %97 : vector<16x128xf32>
    %102 = arith.addf %93, %100 : vector<16x128xf32>
    %c1_i32_72 = arith.constant 1 : i32
    %103 = tpu.dynamic_rotate %34 by %c1_i32_72 dim 0 : vector<16x64xf32>, i32 -> vector<16x64xf32>
    %c0_73 = arith.constant 0 : index
    %c0_74 = arith.constant 0 : index
    %104 = vector.load %arg33[%c0_73, %c0_74] : memref<16x1xf32, #tpu.memory_space<vmem>>, vector<16x1xf32>
    %105 = vector.broadcast %104 : vector<16x1xf32> to vector<16x64xf32>
    %106 = arith.mulf %103, %105 : vector<16x64xf32>
    %c15_i32_75 = arith.constant 15 : i32
    %107 = tpu.dynamic_rotate %34 by %c15_i32_75 dim 0 : vector<16x64xf32>, i32 -> vector<16x64xf32>
    %c0_76 = arith.constant 0 : index
    %c0_77 = arith.constant 0 : index
    %108 = vector.load %arg30[%c0_76, %c0_77] : memref<16x1xf32, #tpu.memory_space<vmem>>, vector<16x1xf32>
    %109 = vector.broadcast %108 : vector<16x1xf32> to vector<16x64xf32>
    %110 = arith.mulf %107, %109 : vector<16x64xf32>
    %c1_i32_78 = arith.constant 1 : i32
    %111 = tpu.dynamic_rotate %101 by %c1_i32_78 dim 0 : vector<16x128xf32>, i32 -> vector<16x128xf32>
    %c0_79 = arith.constant 0 : index
    %c0_80 = arith.constant 0 : index
    %112 = vector.load %arg33[%c0_79, %c0_80] : memref<16x1xf32, #tpu.memory_space<vmem>>, vector<16x1xf32>
    %113 = vector.broadcast %112 : vector<16x1xf32> to vector<16x128xf32>
    %114 = arith.mulf %111, %113 : vector<16x128xf32>
    %c15_i32_81 = arith.constant 15 : i32
    %115 = tpu.dynamic_rotate %101 by %c15_i32_81 dim 0 : vector<16x128xf32>, i32 -> vector<16x128xf32>
    %c0_82 = arith.constant 0 : index
    %c0_83 = arith.constant 0 : index
    %116 = vector.load %arg30[%c0_82, %c0_83] : memref<16x1xf32, #tpu.memory_space<vmem>>, vector<16x1xf32>
    %117 = vector.broadcast %116 : vector<16x1xf32> to vector<16x128xf32>
    %118 = arith.mulf %115, %117 : vector<16x128xf32>
    %c1_i32_84 = arith.constant 1 : i32
    %119 = tpu.dynamic_rotate %102 by %c1_i32_84 dim 0 : vector<16x128xf32>, i32 -> vector<16x128xf32>
    %c0_85 = arith.constant 0 : index
    %c0_86 = arith.constant 0 : index
    %120 = vector.load %arg33[%c0_85, %c0_86] : memref<16x1xf32, #tpu.memory_space<vmem>>, vector<16x1xf32>
    %121 = vector.broadcast %120 : vector<16x1xf32> to vector<16x128xf32>
    %122 = arith.mulf %119, %121 : vector<16x128xf32>
    %c15_i32_87 = arith.constant 15 : i32
    %123 = tpu.dynamic_rotate %102 by %c15_i32_87 dim 0 : vector<16x128xf32>, i32 -> vector<16x128xf32>
    %c0_88 = arith.constant 0 : index
    %c0_89 = arith.constant 0 : index
    %124 = vector.load %arg30[%c0_88, %c0_89] : memref<16x1xf32, #tpu.memory_space<vmem>>, vector<16x1xf32>
    %125 = vector.broadcast %124 : vector<16x1xf32> to vector<16x128xf32>
    %126 = arith.mulf %123, %125 : vector<16x128xf32>
    %127 = tpu.concatenate %106, %34, %110, %114, %101, %118, %122, %102, %126 in 1 : vector<16x64xf32>, vector<16x64xf32>, vector<16x64xf32>, vector<16x128xf32>, vector<16x128xf32>, vector<16x128xf32>, vector<16x128xf32>, vector<16x128xf32>, vector<16x128xf32> -> vector<16x960xf32>
    %c0_90 = arith.constant 0 : index
    %c0_91 = arith.constant 0 : index
    %128 = vector.load %arg10[%c0_90, %c0_91] : memref<960x128xf32, #tpu.memory_space<vmem>>, vector<960x128xf32>
    %cst_92 = arith.constant dense<0.000000e+00> : vector<16x128xf32>
    %129 = tpu.matmul %127, %128, %cst_92 {dimension_numbers = #tpu.dot_dimension_numbers<[1], [0], [0], [1], [0, 0, 1, 1], [], []>} : vector<16x960xf32>, vector<960x128xf32>, vector<16x128xf32> -> vector<16x128xf32>
    %c0_93 = arith.constant 0 : index
    %c0_94 = arith.constant 0 : index
    %130 = vector.load %arg11[%c0_93, %c0_94] : memref<1x128xf32, #tpu.memory_space<vmem>>, vector<1x128xf32>
    %131 = vector.broadcast %130 : vector<1x128xf32> to vector<16x128xf32>
    %132 = arith.addf %129, %131 : vector<16x128xf32>
    %cst_95 = arith.constant 0.000000e+00 : f32
    %133 = vector.broadcast %cst_95 : f32 to vector<16x128xf32>
    %134 = arith.maximumf %132, %133 : vector<16x128xf32>
    %c1_i32_96 = arith.constant 1 : i32
    %135 = tpu.dynamic_rotate %134 by %c1_i32_96 dim 0 : vector<16x128xf32>, i32 -> vector<16x128xf32>
    %c0_97 = arith.constant 0 : index
    %c0_98 = arith.constant 0 : index
    %136 = vector.load %arg33[%c0_97, %c0_98] : memref<16x1xf32, #tpu.memory_space<vmem>>, vector<16x1xf32>
    %137 = vector.broadcast %136 : vector<16x1xf32> to vector<16x128xf32>
    %138 = arith.mulf %135, %137 : vector<16x128xf32>
    %c15_i32_99 = arith.constant 15 : i32
    %139 = tpu.dynamic_rotate %134 by %c15_i32_99 dim 0 : vector<16x128xf32>, i32 -> vector<16x128xf32>
    %c0_100 = arith.constant 0 : index
    %c0_101 = arith.constant 0 : index
    %140 = vector.load %arg30[%c0_100, %c0_101] : memref<16x1xf32, #tpu.memory_space<vmem>>, vector<16x1xf32>
    %141 = vector.broadcast %140 : vector<16x1xf32> to vector<16x128xf32>
    %142 = arith.mulf %139, %141 : vector<16x128xf32>
    %143 = tpu.concatenate %138, %134, %142 in 1 : vector<16x128xf32>, vector<16x128xf32>, vector<16x128xf32> -> vector<16x384xf32>
    %c0_102 = arith.constant 0 : index
    %c0_103 = arith.constant 0 : index
    %144 = vector.load %arg12[%c0_102, %c0_103] : memref<384x64xf32, #tpu.memory_space<vmem>>, vector<384x64xf32>
    %cst_104 = arith.constant dense<0.000000e+00> : vector<16x64xf32>
    %145 = tpu.matmul %143, %144, %cst_104 {dimension_numbers = #tpu.dot_dimension_numbers<[1], [0], [0], [1], [0, 0, 1, 1], [], []>} : vector<16x384xf32>, vector<384x64xf32>, vector<16x64xf32> -> vector<16x64xf32>
    %c0_105 = arith.constant 0 : index
    %c0_106 = arith.constant 0 : index
    %146 = vector.load %arg13[%c0_105, %c0_106] : memref<1x64xf32, #tpu.memory_space<vmem>>, vector<1x64xf32>
    %147 = vector.broadcast %146 : vector<1x64xf32> to vector<16x64xf32>
    %148 = arith.addf %145, %147 : vector<16x64xf32>
    %cst_107 = arith.constant 0.000000e+00 : f32
    %149 = vector.broadcast %cst_107 : f32 to vector<16x64xf32>
    %150 = arith.maximumf %148, %149 : vector<16x64xf32>
    %c0_108 = arith.constant 0 : index
    %c0_109 = arith.constant 0 : index
    %151 = vector.load %arg34[%c0_108, %c0_109] : memref<32x16xf32, #tpu.memory_space<vmem>>, vector<32x16xf32>
    %cst_110 = arith.constant dense<0.000000e+00> : vector<32x64xf32>
    %152 = tpu.matmul %151, %150, %cst_110 {dimension_numbers = #tpu.dot_dimension_numbers<[1], [0], [0], [1], [0, 0, 1, 1], [], []>} : vector<32x16xf32>, vector<16x64xf32>, vector<32x64xf32> -> vector<32x64xf32>
    %c1_i32_111 = arith.constant 1 : i32
    %153 = tpu.dynamic_rotate %152 by %c1_i32_111 dim 0 : vector<32x64xf32>, i32 -> vector<32x64xf32>
    %c0_112 = arith.constant 0 : index
    %c0_113 = arith.constant 0 : index
    %154 = vector.load %arg31[%c0_112, %c0_113] : memref<32x1xf32, #tpu.memory_space<vmem>>, vector<32x1xf32>
    %155 = vector.broadcast %154 : vector<32x1xf32> to vector<32x64xf32>
    %156 = arith.mulf %153, %155 : vector<32x64xf32>
    %c31_i32 = arith.constant 31 : i32
    %157 = tpu.dynamic_rotate %152 by %c31_i32 dim 0 : vector<32x64xf32>, i32 -> vector<32x64xf32>
    %c0_114 = arith.constant 0 : index
    %c0_115 = arith.constant 0 : index
    %158 = vector.load %arg28[%c0_114, %c0_115] : memref<32x1xf32, #tpu.memory_space<vmem>>, vector<32x1xf32>
    %159 = vector.broadcast %158 : vector<32x1xf32> to vector<32x64xf32>
    %160 = arith.mulf %157, %159 : vector<32x64xf32>
    %161 = tpu.concatenate %156, %152, %160 in 1 : vector<32x64xf32>, vector<32x64xf32>, vector<32x64xf32> -> vector<32x192xf32>
    %c0_116 = arith.constant 0 : index
    %c0_117 = arith.constant 0 : index
    %162 = vector.load %arg19[%c0_116, %c0_117] : memref<192x128xf32, #tpu.memory_space<vmem>>, vector<192x128xf32>
    %cst_118 = arith.constant dense<0.000000e+00> : vector<32x128xf32>
    %163 = tpu.matmul %161, %162, %cst_118 {dimension_numbers = #tpu.dot_dimension_numbers<[1], [0], [0], [1], [0, 0, 1, 1], [], []>} : vector<32x192xf32>, vector<192x128xf32>, vector<32x128xf32> -> vector<32x128xf32>
    %c0_119 = arith.constant 0 : index
    %c0_120 = arith.constant 0 : index
    %164 = vector.load %arg20[%c0_119, %c0_120] : memref<1x128xf32, #tpu.memory_space<vmem>>, vector<1x128xf32>
    %165 = vector.broadcast %164 : vector<1x128xf32> to vector<32x128xf32>
    %166 = arith.addf %163, %165 : vector<32x128xf32>
    %cst_121 = arith.constant 0.000000e+00 : f32
    %167 = vector.broadcast %cst_121 : f32 to vector<32x128xf32>
    %168 = arith.maximumf %166, %167 : vector<32x128xf32>
    %c1_i32_122 = arith.constant 1 : i32
    %169 = tpu.dynamic_rotate %168 by %c1_i32_122 dim 0 : vector<32x128xf32>, i32 -> vector<32x128xf32>
    %c0_123 = arith.constant 0 : index
    %c0_124 = arith.constant 0 : index
    %170 = vector.load %arg31[%c0_123, %c0_124] : memref<32x1xf32, #tpu.memory_space<vmem>>, vector<32x1xf32>
    %171 = vector.broadcast %170 : vector<32x1xf32> to vector<32x128xf32>
    %172 = arith.mulf %169, %171 : vector<32x128xf32>
    %c31_i32_125 = arith.constant 31 : i32
    %173 = tpu.dynamic_rotate %168 by %c31_i32_125 dim 0 : vector<32x128xf32>, i32 -> vector<32x128xf32>
    %c0_126 = arith.constant 0 : index
    %c0_127 = arith.constant 0 : index
    %174 = vector.load %arg28[%c0_126, %c0_127] : memref<32x1xf32, #tpu.memory_space<vmem>>, vector<32x1xf32>
    %175 = vector.broadcast %174 : vector<32x1xf32> to vector<32x128xf32>
    %176 = arith.mulf %173, %175 : vector<32x128xf32>
    %177 = tpu.concatenate %172, %168, %176 in 1 : vector<32x128xf32>, vector<32x128xf32>, vector<32x128xf32> -> vector<32x384xf32>
    %c0_128 = arith.constant 0 : index
    %c0_129 = arith.constant 0 : index
    %178 = vector.load %arg21[%c0_128, %c0_129] : memref<384x128xf32, #tpu.memory_space<vmem>>, vector<384x128xf32>
    %cst_130 = arith.constant dense<0.000000e+00> : vector<32x128xf32>
    %179 = tpu.matmul %177, %178, %cst_130 {dimension_numbers = #tpu.dot_dimension_numbers<[1], [0], [0], [1], [0, 0, 1, 1], [], []>} : vector<32x384xf32>, vector<384x128xf32>, vector<32x128xf32> -> vector<32x128xf32>
    %c0_131 = arith.constant 0 : index
    %c0_132 = arith.constant 0 : index
    %180 = vector.load %arg22[%c0_131, %c0_132] : memref<1x128xf32, #tpu.memory_space<vmem>>, vector<1x128xf32>
    %181 = vector.broadcast %180 : vector<1x128xf32> to vector<32x128xf32>
    %182 = arith.addf %179, %181 : vector<32x128xf32>
    %cst_133 = arith.constant 0.000000e+00 : f32
    %183 = vector.broadcast %cst_133 : f32 to vector<32x128xf32>
    %184 = arith.maximumf %182, %183 : vector<32x128xf32>
    %c0_134 = arith.constant 0 : index
    %c0_135 = arith.constant 0 : index
    %185 = vector.load %arg18[%c0_134, %c0_135] : memref<128x1024xf32, #tpu.memory_space<vmem>>, vector<128x1024xf32>
    %cst_136 = arith.constant dense<0.000000e+00> : vector<32x1024xf32>
    %186 = tpu.matmul %184, %185, %cst_136 {dimension_numbers = #tpu.dot_dimension_numbers<[1], [0], [0], [1], [0, 0, 1, 1], [], []>} : vector<32x128xf32>, vector<128x1024xf32>, vector<32x1024xf32> -> vector<32x1024xf32>
    %187 = vector.extract_strided_slice %186 {offsets = [0, 0], sizes = [32, 128], strides = [1, 1]} : vector<32x1024xf32> to vector<32x128xf32>
    %c0_137 = arith.constant 0 : index
    %c0_138 = arith.constant 0 : index
    %c0_139 = arith.constant 0 : index
    %188 = vector.load %arg4[%c0_137, %c0_138, %c0_139] : memref<8x32x128xf32, #tpu.memory_space<vmem>>, vector<1x32x128xf32>
    %189 = vector.shape_cast %188 : vector<1x32x128xf32> to vector<32x128xf32>
    %190 = arith.mulf %187, %189 : vector<32x128xf32>
    %c0_140 = arith.constant 0 : index
    %c0_141 = arith.constant 0 : index
    %c0_142 = arith.constant 0 : index
    %191 = vector.load %arg5[%c0_140, %c0_141, %c0_142] : memref<8x32x128xf32, #tpu.memory_space<vmem>>, vector<1x32x128xf32>
    %192 = vector.shape_cast %191 : vector<1x32x128xf32> to vector<32x128xf32>
    %193 = arith.mulf %187, %192 : vector<32x128xf32>
    %194 = vector.extract_strided_slice %186 {offsets = [0, 128], sizes = [32, 128], strides = [1, 1]} : vector<32x1024xf32> to vector<32x128xf32>
    %c1_143 = arith.constant 1 : index
    %c0_144 = arith.constant 0 : index
    %c0_145 = arith.constant 0 : index
    %195 = vector.load %arg4[%c1_143, %c0_144, %c0_145] : memref<8x32x128xf32, #tpu.memory_space<vmem>>, vector<1x32x128xf32>
    %196 = vector.shape_cast %195 : vector<1x32x128xf32> to vector<32x128xf32>
    %197 = arith.mulf %194, %196 : vector<32x128xf32>
    %c1_146 = arith.constant 1 : index
    %c0_147 = arith.constant 0 : index
    %c0_148 = arith.constant 0 : index
    %198 = vector.load %arg5[%c1_146, %c0_147, %c0_148] : memref<8x32x128xf32, #tpu.memory_space<vmem>>, vector<1x32x128xf32>
    %199 = vector.shape_cast %198 : vector<1x32x128xf32> to vector<32x128xf32>
    %200 = arith.mulf %194, %199 : vector<32x128xf32>
    %201 = arith.addf %190, %197 : vector<32x128xf32>
    %202 = arith.addf %193, %200 : vector<32x128xf32>
    %203 = vector.extract_strided_slice %186 {offsets = [0, 256], sizes = [32, 128], strides = [1, 1]} : vector<32x1024xf32> to vector<32x128xf32>
    %c2_149 = arith.constant 2 : index
    %c0_150 = arith.constant 0 : index
    %c0_151 = arith.constant 0 : index
    %204 = vector.load %arg4[%c2_149, %c0_150, %c0_151] : memref<8x32x128xf32, #tpu.memory_space<vmem>>, vector<1x32x128xf32>
    %205 = vector.shape_cast %204 : vector<1x32x128xf32> to vector<32x128xf32>
    %206 = arith.mulf %203, %205 : vector<32x128xf32>
    %c2_152 = arith.constant 2 : index
    %c0_153 = arith.constant 0 : index
    %c0_154 = arith.constant 0 : index
    %207 = vector.load %arg5[%c2_152, %c0_153, %c0_154] : memref<8x32x128xf32, #tpu.memory_space<vmem>>, vector<1x32x128xf32>
    %208 = vector.shape_cast %207 : vector<1x32x128xf32> to vector<32x128xf32>
    %209 = arith.mulf %203, %208 : vector<32x128xf32>
    %210 = arith.addf %201, %206 : vector<32x128xf32>
    %211 = arith.addf %202, %209 : vector<32x128xf32>
    %212 = vector.extract_strided_slice %186 {offsets = [0, 384], sizes = [32, 128], strides = [1, 1]} : vector<32x1024xf32> to vector<32x128xf32>
    %c3_155 = arith.constant 3 : index
    %c0_156 = arith.constant 0 : index
    %c0_157 = arith.constant 0 : index
    %213 = vector.load %arg4[%c3_155, %c0_156, %c0_157] : memref<8x32x128xf32, #tpu.memory_space<vmem>>, vector<1x32x128xf32>
    %214 = vector.shape_cast %213 : vector<1x32x128xf32> to vector<32x128xf32>
    %215 = arith.mulf %212, %214 : vector<32x128xf32>
    %c3_158 = arith.constant 3 : index
    %c0_159 = arith.constant 0 : index
    %c0_160 = arith.constant 0 : index
    %216 = vector.load %arg5[%c3_158, %c0_159, %c0_160] : memref<8x32x128xf32, #tpu.memory_space<vmem>>, vector<1x32x128xf32>
    %217 = vector.shape_cast %216 : vector<1x32x128xf32> to vector<32x128xf32>
    %218 = arith.mulf %212, %217 : vector<32x128xf32>
    %219 = arith.addf %210, %215 : vector<32x128xf32>
    %220 = arith.addf %211, %218 : vector<32x128xf32>
    %221 = vector.extract_strided_slice %186 {offsets = [0, 512], sizes = [32, 128], strides = [1, 1]} : vector<32x1024xf32> to vector<32x128xf32>
    %c4 = arith.constant 4 : index
    %c0_161 = arith.constant 0 : index
    %c0_162 = arith.constant 0 : index
    %222 = vector.load %arg4[%c4, %c0_161, %c0_162] : memref<8x32x128xf32, #tpu.memory_space<vmem>>, vector<1x32x128xf32>
    %223 = vector.shape_cast %222 : vector<1x32x128xf32> to vector<32x128xf32>
    %224 = arith.mulf %221, %223 : vector<32x128xf32>
    %c4_163 = arith.constant 4 : index
    %c0_164 = arith.constant 0 : index
    %c0_165 = arith.constant 0 : index
    %225 = vector.load %arg5[%c4_163, %c0_164, %c0_165] : memref<8x32x128xf32, #tpu.memory_space<vmem>>, vector<1x32x128xf32>
    %226 = vector.shape_cast %225 : vector<1x32x128xf32> to vector<32x128xf32>
    %227 = arith.mulf %221, %226 : vector<32x128xf32>
    %228 = arith.addf %219, %224 : vector<32x128xf32>
    %229 = arith.addf %220, %227 : vector<32x128xf32>
    %230 = vector.extract_strided_slice %186 {offsets = [0, 640], sizes = [32, 128], strides = [1, 1]} : vector<32x1024xf32> to vector<32x128xf32>
    %c5 = arith.constant 5 : index
    %c0_166 = arith.constant 0 : index
    %c0_167 = arith.constant 0 : index
    %231 = vector.load %arg4[%c5, %c0_166, %c0_167] : memref<8x32x128xf32, #tpu.memory_space<vmem>>, vector<1x32x128xf32>
    %232 = vector.shape_cast %231 : vector<1x32x128xf32> to vector<32x128xf32>
    %233 = arith.mulf %230, %232 : vector<32x128xf32>
    %c5_168 = arith.constant 5 : index
    %c0_169 = arith.constant 0 : index
    %c0_170 = arith.constant 0 : index
    %234 = vector.load %arg5[%c5_168, %c0_169, %c0_170] : memref<8x32x128xf32, #tpu.memory_space<vmem>>, vector<1x32x128xf32>
    %235 = vector.shape_cast %234 : vector<1x32x128xf32> to vector<32x128xf32>
    %236 = arith.mulf %230, %235 : vector<32x128xf32>
    %237 = arith.addf %228, %233 : vector<32x128xf32>
    %238 = arith.addf %229, %236 : vector<32x128xf32>
    %239 = vector.extract_strided_slice %186 {offsets = [0, 768], sizes = [32, 128], strides = [1, 1]} : vector<32x1024xf32> to vector<32x128xf32>
    %c6 = arith.constant 6 : index
    %c0_171 = arith.constant 0 : index
    %c0_172 = arith.constant 0 : index
    %240 = vector.load %arg4[%c6, %c0_171, %c0_172] : memref<8x32x128xf32, #tpu.memory_space<vmem>>, vector<1x32x128xf32>
    %241 = vector.shape_cast %240 : vector<1x32x128xf32> to vector<32x128xf32>
    %242 = arith.mulf %239, %241 : vector<32x128xf32>
    %c6_173 = arith.constant 6 : index
    %c0_174 = arith.constant 0 : index
    %c0_175 = arith.constant 0 : index
    %243 = vector.load %arg5[%c6_173, %c0_174, %c0_175] : memref<8x32x128xf32, #tpu.memory_space<vmem>>, vector<1x32x128xf32>
    %244 = vector.shape_cast %243 : vector<1x32x128xf32> to vector<32x128xf32>
    %245 = arith.mulf %239, %244 : vector<32x128xf32>
    %246 = arith.addf %237, %242 : vector<32x128xf32>
    %247 = arith.addf %238, %245 : vector<32x128xf32>
    %248 = vector.extract_strided_slice %186 {offsets = [0, 896], sizes = [32, 128], strides = [1, 1]} : vector<32x1024xf32> to vector<32x128xf32>
    %c7 = arith.constant 7 : index
    %c0_176 = arith.constant 0 : index
    %c0_177 = arith.constant 0 : index
    %249 = vector.load %arg4[%c7, %c0_176, %c0_177] : memref<8x32x128xf32, #tpu.memory_space<vmem>>, vector<1x32x128xf32>
    %250 = vector.shape_cast %249 : vector<1x32x128xf32> to vector<32x128xf32>
    %251 = arith.mulf %248, %250 : vector<32x128xf32>
    %c7_178 = arith.constant 7 : index
    %c0_179 = arith.constant 0 : index
    %c0_180 = arith.constant 0 : index
    %252 = vector.load %arg5[%c7_178, %c0_179, %c0_180] : memref<8x32x128xf32, #tpu.memory_space<vmem>>, vector<1x32x128xf32>
    %253 = vector.shape_cast %252 : vector<1x32x128xf32> to vector<32x128xf32>
    %254 = arith.mulf %248, %253 : vector<32x128xf32>
    %255 = arith.addf %246, %251 : vector<32x128xf32>
    %256 = arith.addf %247, %254 : vector<32x128xf32>
    %c1_i32_181 = arith.constant 1 : i32
    %257 = tpu.dynamic_rotate %152 by %c1_i32_181 dim 0 : vector<32x64xf32>, i32 -> vector<32x64xf32>
    %c0_182 = arith.constant 0 : index
    %c0_183 = arith.constant 0 : index
    %258 = vector.load %arg31[%c0_182, %c0_183] : memref<32x1xf32, #tpu.memory_space<vmem>>, vector<32x1xf32>
    %259 = vector.broadcast %258 : vector<32x1xf32> to vector<32x64xf32>
    %260 = arith.mulf %257, %259 : vector<32x64xf32>
    %c31_i32_184 = arith.constant 31 : i32
    %261 = tpu.dynamic_rotate %152 by %c31_i32_184 dim 0 : vector<32x64xf32>, i32 -> vector<32x64xf32>
    %c0_185 = arith.constant 0 : index
    %c0_186 = arith.constant 0 : index
    %262 = vector.load %arg28[%c0_185, %c0_186] : memref<32x1xf32, #tpu.memory_space<vmem>>, vector<32x1xf32>
    %263 = vector.broadcast %262 : vector<32x1xf32> to vector<32x64xf32>
    %264 = arith.mulf %261, %263 : vector<32x64xf32>
    %c1_i32_187 = arith.constant 1 : i32
    %265 = tpu.dynamic_rotate %255 by %c1_i32_187 dim 0 : vector<32x128xf32>, i32 -> vector<32x128xf32>
    %c0_188 = arith.constant 0 : index
    %c0_189 = arith.constant 0 : index
    %266 = vector.load %arg31[%c0_188, %c0_189] : memref<32x1xf32, #tpu.memory_space<vmem>>, vector<32x1xf32>
    %267 = vector.broadcast %266 : vector<32x1xf32> to vector<32x128xf32>
    %268 = arith.mulf %265, %267 : vector<32x128xf32>
    %c31_i32_190 = arith.constant 31 : i32
    %269 = tpu.dynamic_rotate %255 by %c31_i32_190 dim 0 : vector<32x128xf32>, i32 -> vector<32x128xf32>
    %c0_191 = arith.constant 0 : index
    %c0_192 = arith.constant 0 : index
    %270 = vector.load %arg28[%c0_191, %c0_192] : memref<32x1xf32, #tpu.memory_space<vmem>>, vector<32x1xf32>
    %271 = vector.broadcast %270 : vector<32x1xf32> to vector<32x128xf32>
    %272 = arith.mulf %269, %271 : vector<32x128xf32>
    %c1_i32_193 = arith.constant 1 : i32
    %273 = tpu.dynamic_rotate %256 by %c1_i32_193 dim 0 : vector<32x128xf32>, i32 -> vector<32x128xf32>
    %c0_194 = arith.constant 0 : index
    %c0_195 = arith.constant 0 : index
    %274 = vector.load %arg31[%c0_194, %c0_195] : memref<32x1xf32, #tpu.memory_space<vmem>>, vector<32x1xf32>
    %275 = vector.broadcast %274 : vector<32x1xf32> to vector<32x128xf32>
    %276 = arith.mulf %273, %275 : vector<32x128xf32>
    %c31_i32_196 = arith.constant 31 : i32
    %277 = tpu.dynamic_rotate %256 by %c31_i32_196 dim 0 : vector<32x128xf32>, i32 -> vector<32x128xf32>
    %c0_197 = arith.constant 0 : index
    %c0_198 = arith.constant 0 : index
    %278 = vector.load %arg28[%c0_197, %c0_198] : memref<32x1xf32, #tpu.memory_space<vmem>>, vector<32x1xf32>
    %279 = vector.broadcast %278 : vector<32x1xf32> to vector<32x128xf32>
    %280 = arith.mulf %277, %279 : vector<32x128xf32>
    %281 = tpu.concatenate %260, %152, %264, %268, %255, %272, %276, %256, %280 in 1 : vector<32x64xf32>, vector<32x64xf32>, vector<32x64xf32>, vector<32x128xf32>, vector<32x128xf32>, vector<32x128xf32>, vector<32x128xf32>, vector<32x128xf32>, vector<32x128xf32> -> vector<32x960xf32>
    %c0_199 = arith.constant 0 : index
    %c0_200 = arith.constant 0 : index
    %282 = vector.load %arg14[%c0_199, %c0_200] : memref<960x128xf32, #tpu.memory_space<vmem>>, vector<960x128xf32>
    %cst_201 = arith.constant dense<0.000000e+00> : vector<32x128xf32>
    %283 = tpu.matmul %281, %282, %cst_201 {dimension_numbers = #tpu.dot_dimension_numbers<[1], [0], [0], [1], [0, 0, 1, 1], [], []>} : vector<32x960xf32>, vector<960x128xf32>, vector<32x128xf32> -> vector<32x128xf32>
    %c0_202 = arith.constant 0 : index
    %c0_203 = arith.constant 0 : index
    %284 = vector.load %arg15[%c0_202, %c0_203] : memref<1x128xf32, #tpu.memory_space<vmem>>, vector<1x128xf32>
    %285 = vector.broadcast %284 : vector<1x128xf32> to vector<32x128xf32>
    %286 = arith.addf %283, %285 : vector<32x128xf32>
    %cst_204 = arith.constant 0.000000e+00 : f32
    %287 = vector.broadcast %cst_204 : f32 to vector<32x128xf32>
    %288 = arith.maximumf %286, %287 : vector<32x128xf32>
    %c1_i32_205 = arith.constant 1 : i32
    %289 = tpu.dynamic_rotate %288 by %c1_i32_205 dim 0 : vector<32x128xf32>, i32 -> vector<32x128xf32>
    %c0_206 = arith.constant 0 : index
    %c0_207 = arith.constant 0 : index
    %290 = vector.load %arg31[%c0_206, %c0_207] : memref<32x1xf32, #tpu.memory_space<vmem>>, vector<32x1xf32>
    %291 = vector.broadcast %290 : vector<32x1xf32> to vector<32x128xf32>
    %292 = arith.mulf %289, %291 : vector<32x128xf32>
    %c31_i32_208 = arith.constant 31 : i32
    %293 = tpu.dynamic_rotate %288 by %c31_i32_208 dim 0 : vector<32x128xf32>, i32 -> vector<32x128xf32>
    %c0_209 = arith.constant 0 : index
    %c0_210 = arith.constant 0 : index
    %294 = vector.load %arg28[%c0_209, %c0_210] : memref<32x1xf32, #tpu.memory_space<vmem>>, vector<32x1xf32>
    %295 = vector.broadcast %294 : vector<32x1xf32> to vector<32x128xf32>
    %296 = arith.mulf %293, %295 : vector<32x128xf32>
    %297 = tpu.concatenate %292, %288, %296 in 1 : vector<32x128xf32>, vector<32x128xf32>, vector<32x128xf32> -> vector<32x384xf32>
    %c0_211 = arith.constant 0 : index
    %c0_212 = arith.constant 0 : index
    %298 = vector.load %arg16[%c0_211, %c0_212] : memref<384x256xf32, #tpu.memory_space<vmem>>, vector<384x256xf32>
    %cst_213 = arith.constant dense<0.000000e+00> : vector<32x256xf32>
    %299 = tpu.matmul %297, %298, %cst_213 {dimension_numbers = #tpu.dot_dimension_numbers<[1], [0], [0], [1], [0, 0, 1, 1], [], []>} : vector<32x384xf32>, vector<384x256xf32>, vector<32x256xf32> -> vector<32x256xf32>
    %c0_214 = arith.constant 0 : index
    %c0_215 = arith.constant 0 : index
    %300 = vector.load %arg17[%c0_214, %c0_215] : memref<1x256xf32, #tpu.memory_space<vmem>>, vector<1x256xf32>
    %301 = vector.broadcast %300 : vector<1x256xf32> to vector<32x256xf32>
    %302 = arith.addf %299, %301 : vector<32x256xf32>
    %cst_216 = arith.constant 0.000000e+00 : f32
    %303 = vector.broadcast %cst_216 : f32 to vector<32x256xf32>
    %304 = arith.maximumf %302, %303 : vector<32x256xf32>
    %c0_217 = arith.constant 0 : index
    %c0_218 = arith.constant 0 : index
    %305 = vector.load %arg36[%c0_217, %c0_218] : memref<32x256xf32, #tpu.memory_space<vmem>>, vector<32x256xf32>
    tpu.vector_store %arg36[%c0_217, %c0_218], %304 {strides = array<i32>} : memref<32x256xf32, #tpu.memory_space<vmem>>, vector<32x256xf32>,
    return
  }
  func.func @transform_0(%arg0: i32) -> (i32, i32) {
    %c0_i32 = arith.constant 0 : i32
    %c0_i32_0 = arith.constant 0 : i32
    %c0_i32_1 = arith.constant 0 : i32
    return %c0_i32, %c0_i32_0 : i32, i32
  }
  func.func @transform_1(%arg0: i32) -> (i32, i32, i32) {
    %c0_i32 = arith.constant 0 : i32
    %c0_i32_0 = arith.constant 0 : i32
    %c0_i32_1 = arith.constant 0 : i32
    %c0_i32_2 = arith.constant 0 : i32
    return %c0_i32, %c0_i32_0, %c0_i32_1 : i32, i32, i32
  }
  func.func @transform_2(%arg0: i32) -> (i32, i32, i32) {
    %c0_i32 = arith.constant 0 : i32
    %c0_i32_0 = arith.constant 0 : i32
    %c0_i32_1 = arith.constant 0 : i32
    %c0_i32_2 = arith.constant 0 : i32
    return %c0_i32, %c0_i32_0, %c0_i32_1 : i32, i32, i32
  }
  func.func @transform_3(%arg0: i32) -> (i32, i32, i32) {
    %c0_i32 = arith.constant 0 : i32
    %c0_i32_0 = arith.constant 0 : i32
    %c0_i32_1 = arith.constant 0 : i32
    %c0_i32_2 = arith.constant 0 : i32
    return %c0_i32, %c0_i32_0, %c0_i32_1 : i32, i32, i32
  }
  func.func @transform_4(%arg0: i32) -> (i32, i32, i32) {
    %c0_i32 = arith.constant 0 : i32
    %c0_i32_0 = arith.constant 0 : i32
    %c0_i32_1 = arith.constant 0 : i32
    %c0_i32_2 = arith.constant 0 : i32
    return %c0_i32, %c0_i32_0, %c0_i32_1 : i32, i32, i32
  }
  func.func @transform_5(%arg0: i32) -> (i32, i32) {
    %c0_i32 = arith.constant 0 : i32
    %c0_i32_0 = arith.constant 0 : i32
    %c0_i32_1 = arith.constant 0 : i32
    return %c0_i32, %c0_i32_0 : i32, i32
  }
  func.func @transform_6(%arg0: i32) -> (i32, i32) {
    %c0_i32 = arith.constant 0 : i32
    %c0_i32_0 = arith.constant 0 : i32
    %c0_i32_1 = arith.constant 0 : i32
    return %c0_i32, %c0_i32_0 : i32, i32
  }
  func.func @transform_7(%arg0: i32) -> (i32, i32) {
    %c0_i32 = arith.constant 0 : i32
    %c0_i32_0 = arith.constant 0 : i32
    %c0_i32_1 = arith.constant 0 : i32
    return %c0_i32, %c0_i32_0 : i32, i32
  }
  func.func @transform_8(%arg0: i32) -> (i32, i32) {
    %c0_i32 = arith.constant 0 : i32
    %c0_i32_0 = arith.constant 0 : i32
    %c0_i32_1 = arith.constant 0 : i32
    return %c0_i32, %c0_i32_0 : i32, i32
  }
  func.func @transform_9(%arg0: i32) -> (i32, i32) {
    %c0_i32 = arith.constant 0 : i32
    %c0_i32_0 = arith.constant 0 : i32
    %c0_i32_1 = arith.constant 0 : i32
    return %c0_i32, %c0_i32_0 : i32, i32
  }
  func.func @transform_10(%arg0: i32) -> (i32, i32) {
    %c0_i32 = arith.constant 0 : i32
    %c0_i32_0 = arith.constant 0 : i32
    %c0_i32_1 = arith.constant 0 : i32
    return %c0_i32, %c0_i32_0 : i32, i32
  }
  func.func @transform_11(%arg0: i32) -> (i32, i32) {
    %c0_i32 = arith.constant 0 : i32
    %c0_i32_0 = arith.constant 0 : i32
    %c0_i32_1 = arith.constant 0 : i32
    return %c0_i32, %c0_i32_0 : i32, i32
  }
  func.func @transform_12(%arg0: i32) -> (i32, i32) {
    %c0_i32 = arith.constant 0 : i32
    %c0_i32_0 = arith.constant 0 : i32
    %c0_i32_1 = arith.constant 0 : i32
    return %c0_i32, %c0_i32_0 : i32, i32
  }
  func.func @transform_13(%arg0: i32) -> (i32, i32) {
    %c0_i32 = arith.constant 0 : i32
    %c0_i32_0 = arith.constant 0 : i32
    %c0_i32_1 = arith.constant 0 : i32
    return %c0_i32, %c0_i32_0 : i32, i32
  }
  func.func @transform_14(%arg0: i32) -> (i32, i32) {
    %c0_i32 = arith.constant 0 : i32
    %c0_i32_0 = arith.constant 0 : i32
    %c0_i32_1 = arith.constant 0 : i32
    return %c0_i32, %c0_i32_0 : i32, i32
  }
  func.func @transform_15(%arg0: i32) -> (i32, i32) {
    %c0_i32 = arith.constant 0 : i32
    %c0_i32_0 = arith.constant 0 : i32
    %c0_i32_1 = arith.constant 0 : i32
    return %c0_i32, %c0_i32_0 : i32, i32
  }
  func.func @transform_16(%arg0: i32) -> (i32, i32) {
    %c0_i32 = arith.constant 0 : i32
    %c0_i32_0 = arith.constant 0 : i32
    %c0_i32_1 = arith.constant 0 : i32
    return %c0_i32, %c0_i32_0 : i32, i32
  }
  func.func @transform_17(%arg0: i32) -> (i32, i32) {
    %c0_i32 = arith.constant 0 : i32
    %c0_i32_0 = arith.constant 0 : i32
    %c0_i32_1 = arith.constant 0 : i32
    return %c0_i32, %c0_i32_0 : i32, i32
  }
  func.func @transform_18(%arg0: i32) -> (i32, i32) {
    %c0_i32 = arith.constant 0 : i32
    %c0_i32_0 = arith.constant 0 : i32
    %c0_i32_1 = arith.constant 0 : i32
    return %c0_i32, %c0_i32_0 : i32, i32
  }
  func.func @transform_19(%arg0: i32) -> (i32, i32) {
    %c0_i32 = arith.constant 0 : i32
    %c0_i32_0 = arith.constant 0 : i32
    %c0_i32_1 = arith.constant 0 : i32
    return %c0_i32, %c0_i32_0 : i32, i32
  }
  func.func @transform_20(%arg0: i32) -> (i32, i32) {
    %c0_i32 = arith.constant 0 : i32
    %c0_i32_0 = arith.constant 0 : i32
    %c0_i32_1 = arith.constant 0 : i32
    return %c0_i32, %c0_i32_0 : i32, i32
  }
  func.func @transform_21(%arg0: i32) -> (i32, i32) {
    %c0_i32 = arith.constant 0 : i32
    %c0_i32_0 = arith.constant 0 : i32
    %c0_i32_1 = arith.constant 0 : i32
    return %c0_i32, %c0_i32_0 : i32, i32
  }
  func.func @transform_22(%arg0: i32) -> (i32, i32) {
    %c0_i32 = arith.constant 0 : i32
    %c0_i32_0 = arith.constant 0 : i32
    %c0_i32_1 = arith.constant 0 : i32
    return %c0_i32, %c0_i32_0 : i32, i32
  }
  func.func @transform_23(%arg0: i32) -> (i32, i32) {
    %c0_i32 = arith.constant 0 : i32
    %c0_i32_0 = arith.constant 0 : i32
    %c0_i32_1 = arith.constant 0 : i32
    return %c0_i32, %c0_i32_0 : i32, i32
  }
  func.func @transform_24(%arg0: i32) -> (i32, i32) {
    %c0_i32 = arith.constant 0 : i32
    %c0_i32_0 = arith.constant 0 : i32
    %c0_i32_1 = arith.constant 0 : i32
    return %c0_i32, %c0_i32_0 : i32, i32
  }
  func.func @transform_25(%arg0: i32) -> (i32, i32) {
    %c0_i32 = arith.constant 0 : i32
    %c0_i32_0 = arith.constant 0 : i32
    %c0_i32_1 = arith.constant 0 : i32
    return %c0_i32, %c0_i32_0 : i32, i32
  }
  func.func @transform_26(%arg0: i32) -> (i32, i32) {
    %c0_i32 = arith.constant 0 : i32
    %c0_i32_0 = arith.constant 0 : i32
    %c0_i32_1 = arith.constant 0 : i32
    return %c0_i32, %c0_i32_0 : i32, i32
  }
  func.func @transform_27(%arg0: i32) -> (i32, i32) {
    %c0_i32 = arith.constant 0 : i32
    %c0_i32_0 = arith.constant 0 : i32
    %c0_i32_1 = arith.constant 0 : i32
    return %c0_i32, %c0_i32_0 : i32, i32
  }
  func.func @transform_28(%arg0: i32) -> (i32, i32) {
    %c0_i32 = arith.constant 0 : i32
    %c0_i32_0 = arith.constant 0 : i32
    %c0_i32_1 = arith.constant 0 : i32
    return %c0_i32, %c0_i32_0 : i32, i32
  }
  func.func @transform_29(%arg0: i32) -> (i32, i32) {
    %c0_i32 = arith.constant 0 : i32
    %c0_i32_0 = arith.constant 0 : i32
    %c0_i32_1 = arith.constant 0 : i32
    return %c0_i32, %c0_i32_0 : i32, i32
  }
  func.func @transform_30(%arg0: i32) -> (i32, i32) {
    %c0_i32 = arith.constant 0 : i32
    %c0_i32_0 = arith.constant 0 : i32
    %c0_i32_1 = arith.constant 0 : i32
    return %c0_i32, %c0_i32_0 : i32, i32
  }
  func.func @transform_31(%arg0: i32) -> (i32, i32) {
    %c0_i32 = arith.constant 0 : i32
    %c0_i32_0 = arith.constant 0 : i32
    %c0_i32_1 = arith.constant 0 : i32
    return %c0_i32, %c0_i32_0 : i32, i32
  }
  func.func @transform_32(%arg0: i32) -> (i32, i32) {
    %c0_i32 = arith.constant 0 : i32
    %c0_i32_0 = arith.constant 0 : i32
    %c0_i32_1 = arith.constant 0 : i32
    return %c0_i32, %c0_i32_0 : i32, i32
  }
  func.func @transform_33(%arg0: i32) -> (i32, i32) {
    %c0_i32 = arith.constant 0 : i32
    %c0_i32_0 = arith.constant 0 : i32
    %c0_i32_1 = arith.constant 0 : i32
    return %c0_i32, %c0_i32_0 : i32, i32
  }
  func.func @transform_34(%arg0: i32) -> (i32, i32) {
    %c0_i32 = arith.constant 0 : i32
    %c0_i32_0 = arith.constant 0 : i32
    %c0_i32_1 = arith.constant 0 : i32
    return %c0_i32, %c0_i32_0 : i32, i32
  }
  func.func @transform_35(%arg0: i32) -> (i32, i32) {
    %c0_i32 = arith.constant 0 : i32
    %c0_i32_0 = arith.constant 0 : i32
    %c0_i32_1 = arith.constant 0 : i32
    return %c0_i32, %c0_i32_0 : i32, i32
  }
}

</mosaic_0001>

<llo_original>
// kernel: forward.1
$region0: #{forward.1}
  #allocation0 [shape = 'u32[]', space=smem, size = 0x4, offset = 0x4, fixed_abs, tag = 'smem constant byte address 0x4 - core index']
  #allocation1 [shape = 'u32[144,128]{1,0:T(1,128)}', space=vmem, size = 0x12000, scoped, tag = 'internal scratch']
  %s0 = inlined_call_operand.smem [shape: u32[36], index: -1, kind: input, shape index: {}]
  %s1 = sld [smem:[%s0]]
  %s2 = scalar_lea.smem %s0, 1
  %s3 = sld [smem:[%s2]]
  %s4 = scalar_lea.smem %s0, 2
  %s5 = sld [smem:[%s4]]
  %s6 = scalar_lea.smem %s0, 3
  %s7 = sld [smem:[%s6]]
  %s8 = scalar_lea.smem %s0, 4
  %s9 = sld [smem:[%s8]]
  %s10 = scalar_lea.smem %s0, 5
  %s11 = sld [smem:[%s10]]
  %s12 = scalar_lea.smem %s0, 6
  %s13 = sld [smem:[%s12]]
  %s14 = scalar_lea.smem %s0, 7
  %s15 = sld [smem:[%s14]]
  %s16 = scalar_lea.smem %s0, 8
  %s17 = sld [smem:[%s16]]
  %s18 = scalar_lea.smem %s0, 9
  %s19 = sld [smem:[%s18]]
  %s20 = scalar_lea.smem %s0, 10
  %s21 = sld [smem:[%s20]]
  %s22 = scalar_lea.smem %s0, 11
  %s23 = sld [smem:[%s22]]
  %s24 = scalar_lea.smem %s0, 12
  %s25 = sld [smem:[%s24]]
  %s26 = scalar_lea.smem %s0, 13
  %s27 = sld [smem:[%s26]]
  %s28 = scalar_lea.smem %s0, 14
  %s29 = sld [smem:[%s28]]
  %s30 = scalar_lea.smem %s0, 15
  %s31 = sld [smem:[%s30]]
  %s32 = scalar_lea.smem %s0, 16
  %s33 = sld [smem:[%s32]]
  %s34 = scalar_lea.smem %s0, 17
  %s35 = sld [smem:[%s34]]
  %s36 = scalar_lea.smem %s0, 18
  %s37 = sld [smem:[%s36]]
  %s38 = scalar_lea.smem %s0, 19
  %s39 = sld [smem:[%s38]]
  %s40 = scalar_lea.smem %s0, 20
  %s41 = sld [smem:[%s40]]
  %s42 = scalar_lea.smem %s0, 21
  %s43 = sld [smem:[%s42]]
  %s44 = scalar_lea.smem %s0, 22
  %s45 = sld [smem:[%s44]]
  %s46 = scalar_lea.smem %s0, 23
  %s47 = sld [smem:[%s46]]
  %s48 = scalar_lea.smem %s0, 24
  %s49 = sld [smem:[%s48]]
  %s50 = scalar_lea.smem %s0, 25
  %s51 = sld [smem:[%s50]]
  %s52 = scalar_lea.smem %s0, 26
  %s53 = sld [smem:[%s52]]
  %s54 = scalar_lea.smem %s0, 27
  %s55 = sld [smem:[%s54]]
  %s56 = scalar_lea.smem %s0, 28
  %s57 = sld [smem:[%s56]]
  %s58 = scalar_lea.smem %s0, 29
  %s59 = sld [smem:[%s58]]
  %s60 = scalar_lea.smem %s0, 30
  %s61 = sld [smem:[%s60]]
  %s62 = scalar_lea.smem %s0, 31
  %s63 = sld [smem:[%s62]]
  %s64 = scalar_lea.smem %s0, 32
  %s65 = sld [smem:[%s64]]
  %s66 = scalar_lea.smem %s0, 33
  %s67 = sld [smem:[%s66]]
  %s68 = scalar_lea.smem %s0, 34
  %s69 = sld [smem:[%s68]]
  %s70 = scalar_lea.smem %s0, 35
  %s71 = sld [smem:[%s70]]
  %s72 = sld [smem:[#allocation0]]
  $region150: #{forward.1} parent=0
    _
  %s74 = ssub.s32 1, %s72
  %s75 = scalar_select 0, %s74, %s72
  // Predicated region
  $region2: #{forward.1} parent=0 // pred_check
    _
  $region3: #{forward.1} parent=0 // pred_check_branch
    %77 = sbr.rel (0) target = $region5
  $region4: #{forward.1} parent=0 // pred_region
    _
  $region5: #{forward.1} parent=0 // pred_fallthru
    _
  // Predicated region
  $region6: #{forward.1} parent=0 // pred_check
    _
  $region7: #{forward.1} parent=0 // pred_check_branch
    %79 = sbr.rel (0) target = $region9
  $region8: #{forward.1} parent=0 // pred_region
    _
  $region9: #{forward.1} parent=0 // pred_fallthru
    _
  // Predicated region
  $region10: #{forward.1} parent=0 // pred_check
    _
  $region11: #{forward.1} parent=0 // pred_check_branch
    %81 = sbr.rel (0) target = $region13
  $region12: #{forward.1} parent=0 // pred_region
    _
  $region13: #{forward.1} parent=0 // pred_fallthru
    _
  // Predicated region
  $region14: #{forward.1} parent=0 // pred_check
    _
  $region15: #{forward.1} parent=0 // pred_check_branch
    %83 = sbr.rel (0) target = $region17
  $region16: #{forward.1} parent=0 // pred_region
    _
  $region17: #{forward.1} parent=0 // pred_fallthru
    _
  // Predicated region
  $region18: #{forward.1} parent=0 // pred_check
    _
  $region19: #{forward.1} parent=0 // pred_check_branch
    %85 = sbr.rel (0) target = $region21
  $region20: #{forward.1} parent=0 // pred_region
    _
  $region21: #{forward.1} parent=0 // pred_fallthru
    _
  // Predicated region
  $region22: #{forward.1} parent=0 // pred_check
    _
  $region23: #{forward.1} parent=0 // pred_check_branch
    %87 = sbr.rel (0) target = $region25
  $region24: #{forward.1} parent=0 // pred_region
    _
  $region25: #{forward.1} parent=0 // pred_fallthru
    _
  // Predicated region
  $region26: #{forward.1} parent=0 // pred_check
    _
  $region27: #{forward.1} parent=0 // pred_check_branch
    %89 = sbr.rel (0) target = $region29
  $region28: #{forward.1} parent=0 // pred_region
    _
  $region29: #{forward.1} parent=0 // pred_fallthru
    _
  // Predicated region
  $region30: #{forward.1} parent=0 // pred_check
    _
  $region31: #{forward.1} parent=0 // pred_check_branch
    %91 = sbr.rel (0) target = $region33
  $region32: #{forward.1} parent=0 // pred_region
    _
  $region33: #{forward.1} parent=0 // pred_fallthru
    _
  // Predicated region
  $region34: #{forward.1} parent=0 // pred_check
    _
  $region35: #{forward.1} parent=0 // pred_check_branch
    %93 = sbr.rel (0) target = $region37
  $region36: #{forward.1} parent=0 // pred_region
    _
  $region37: #{forward.1} parent=0 // pred_fallthru
    _
  // Predicated region
  $region38: #{forward.1} parent=0 // pred_check
    _
  $region39: #{forward.1} parent=0 // pred_check_branch
    %95 = sbr.rel (0) target = $region41
  $region40: #{forward.1} parent=0 // pred_region
    _
  $region41: #{forward.1} parent=0 // pred_fallthru
    _
  // Predicated region
  $region42: #{forward.1} parent=0 // pred_check
    _
  $region43: #{forward.1} parent=0 // pred_check_branch
    %97 = sbr.rel (0) target = $region45
  $region44: #{forward.1} parent=0 // pred_region
    _
  $region45: #{forward.1} parent=0 // pred_fallthru
    _
  // Predicated region
  $region46: #{forward.1} parent=0 // pred_check
    _
  $region47: #{forward.1} parent=0 // pred_check_branch
    %99 = sbr.rel (0) target = $region49
  $region48: #{forward.1} parent=0 // pred_region
    _
  $region49: #{forward.1} parent=0 // pred_fallthru
    _
  // Predicated region
  $region50: #{forward.1} parent=0 // pred_check
    _
  $region51: #{forward.1} parent=0 // pred_check_branch
    %101 = sbr.rel (0) target = $region53
  $region52: #{forward.1} parent=0 // pred_region
    _
  $region53: #{forward.1} parent=0 // pred_fallthru
    _
  // Predicated region
  $region54: #{forward.1} parent=0 // pred_check
    _
  $region55: #{forward.1} parent=0 // pred_check_branch
    %103 = sbr.rel (0) target = $region57
  $region56: #{forward.1} parent=0 // pred_region
    _
  $region57: #{forward.1} parent=0 // pred_fallthru
    _
  // Predicated region
  $region58: #{forward.1} parent=0 // pred_check
    _
  $region59: #{forward.1} parent=0 // pred_check_branch
    %105 = sbr.rel (0) target = $region61
  $region60: #{forward.1} parent=0 // pred_region
    _
  $region61: #{forward.1} parent=0 // pred_fallthru
    _
  // Predicated region
  $region62: #{forward.1} parent=0 // pred_check
    _
  $region63: #{forward.1} parent=0 // pred_check_branch
    %107 = sbr.rel (0) target = $region65
  $region64: #{forward.1} parent=0 // pred_region
    _
  $region65: #{forward.1} parent=0 // pred_fallthru
    _
  // Predicated region
  $region66: #{forward.1} parent=0 // pred_check
    _
  $region67: #{forward.1} parent=0 // pred_check_branch
    %109 = sbr.rel (0) target = $region69
  $region68: #{forward.1} parent=0 // pred_region
    _
  $region69: #{forward.1} parent=0 // pred_fallthru
    _
  // Predicated region
  $region70: #{forward.1} parent=0 // pred_check
    _
  $region71: #{forward.1} parent=0 // pred_check_branch
    %111 = sbr.rel (0) target = $region73
  $region72: #{forward.1} parent=0 // pred_region
    _
  $region73: #{forward.1} parent=0 // pred_fallthru
    _
  // Predicated region
  $region74: #{forward.1} parent=0 // pred_check
    _
  $region75: #{forward.1} parent=0 // pred_check_branch
    %113 = sbr.rel (0) target = $region77
  $region76: #{forward.1} parent=0 // pred_region
    _
  $region77: #{forward.1} parent=0 // pred_fallthru
    _
  // Predicated region
  $region78: #{forward.1} parent=0 // pred_check
    _
  $region79: #{forward.1} parent=0 // pred_check_branch
    %115 = sbr.rel (0) target = $region81
  $region80: #{forward.1} parent=0 // pred_region
    _
  $region81: #{forward.1} parent=0 // pred_fallthru
    _
  // Predicated region
  $region82: #{forward.1} parent=0 // pred_check
    _
  $region83: #{forward.1} parent=0 // pred_check_branch
    %117 = sbr.rel (0) target = $region85
  $region84: #{forward.1} parent=0 // pred_region
    _
  $region85: #{forward.1} parent=0 // pred_fallthru
    _
  // Predicated region
  $region86: #{forward.1} parent=0 // pred_check
    _
  $region87: #{forward.1} parent=0 // pred_check_branch
    %119 = sbr.rel (0) target = $region89
  $region88: #{forward.1} parent=0 // pred_region
    _
  $region89: #{forward.1} parent=0 // pred_fallthru
    _
  // Predicated region
  $region90: #{forward.1} parent=0 // pred_check
    _
  $region91: #{forward.1} parent=0 // pred_check_branch
    %121 = sbr.rel (0) target = $region93
  $region92: #{forward.1} parent=0 // pred_region
    _
  $region93: #{forward.1} parent=0 // pred_fallthru
    _
  // Predicated region
  $region94: #{forward.1} parent=0 // pred_check
    _
  $region95: #{forward.1} parent=0 // pred_check_branch
    %123 = sbr.rel (0) target = $region97
  $region96: #{forward.1} parent=0 // pred_region
    _
  $region97: #{forward.1} parent=0 // pred_fallthru
    _
  // Predicated region
  $region98: #{forward.1} parent=0 // pred_check
    _
  $region99: #{forward.1} parent=0 // pred_check_branch
    %125 = sbr.rel (0) target = $region101
  $region100: #{forward.1} parent=0 // pred_region
    _
  $region101: #{forward.1} parent=0 // pred_fallthru
    _
  // Predicated region
  $region102: #{forward.1} parent=0 // pred_check
    _
  $region103: #{forward.1} parent=0 // pred_check_branch
    %127 = sbr.rel (0) target = $region105
  $region104: #{forward.1} parent=0 // pred_region
    _
  $region105: #{forward.1} parent=0 // pred_fallthru
    _
  // Predicated region
  $region106: #{forward.1} parent=0 // pred_check
    _
  $region107: #{forward.1} parent=0 // pred_check_branch
    %129 = sbr.rel (0) target = $region109
  $region108: #{forward.1} parent=0 // pred_region
    _
  $region109: #{forward.1} parent=0 // pred_fallthru
    _
  // Predicated region
  $region110: #{forward.1} parent=0 // pred_check
    _
  $region111: #{forward.1} parent=0 // pred_check_branch
    %131 = sbr.rel (0) target = $region113
  $region112: #{forward.1} parent=0 // pred_region
    _
  $region113: #{forward.1} parent=0 // pred_fallthru
    _
  // Predicated region
  $region114: #{forward.1} parent=0 // pred_check
    _
  $region115: #{forward.1} parent=0 // pred_check_branch
    %133 = sbr.rel (0) target = $region117
  $region116: #{forward.1} parent=0 // pred_region
    _
  $region117: #{forward.1} parent=0 // pred_fallthru
    _
  // Predicated region
  $region118: #{forward.1} parent=0 // pred_check
    _
  $region119: #{forward.1} parent=0 // pred_check_branch
    %135 = sbr.rel (0) target = $region121
  $region120: #{forward.1} parent=0 // pred_region
    _
  $region121: #{forward.1} parent=0 // pred_fallthru
    _
  // Predicated region
  $region122: #{forward.1} parent=0 // pred_check
    _
  $region123: #{forward.1} parent=0 // pred_check_branch
    %137 = sbr.rel (0) target = $region125
  $region124: #{forward.1} parent=0 // pred_region
    _
  $region125: #{forward.1} parent=0 // pred_fallthru
    _
  // Predicated region
  $region126: #{forward.1} parent=0 // pred_check
    _
  $region127: #{forward.1} parent=0 // pred_check_branch
    %139 = sbr.rel (0) target = $region129
  $region128: #{forward.1} parent=0 // pred_region
    _
  $region129: #{forward.1} parent=0 // pred_fallthru
    _
  // Predicated region
  $region130: #{forward.1} parent=0 // pred_check
    _
  $region131: #{forward.1} parent=0 // pred_check_branch
    %141 = sbr.rel (0) target = $region133
  $region132: #{forward.1} parent=0 // pred_region
    _
  $region133: #{forward.1} parent=0 // pred_fallthru
    _
  // Predicated region
  $region134: #{forward.1} parent=0 // pred_check
    _
  $region135: #{forward.1} parent=0 // pred_check_branch
    %143 = sbr.rel (0) target = $region137
  $region136: #{forward.1} parent=0 // pred_region
    _
  $region137: #{forward.1} parent=0 // pred_fallthru
    _
  // Predicated region
  $region138: #{forward.1} parent=0 // pred_check
    _
  $region139: #{forward.1} parent=0 // pred_check_branch
    %145 = sbr.rel (0) target = $region141
  $region140: #{forward.1} parent=0 // pred_region
    _
  $region141: #{forward.1} parent=0 // pred_fallthru
    _
  %v146 = vld [vmem:[%s1] sm:$0xff]
  %v147 = vld [vmem:[%s1 + $0x8] sm:$0xff]
  %v148 = vrot.slane %v146, 7
  %v149 = vrot.slane %v147, 7
  %v150 = vld [vmem:[%s63] sm:$0xff]
  %152 = vset.pattern.permute.xlu0 0
  %153 = vperm.xlu0 %152, %v150
  %v154 = vpop.permute.xlu0 %153
  %v156 = vmul.f32 %v148, %v154
  %v157 = vmul.f32 %v149, %v154
  %v158 = vrot.slane %v146, 1
  %v159 = vrot.slane %v147, 1
  %v160 = vld [vmem:[%s57] sm:$0xff]
  %162 = vset.pattern.permute.xlu0 0
  %163 = vperm.xlu0 %162, %v160
  %v164 = vpop.permute.xlu0 %163
  %v166 = vmul.f32 %v158, %v164
  %v167 = vmul.f32 %v159, %v164
  %v168 = vld [vmem:[%s11] sm:$0xff]
  %v169 = vld [vmem:[%s11 + $0x8] sm:$0xff]
  %v170 = vld [vmem:[%s11 + $0x10] sm:$0xff]
  %v171 = vld [vmem:[%s11 + $0x18] sm:$0xff]
  %v172 = vld [vmem:[%s11 + $0x20] sm:$0xff]
  %v173 = vld [vmem:[%s11 + $0x28] sm:$0xff]
  %v174 = vld [vmem:[%s11 + $0x30] sm:$0xff]
  %v175 = vld [vmem:[%s11 + $0x38] sm:$0xff]
  %v176 = vld [vmem:[%s11 + $0x40] sm:$0xff]
  %v177 = vld [vmem:[%s11 + $0x48] sm:$0xff]
  %v178 = vld [vmem:[%s11 + $0x50] sm:$0xff]
  %v179 = vld [vmem:[%s11 + $0x58] sm:$0xff]
  %v180 = vld [vmem:[%s11 + $0x60] sm:$0xff]
  %v181 = vld [vmem:[%s11 + $0x68] sm:$0xff]
  %v182 = vld [vmem:[%s11 + $0x70] sm:$0xff]
  %v183 = vld [vmem:[%s11 + $0x78] sm:$0xff]
  %v184 = vld [vmem:[%s11 + $0x80] sm:$0xff]
  %v185 = vld [vmem:[%s11 + $0x88] sm:$0xff]
  %v186 = vld [vmem:[%s11 + $0x90] sm:$0xff]
  %v187 = vld [vmem:[%s11 + $0x98] sm:$0xff]
  %v188 = vld [vmem:[%s11 + $0xa0] sm:$0xff]
  %v189 = vld [vmem:[%s11 + $0xa8] sm:$0xff]
  %v190 = vld [vmem:[%s11 + $0xb0] sm:$0xff]
  %v191 = vld [vmem:[%s11 + $0xb8] sm:$0xff]
  %v192 = vld [vmem:[%s11 + $0xc0] sm:$0xff]
  %v193 = vld [vmem:[%s11 + $0xc8] sm:$0xff]
  %v194 = vld [vmem:[%s11 + $0xd0] sm:$0xff]
  %v195 = vld [vmem:[%s11 + $0xd8] sm:$0xff]
  %v196 = vld [vmem:[%s11 + $0xe0] sm:$0xff]
  %v197 = vld [vmem:[%s11 + $0xe8] sm:$0xff]
  %v198 = vld [vmem:[%s11 + $0xf0] sm:$0xff]
  %v199 = vld [vmem:[%s11 + $0xf8] sm:$0xff]
  %v200 = vld [vmem:[%s11 + $0x100] sm:$0xff]
  %v201 = vld [vmem:[%s11 + $0x108] sm:$0xff]
  %v202 = vld [vmem:[%s11 + $0x110] sm:$0xff]
  %v203 = vld [vmem:[%s11 + $0x118] sm:$0xff]
  %v204 = vld [vmem:[%s11 + $0x120] sm:$0xff]
  %v205 = vld [vmem:[%s11 + $0x128] sm:$0xff]
  %v206 = vld [vmem:[%s11 + $0x130] sm:$0xff]
  %v207 = vld [vmem:[%s11 + $0x138] sm:$0xff]
  %v208 = vld [vmem:[%s11 + $0x140] sm:$0xff]
  %v209 = vld [vmem:[%s11 + $0x148] sm:$0xff]
  %v210 = vld [vmem:[%s11 + $0x150] sm:$0xff]
  %v211 = vld [vmem:[%s11 + $0x158] sm:$0xff]
  %v212 = vld [vmem:[%s11 + $0x160] sm:$0xff]
  %v213 = vld [vmem:[%s11 + $0x168] sm:$0xff]
  %v214 = vld [vmem:[%s11 + $0x170] sm:$0xff]
  %v215 = vld [vmem:[%s11 + $0x178] sm:$0xff]
  %v216 = vld [vmem:[%s11 + $0x180] sm:$0xff]
  %v217 = vld [vmem:[%s11 + $0x188] sm:$0xff]
  %v218 = vld [vmem:[%s11 + $0x190] sm:$0xff]
  %v219 = vld [vmem:[%s11 + $0x198] sm:$0xff]
  %v220 = vld [vmem:[%s11 + $0x1a0] sm:$0xff]
  %v221 = vld [vmem:[%s11 + $0x1a8] sm:$0xff]
  %v222 = vld [vmem:[%s11 + $0x1b0] sm:$0xff]
  %v223 = vld [vmem:[%s11 + $0x1b8] sm:$0xff]
  %v224 = vld [vmem:[%s11 + $0x1c0] sm:$0xff]
  %v225 = vld [vmem:[%s11 + $0x1c8] sm:$0xff]
  %v226 = vld [vmem:[%s11 + $0x1d0] sm:$0xff]
  %v227 = vld [vmem:[%s11 + $0x1d8] sm:$0xff]
  %v228 = vld [vmem:[%s11 + $0x1e0] sm:$0xff]
  %v229 = vld [vmem:[%s11 + $0x1e8] sm:$0xff]
  %v230 = vld [vmem:[%s11 + $0x1f0] sm:$0xff]
  %v231 = vld [vmem:[%s11 + $0x1f8] sm:$0xff]
  %v232 = vld [vmem:[%s11 + $0x200] sm:$0xff]
  %v233 = vld [vmem:[%s11 + $0x208] sm:$0xff]
  %v234 = vld [vmem:[%s11 + $0x210] sm:$0xff]
  %v235 = vld [vmem:[%s11 + $0x218] sm:$0xff]
  %v236 = vld [vmem:[%s11 + $0x220] sm:$0xff]
  %v237 = vld [vmem:[%s11 + $0x228] sm:$0xff]
  %v238 = vld [vmem:[%s11 + $0x230] sm:$0xff]
  %v239 = vld [vmem:[%s11 + $0x238] sm:$0xff]
  %v240 = vld [vmem:[%s11 + $0x240] sm:$0xff]
  %v241 = vld [vmem:[%s11 + $0x248] sm:$0xff]
  %v242 = vld [vmem:[%s11 + $0x250] sm:$0xff]
  %v243 = vld [vmem:[%s11 + $0x258] sm:$0xff]
  %v244 = vld [vmem:[%s11 + $0x260] sm:$0xff]
  %v245 = vld [vmem:[%s11 + $0x268] sm:$0xff]
  %v246 = vld [vmem:[%s11 + $0x270] sm:$0xff]
  %v247 = vld [vmem:[%s11 + $0x278] sm:$0xff]
  %v248 = vld [vmem:[%s11 + $0x280] sm:$0xff]
  %v249 = vld [vmem:[%s11 + $0x288] sm:$0xff]
  %v250 = vld [vmem:[%s11 + $0x290] sm:$0xff]
  %v251 = vld [vmem:[%s11 + $0x298] sm:$0xff]
  %v252 = vld [vmem:[%s11 + $0x2a0] sm:$0xff]
  %v253 = vld [vmem:[%s11 + $0x2a8] sm:$0xff]
  %v254 = vld [vmem:[%s11 + $0x2b0] sm:$0xff]
  %v255 = vld [vmem:[%s11 + $0x2b8] sm:$0xff]
  %v256 = vld [vmem:[%s11 + $0x2c0] sm:$0xff]
  %v257 = vld [vmem:[%s11 + $0x2c8] sm:$0xff]
  %v258 = vld [vmem:[%s11 + $0x2d0] sm:$0xff]
  %v259 = vld [vmem:[%s11 + $0x2d8] sm:$0xff]
  %v260 = vld [vmem:[%s11 + $0x2e0] sm:$0xff]
  %v261 = vld [vmem:[%s11 + $0x2e8] sm:$0xff]
  %v262 = vld [vmem:[%s11 + $0x2f0] sm:$0xff]
  %v263 = vld [vmem:[%s11 + $0x2f8] sm:$0xff]
  %v264 = vld [vmem:[%s13] sm:$0x1]
  %v266 = vlaneseq
  %v267 = vshrl.u32 %v266, 7
  %v268 = vsub.s32 0, %v267
  %v269 = vrot.slane %v264, %v268
  %271 = vmatprep.subr.mxu0 0.0
  %272 = vmatpush1.msra.mxu0 %v168
  %273 = vmatprep.subr.mxu0 0.0
  %274 = vmatpush1.msra.mxu0 %v169
  %275 = vmatprep.subr.mxu0 0.0
  %276 = vmatpush1.msra.mxu0 %v170
  %277 = vmatprep.subr.mxu0 0.0
  %278 = vmatpush1.msra.mxu0 %v171
  %279 = vmatprep.subr.mxu0 0.0
  %280 = vmatpush1.msra.mxu0 %v172
  %281 = vmatprep.subr.mxu0 0.0
  %282 = vmatpush1.msra.mxu0 %v173
  %283 = vmatprep.subr.mxu0 0.0
  %284 = vmatpush1.msra.mxu0 %v174
  %285 = vmatprep.subr.mxu0 0.0
  %286 = vmatpush1.msra.mxu0 %v175
  %287 = vmatprep.subr.mxu0 0.0
  %288 = vmatpush1.msra.mxu0 %v176
  %289 = vmatprep.subr.mxu0 0.0
  %290 = vmatpush1.msra.mxu0 %v177
  %291 = vmatprep.subr.mxu0 0.0
  %292 = vmatpush1.msra.mxu0 %v178
  %293 = vmatprep.subr.mxu0 0.0
  %294 = vmatpush1.msra.mxu0 %v179
  %295 = vmatprep.subr.mxu0 0.0
  %296 = vmatpush1.msra.mxu0 %v180
  %297 = vmatprep.subr.mxu0 0.0
  %298 = vmatpush1.msra.mxu0 %v181
  %299 = vmatprep.subr.mxu0 0.0
  %300 = vmatpush1.msra.mxu0 %v182
  %301 = vmatprep.subr.mxu0 0.0
  %302 = vmatpush1.msra.mxu0 %v183
  %303 = vmatprep.subr.mxu0 0.0
  %304 = vmatpush1.msra.mxu0 %v184
  %305 = vmatprep.subr.mxu0 0.0
  %306 = vmatpush1.msra.mxu0 %v185
  %307 = vmatprep.subr.mxu0 0.0
  %308 = vmatpush1.msra.mxu0 %v186
  %309 = vmatprep.subr.mxu0 0.0
  %310 = vmatpush1.msra.mxu0 %v187
  %311 = vmatprep.subr.mxu0 0.0
  %312 = vmatpush1.msra.mxu0 %v188
  %313 = vmatprep.subr.mxu0 0.0
  %314 = vmatpush1.msra.mxu0 %v189
  %315 = vmatprep.subr.mxu0 0.0
  %316 = vmatpush1.msra.mxu0 %v190
  %317 = vmatprep.subr.mxu0 0.0
  %318 = vmatpush1.msra.mxu0 %v191
  %319 = vmatprep.subr.mxu0 0.0
  %320 = vmatpush1.msra.mxu0 %v192
  %321 = vmatprep.subr.mxu0 0.0
  %322 = vmatpush1.msra.mxu0 %v193
  %323 = vmatprep.subr.mxu0 0.0
  %324 = vmatpush1.msra.mxu0 %v194
  %325 = vmatprep.subr.mxu0 0.0
  %326 = vmatpush1.msra.mxu0 %v195
  %327 = vmatprep.subr.mxu0 0.0
  %328 = vmatpush1.msra.mxu0 %v196
  %329 = vmatprep.subr.mxu0 0.0
  %330 = vmatpush1.msra.mxu0 %v197
  %331 = vmatprep.subr.mxu0 0.0
  %332 = vmatpush1.msra.mxu0 %v198
  %333 = vmatprep.subr.mxu0 0.0
  %334 = vmatpush1.msra.mxu0 %v199
  %335 = vmatprep.mubr.f32.mxu0 %v157
  %336 = vmatmul.mubr.f32.gmra.mrb[0].mxu0 %v156
  %v337 = vpop.f32.mrb[0].mxu0
  %v338 = vadd.f32 %v269, %v337
  %v339 = vpop.f32.mrb[0].mxu0
  %340 = vdwg.mxu0
  %341 = vmatprep.subr.mxu0 0.0
  %342 = vmatpush1.msra.mxu0 %v200
  %343 = vmatprep.subr.mxu0 0.0
  %344 = vmatpush1.msra.mxu0 %v201
  %345 = vmatprep.subr.mxu0 0.0
  %346 = vmatpush1.msra.mxu0 %v202
  %347 = vmatprep.subr.mxu0 0.0
  %348 = vmatpush1.msra.mxu0 %v203
  %349 = vmatprep.subr.mxu0 0.0
  %350 = vmatpush1.msra.mxu0 %v204
  %351 = vmatprep.subr.mxu0 0.0
  %352 = vmatpush1.msra.mxu0 %v205
  %353 = vmatprep.subr.mxu0 0.0
  %354 = vmatpush1.msra.mxu0 %v206
  %355 = vmatprep.subr.mxu0 0.0
  %356 = vmatpush1.msra.mxu0 %v207
  %357 = vmatprep.subr.mxu0 0.0
  %358 = vmatpush1.msra.mxu0 %v208
  %359 = vmatprep.subr.mxu0 0.0
  %360 = vmatpush1.msra.mxu0 %v209
  %361 = vmatprep.subr.mxu0 0.0
  %362 = vmatpush1.msra.mxu0 %v210
  %363 = vmatprep.subr.mxu0 0.0
  %364 = vmatpush1.msra.mxu0 %v211
  %365 = vmatprep.subr.mxu0 0.0
  %366 = vmatpush1.msra.mxu0 %v212
  %367 = vmatprep.subr.mxu0 0.0
  %368 = vmatpush1.msra.mxu0 %v213
  %369 = vmatprep.subr.mxu0 0.0
  %370 = vmatpush1.msra.mxu0 %v214
  %371 = vmatprep.subr.mxu0 0.0
  %372 = vmatpush1.msra.mxu0 %v215
  %373 = vmatprep.subr.mxu0 0.0
  %374 = vmatpush1.msra.mxu0 %v216
  %375 = vmatprep.subr.mxu0 0.0
  %376 = vmatpush1.msra.mxu0 %v217
  %377 = vmatprep.subr.mxu0 0.0
  %378 = vmatpush1.msra.mxu0 %v218
  %379 = vmatprep.subr.mxu0 0.0
  %380 = vmatpush1.msra.mxu0 %v219
  %381 = vmatprep.subr.mxu0 0.0
  %382 = vmatpush1.msra.mxu0 %v220
  %383 = vmatprep.subr.mxu0 0.0
  %384 = vmatpush1.msra.mxu0 %v221
  %385 = vmatprep.subr.mxu0 0.0
  %386 = vmatpush1.msra.mxu0 %v222
  %387 = vmatprep.subr.mxu0 0.0
  %388 = vmatpush1.msra.mxu0 %v223
  %389 = vmatprep.subr.mxu0 0.0
  %390 = vmatpush1.msra.mxu0 %v224
  %391 = vmatprep.subr.mxu0 0.0
  %392 = vmatpush1.msra.mxu0 %v225
  %393 = vmatprep.subr.mxu0 0.0
  %394 = vmatpush1.msra.mxu0 %v226
  %395 = vmatprep.subr.mxu0 0.0
  %396 = vmatpush1.msra.mxu0 %v227
  %397 = vmatprep.subr.mxu0 0.0
  %398 = vmatpush1.msra.mxu0 %v228
  %399 = vmatprep.subr.mxu0 0.0
  %400 = vmatpush1.msra.mxu0 %v229
  %401 = vmatprep.subr.mxu0 0.0
  %402 = vmatpush1.msra.mxu0 %v230
  %403 = vmatprep.subr.mxu0 0.0
  %404 = vmatpush1.msra.mxu0 %v231
  %405 = vmatprep.mubr.f32.mxu0 %v147
  %406 = vmatmul.mubr.f32.gmra.mrb[0].mxu0 %v146
  %v407 = vpop.f32.mrb[0].mxu0
  %v408 = vadd.f32 %v338, %v407
  %v409 = vpop.f32.mrb[0].mxu0
  %410 = vdwg.mxu0
  %411 = vmatprep.subr.mxu0 0.0
  %412 = vmatpush1.msra.mxu0 %v232
  %413 = vmatprep.subr.mxu0 0.0
  %414 = vmatpush1.msra.mxu0 %v233
  %415 = vmatprep.subr.mxu0 0.0
  %416 = vmatpush1.msra.mxu0 %v234
  %417 = vmatprep.subr.mxu0 0.0
  %418 = vmatpush1.msra.mxu0 %v235
  %419 = vmatprep.subr.mxu0 0.0
  %420 = vmatpush1.msra.mxu0 %v236
  %421 = vmatprep.subr.mxu0 0.0
  %422 = vmatpush1.msra.mxu0 %v237
  %423 = vmatprep.subr.mxu0 0.0
  %424 = vmatpush1.msra.mxu0 %v238
  %425 = vmatprep.subr.mxu0 0.0
  %426 = vmatpush1.msra.mxu0 %v239
  %427 = vmatprep.subr.mxu0 0.0
  %428 = vmatpush1.msra.mxu0 %v240
  %429 = vmatprep.subr.mxu0 0.0
  %430 = vmatpush1.msra.mxu0 %v241
  %431 = vmatprep.subr.mxu0 0.0
  %432 = vmatpush1.msra.mxu0 %v242
  %433 = vmatprep.subr.mxu0 0.0
  %434 = vmatpush1.msra.mxu0 %v243
  %435 = vmatprep.subr.mxu0 0.0
  %436 = vmatpush1.msra.mxu0 %v244
  %437 = vmatprep.subr.mxu0 0.0
  %438 = vmatpush1.msra.mxu0 %v245
  %439 = vmatprep.subr.mxu0 0.0
  %440 = vmatpush1.msra.mxu0 %v246
  %441 = vmatprep.subr.mxu0 0.0
  %442 = vmatpush1.msra.mxu0 %v247
  %443 = vmatprep.subr.mxu0 0.0
  %444 = vmatpush1.msra.mxu0 %v248
  %445 = vmatprep.subr.mxu0 0.0
  %446 = vmatpush1.msra.mxu0 %v249
  %447 = vmatprep.subr.mxu0 0.0
  %448 = vmatpush1.msra.mxu0 %v250
  %449 = vmatprep.subr.mxu0 0.0
  %450 = vmatpush1.msra.mxu0 %v251
  %451 = vmatprep.subr.mxu0 0.0
  %452 = vmatpush1.msra.mxu0 %v252
  %453 = vmatprep.subr.mxu0 0.0
  %454 = vmatpush1.msra.mxu0 %v253
  %455 = vmatprep.subr.mxu0 0.0
  %456 = vmatpush1.msra.mxu0 %v254
  %457 = vmatprep.subr.mxu0 0.0
  %458 = vmatpush1.msra.mxu0 %v255
  %459 = vmatprep.subr.mxu0 0.0
  %460 = vmatpush1.msra.mxu0 %v256
  %461 = vmatprep.subr.mxu0 0.0
  %462 = vmatpush1.msra.mxu0 %v257
  %463 = vmatprep.subr.mxu0 0.0
  %464 = vmatpush1.msra.mxu0 %v258
  %465 = vmatprep.subr.mxu0 0.0
  %466 = vmatpush1.msra.mxu0 %v259
  %467 = vmatprep.subr.mxu0 0.0
  %468 = vmatpush1.msra.mxu0 %v260
  %469 = vmatprep.subr.mxu0 0.0
  %470 = vmatpush1.msra.mxu0 %v261
  %471 = vmatprep.subr.mxu0 0.0
  %472 = vmatpush1.msra.mxu0 %v262
  %473 = vmatprep.subr.mxu0 0.0
  %474 = vmatpush1.msra.mxu0 %v263
  %475 = vmatprep.mubr.f32.mxu0 %v167
  %476 = vmatmul.mubr.f32.gmra.mrb[0].mxu0 %v166
  %v477 = vpop.f32.mrb[0].mxu0
  %v478 = vadd.f32 %v408, %v477
  %v479 = vpop.f32.mrb[0].mxu0
  %480 = vdwg.mxu0
  %v481 = vmax.f32 %v478, 0.0
  %v482 = vrot.slane %v481, 7
  %v483 = vmul.f32 %v482, %v154
  %v484 = vrot.slane %v481, 1
  %v485 = vmul.f32 %v484, %v164
  %v486 = vld [vmem:[%s15] sm:$0xff]
  %v487 = vld [vmem:[%s15 + $0x8] sm:$0xff]
  %v488 = vld [vmem:[%s15 + $0x10] sm:$0xff]
  %v489 = vld [vmem:[%s15 + $0x18] sm:$0xff]
  %v490 = vld [vmem:[%s15 + $0x20] sm:$0xff]
  %v491 = vld [vmem:[%s15 + $0x28] sm:$0xff]
  %v492 = vld [vmem:[%s15 + $0x30] sm:$0xff]
  %v493 = vld [vmem:[%s15 + $0x38] sm:$0xff]
  %v494 = vld [vmem:[%s15 + $0x40] sm:$0xff]
  %v495 = vld [vmem:[%s15 + $0x48] sm:$0xff]
  %v496 = vld [vmem:[%s15 + $0x50] sm:$0xff]
  %v497 = vld [vmem:[%s15 + $0x58] sm:$0xff]
  %v498 = vld [vmem:[%s15 + $0x60] sm:$0xff]
  %v499 = vld [vmem:[%s15 + $0x68] sm:$0xff]
  %v500 = vld [vmem:[%s15 + $0x70] sm:$0xff]
  %v501 = vld [vmem:[%s15 + $0x78] sm:$0xff]
  %v502 = vld [vmem:[%s15 + $0x80] sm:$0xff]
  %v503 = vld [vmem:[%s15 + $0x88] sm:$0xff]
  %v504 = vld [vmem:[%s15 + $0x90] sm:$0xff]
  %v505 = vld [vmem:[%s15 + $0x98] sm:$0xff]
  %v506 = vld [vmem:[%s15 + $0xa0] sm:$0xff]
  %v507 = vld [vmem:[%s15 + $0xa8] sm:$0xff]
  %v508 = vld [vmem:[%s15 + $0xb0] sm:$0xff]
  %v509 = vld [vmem:[%s15 + $0xb8] sm:$0xff]
  %v510 = vld [vmem:[%s15 + $0xc0] sm:$0xff]
  %v511 = vld [vmem:[%s15 + $0xc8] sm:$0xff]
  %v512 = vld [vmem:[%s15 + $0xd0] sm:$0xff]
  %v513 = vld [vmem:[%s15 + $0xd8] sm:$0xff]
  %v514 = vld [vmem:[%s15 + $0xe0] sm:$0xff]
  %v515 = vld [vmem:[%s15 + $0xe8] sm:$0xff]
  %v516 = vld [vmem:[%s15 + $0xf0] sm:$0xff]
  %v517 = vld [vmem:[%s15 + $0xf8] sm:$0xff]
  %v518 = vld [vmem:[%s15 + $0x100] sm:$0xff]
  %v519 = vld [vmem:[%s15 + $0x108] sm:$0xff]
  %v520 = vld [vmem:[%s15 + $0x110] sm:$0xff]
  %v521 = vld [vmem:[%s15 + $0x118] sm:$0xff]
  %v522 = vld [vmem:[%s15 + $0x120] sm:$0xff]
  %v523 = vld [vmem:[%s15 + $0x128] sm:$0xff]
  %v524 = vld [vmem:[%s15 + $0x130] sm:$0xff]
  %v525 = vld [vmem:[%s15 + $0x138] sm:$0xff]
  %v526 = vld [vmem:[%s15 + $0x140] sm:$0xff]
  %v527 = vld [vmem:[%s15 + $0x148] sm:$0xff]
  %v528 = vld [vmem:[%s15 + $0x150] sm:$0xff]
  %v529 = vld [vmem:[%s15 + $0x158] sm:$0xff]
  %v530 = vld [vmem:[%s15 + $0x160] sm:$0xff]
  %v531 = vld [vmem:[%s15 + $0x168] sm:$0xff]
  %v532 = vld [vmem:[%s15 + $0x170] sm:$0xff]
  %v533 = vld [vmem:[%s15 + $0x178] sm:$0xff]
  %v534 = vld [vmem:[%s17] sm:$0x1]
  %v536 = vlaneseq
  %v537 = vshrl.u32 %v536, 7
  %v538 = vsub.s32 0, %v537
  %v539 = vrot.slane %v534, %v538
  %541 = vmatprep.subr.mxu0 0.0
  %542 = vmatpush1.msra.mxu0 %v486
  %543 = vmatprep.subr.mxu0 0.0
  %544 = vmatpush1.msra.mxu0 %v487
  %545 = vmatprep.subr.mxu0 0.0
  %546 = vmatpush1.msra.mxu0 %v488
  %547 = vmatprep.subr.mxu0 0.0
  %548 = vmatpush1.msra.mxu0 %v489
  %549 = vmatprep.subr.mxu0 0.0
  %550 = vmatpush1.msra.mxu0 %v490
  %551 = vmatprep.subr.mxu0 0.0
  %552 = vmatpush1.msra.mxu0 %v491
  %553 = vmatprep.subr.mxu0 0.0
  %554 = vmatpush1.msra.mxu0 %v492
  %555 = vmatprep.subr.mxu0 0.0
  %556 = vmatpush1.msra.mxu0 %v493
  %557 = vmatprep.subr.mxu0 0.0
  %558 = vmatpush1.msra.mxu0 %v494
  %559 = vmatprep.subr.mxu0 0.0
  %560 = vmatpush1.msra.mxu0 %v495
  %561 = vmatprep.subr.mxu0 0.0
  %562 = vmatpush1.msra.mxu0 %v496
  %563 = vmatprep.subr.mxu0 0.0
  %564 = vmatpush1.msra.mxu0 %v497
  %565 = vmatprep.subr.mxu0 0.0
  %566 = vmatpush1.msra.mxu0 %v498
  %567 = vmatprep.subr.mxu0 0.0
  %568 = vmatpush1.msra.mxu0 %v499
  %569 = vmatprep.subr.mxu0 0.0
  %570 = vmatpush1.msra.mxu0 %v500
  %571 = vmatprep.subr.mxu0 0.0
  %572 = vmatpush1.msra.mxu0 %v501
  %573 = vmatprep.subr.mxu0 0.0
  %574 = vmatpush1.msra.mxu0 %v502
  %575 = vmatprep.subr.mxu0 0.0
  %576 = vmatpush1.msra.mxu0 %v503
  %577 = vmatprep.subr.mxu0 0.0
  %578 = vmatpush1.msra.mxu0 %v504
  %579 = vmatprep.subr.mxu0 0.0
  %580 = vmatpush1.msra.mxu0 %v505
  %581 = vmatprep.subr.mxu0 0.0
  %582 = vmatpush1.msra.mxu0 %v506
  %583 = vmatprep.subr.mxu0 0.0
  %584 = vmatpush1.msra.mxu0 %v507
  %585 = vmatprep.subr.mxu0 0.0
  %586 = vmatpush1.msra.mxu0 %v508
  %587 = vmatprep.subr.mxu0 0.0
  %588 = vmatpush1.msra.mxu0 %v509
  %589 = vmatprep.subr.mxu0 0.0
  %590 = vmatpush1.msra.mxu0 %v510
  %591 = vmatprep.subr.mxu0 0.0
  %592 = vmatpush1.msra.mxu0 %v511
  %593 = vmatprep.subr.mxu0 0.0
  %594 = vmatpush1.msra.mxu0 %v512
  %595 = vmatprep.subr.mxu0 0.0
  %596 = vmatpush1.msra.mxu0 %v513
  %597 = vmatprep.subr.mxu0 0.0
  %598 = vmatpush1.msra.mxu0 %v514
  %599 = vmatprep.subr.mxu0 0.0
  %600 = vmatpush1.msra.mxu0 %v515
  %601 = vmatprep.subr.mxu0 0.0
  %602 = vmatpush1.msra.mxu0 %v516
  %603 = vmatprep.subr.mxu0 0.0
  %604 = vmatpush1.msra.mxu0 %v517
  %605 = vmatprep.mubr.f32.mxu0 %v481
  %606 = vmatmul.mubr.f32.gmra.mrb[0].mxu0 %v483
  %v607 = vpop.f32.mrb[0].mxu0
  %v608 = vadd.f32 %v539, %v607
  %v609 = vpop.f32.mrb[0].mxu0
  %610 = vdwg.mxu0
  %611 = vmatprep.subr.mxu0 0.0
  %612 = vmatpush1.msra.mxu0 %v518
  %613 = vmatprep.subr.mxu0 0.0
  %614 = vmatpush1.msra.mxu0 %v519
  %615 = vmatprep.subr.mxu0 0.0
  %616 = vmatpush1.msra.mxu0 %v520
  %617 = vmatprep.subr.mxu0 0.0
  %618 = vmatpush1.msra.mxu0 %v521
  %619 = vmatprep.subr.mxu0 0.0
  %620 = vmatpush1.msra.mxu0 %v522
  %621 = vmatprep.subr.mxu0 0.0
  %622 = vmatpush1.msra.mxu0 %v523
  %623 = vmatprep.subr.mxu0 0.0
  %624 = vmatpush1.msra.mxu0 %v524
  %625 = vmatprep.subr.mxu0 0.0
  %626 = vmatpush1.msra.mxu0 %v525
  %627 = vmatprep.subr.mxu0 0.0
  %628 = vmatpush1.msra.mxu0 %v526
  %629 = vmatprep.subr.mxu0 0.0
  %630 = vmatpush1.msra.mxu0 %v527
  %631 = vmatprep.subr.mxu0 0.0
  %632 = vmatpush1.msra.mxu0 %v528
  %633 = vmatprep.subr.mxu0 0.0
  %634 = vmatpush1.msra.mxu0 %v529
  %635 = vmatprep.subr.mxu0 0.0
  %636 = vmatpush1.msra.mxu0 %v530
  %637 = vmatprep.subr.mxu0 0.0
  %638 = vmatpush1.msra.mxu0 %v531
  %639 = vmatprep.subr.mxu0 0.0
  %640 = vmatpush1.msra.mxu0 %v532
  %641 = vmatprep.subr.mxu0 0.0
  %642 = vmatpush1.msra.mxu0 %v533
  %643 = vmatprep.subr.mxu0 0.0
  %644 = vmatpush1.msra.mxu0 0.0
  %645 = vmatprep.subr.mxu0 0.0
  %646 = vmatpush1.msra.mxu0 0.0
  %647 = vmatprep.subr.mxu0 0.0
  %648 = vmatpush1.msra.mxu0 0.0
  %649 = vmatprep.subr.mxu0 0.0
  %650 = vmatpush1.msra.mxu0 0.0
  %651 = vmatprep.subr.mxu0 0.0
  %652 = vmatpush1.msra.mxu0 0.0
  %653 = vmatprep.subr.mxu0 0.0
  %654 = vmatpush1.msra.mxu0 0.0
  %655 = vmatprep.subr.mxu0 0.0
  %656 = vmatpush1.msra.mxu0 0.0
  %657 = vmatprep.subr.mxu0 0.0
  %658 = vmatpush1.msra.mxu0 0.0
  %659 = vmatprep.subr.mxu0 0.0
  %660 = vmatpush1.msra.mxu0 0.0
  %661 = vmatprep.subr.mxu0 0.0
  %662 = vmatpush1.msra.mxu0 0.0
  %663 = vmatprep.subr.mxu0 0.0
  %664 = vmatpush1.msra.mxu0 0.0
  %665 = vmatprep.subr.mxu0 0.0
  %666 = vmatpush1.msra.mxu0 0.0
  %667 = vmatprep.subr.mxu0 0.0
  %668 = vmatpush1.msra.mxu0 0.0
  %669 = vmatprep.subr.mxu0 0.0
  %670 = vmatpush1.msra.mxu0 0.0
  %671 = vmatprep.subr.mxu0 0.0
  %672 = vmatpush1.msra.mxu0 0.0
  %673 = vmatprep.subr.mxu0 0.0
  %674 = vmatpush1.msra.mxu0 0.0
  %675 = vmatprep.mubr.f32.mxu0 0.0
  %676 = vmatmul.mubr.f32.gmra.mrb[0].mxu0 %v485
  %v677 = vpop.f32.mrb[0].mxu0
  %v678 = vadd.f32 %v608, %v677
  %v679 = vpop.f32.mrb[0].mxu0
  %680 = vdwg.mxu0
  %v681 = vmax.f32 %v678, 0.0
  %v682 = vld [vmem:[%s69] sm:$0xff]
  %v683 = vld [vmem:[%s69 + $0x8] sm:$0xff]
  %vm684 = vcmask 64512
  %v686 = vsel %vm684, %v682, 0
  %v689 = vsel %vm684, %v683, 0
  %691 = vmatprep.subr.mxu0 0.0
  %692 = vmatpush1.msra.mxu0 %v681
  %693 = vmatprep.subr.mxu0 0.0
  %694 = vmatpush1.msra.mxu0 0.0
  %695 = vmatprep.subr.mxu0 0.0
  %696 = vmatpush1.msra.mxu0 0.0
  %697 = vmatprep.subr.mxu0 0.0
  %698 = vmatpush1.msra.mxu0 0.0
  %699 = vmatprep.subr.mxu0 0.0
  %700 = vmatpush1.msra.mxu0 0.0
  %701 = vmatprep.subr.mxu0 0.0
  %702 = vmatpush1.msra.mxu0 0.0
  %703 = vmatprep.subr.mxu0 0.0
  %704 = vmatpush1.msra.mxu0 0.0
  %705 = vmatprep.subr.mxu0 0.0
  %706 = vmatpush1.msra.mxu0 0.0
  %707 = vmatprep.subr.mxu0 0.0
  %708 = vmatpush1.msra.mxu0 0.0
  %709 = vmatprep.subr.mxu0 0.0
  %710 = vmatpush1.msra.mxu0 0.0
  %711 = vmatprep.subr.mxu0 0.0
  %712 = vmatpush1.msra.mxu0 0.0
  %713 = vmatprep.subr.mxu0 0.0
  %714 = vmatpush1.msra.mxu0 0.0
  %715 = vmatprep.subr.mxu0 0.0
  %716 = vmatpush1.msra.mxu0 0.0
  %717 = vmatprep.subr.mxu0 0.0
  %718 = vmatpush1.msra.mxu0 0.0
  %719 = vmatprep.subr.mxu0 0.0
  %720 = vmatpush1.msra.mxu0 0.0
  %721 = vmatprep.subr.mxu0 0.0
  %722 = vmatpush1.msra.mxu0 0.0
  %723 = vmatprep.subr.mxu0 0.0
  %724 = vmatpush1.msra.mxu0 0.0
  %725 = vmatprep.subr.mxu0 0.0
  %726 = vmatpush1.msra.mxu0 0.0
  %727 = vmatprep.subr.mxu0 0.0
  %728 = vmatpush1.msra.mxu0 0.0
  %729 = vmatprep.subr.mxu0 0.0
  %730 = vmatpush1.msra.mxu0 0.0
  %731 = vmatprep.subr.mxu0 0.0
  %732 = vmatpush1.msra.mxu0 0.0
  %733 = vmatprep.subr.mxu0 0.0
  %734 = vmatpush1.msra.mxu0 0.0
  %735 = vmatprep.subr.mxu0 0.0
  %736 = vmatpush1.msra.mxu0 0.0
  %737 = vmatprep.subr.mxu0 0.0
  %738 = vmatpush1.msra.mxu0 0.0
  %739 = vmatprep.subr.mxu0 0.0
  %740 = vmatpush1.msra.mxu0 0.0
  %741 = vmatprep.subr.mxu0 0.0
  %742 = vmatpush1.msra.mxu0 0.0
  %743 = vmatprep.subr.mxu0 0.0
  %744 = vmatpush1.msra.mxu0 0.0
  %745 = vmatprep.subr.mxu0 0.0
  %746 = vmatpush1.msra.mxu0 0.0
  %747 = vmatprep.subr.mxu0 0.0
  %748 = vmatpush1.msra.mxu0 0.0
  %749 = vmatprep.subr.mxu0 0.0
  %750 = vmatpush1.msra.mxu0 0.0
  %751 = vmatprep.subr.mxu0 0.0
  %752 = vmatpush1.msra.mxu0 0.0
  %753 = vmatprep.subr.mxu0 0.0
  %754 = vmatpush1.msra.mxu0 0.0
  %755 = vmatprep.mubr.f32.mxu0 0.0
  %756 = vmatmul.mubr.f32.gmra.mrb[0].mxu0 %v686
  %v757 = vpop.f32.mrb[0].mxu0
  %v758 = vadd.f32 0.0, %v757
  %v759 = vpop.f32.mrb[0].mxu0
  %760 = vmatprep.mubr.f32.mxu0 0.0
  %761 = vmatmul.mubr.f32.gmra.mrb[0].mxu0 %v689
  %v762 = vpop.f32.mrb[0].mxu0
  %v763 = vadd.f32 0.0, %v762
  %v764 = vpop.f32.mrb[0].mxu0
  %765 = vdwg.mxu0
  %v766 = vrot.slane %v758, 7
  %v767 = vrot.slane %v763, 7
  %v768 = vlaneseq
  %v769 = vshrl.u32 %v768, 7
  %vm770 = vcmp.lt.s32.totalorder %v769, 1
  %v771 = vsel %vm770, %v766, %v767
  %v772 = vsel %vm770, %v767, %v766
  %v773 = vld [vmem:[%s65] sm:$0xff]
  %v774 = vld [vmem:[%s65 + $0x8] sm:$0xff]
  %776 = vset.pattern.permute.xlu0 0
  %777 = vperm.xlu0 %776, %v773
  %v778 = vpop.permute.xlu0 %777
  %781 = vset.pattern.permute.xlu0 0
  %782 = vperm.xlu0 %781, %v774
  %v783 = vpop.permute.xlu0 %782
  %v785 = vmul.f32 %v772, %v778
  %v786 = vmul.f32 %v771, %v783
  %v787 = vrot.slane %v758, 1
  %v788 = vrot.slane %v763, 1
  %vm789 = vcmp.lt.s32.totalorder %v769, 7
  %v790 = vsel %vm789, %v787, %v788
  %v791 = vsel %vm789, %v788, %v787
  %v792 = vld [vmem:[%s59] sm:$0xff]
  %v793 = vld [vmem:[%s59 + $0x8] sm:$0xff]
  %795 = vset.pattern.permute.xlu0 0
  %796 = vperm.xlu0 %795, %v792
  %v797 = vpop.permute.xlu0 %796
  %800 = vset.pattern.permute.xlu0 0
  %801 = vperm.xlu0 %800, %v793
  %v802 = vpop.permute.xlu0 %801
  %v804 = vmul.f32 %v790, %v797
  %v805 = vmul.f32 %v791, %v802
  %808 = vrot.lane.b32.xlu0 %v758, 64
  %v809 = vpop.permute.xlu0 %808
  %810 = vrot.lane.b32.xlu0 %v763, 64
  %v811 = vpop.permute.xlu0 %810
  %vm814 = vcmask 523264
  %v815 = vsel %vm814, %v785, %v809
  %v816 = vsel %vm814, %v786, %v811
  %v817 = vld [vmem:[%s47] sm:$0xff]
  %v818 = vld [vmem:[%s47 + $0x8] sm:$0xff]
  %v819 = vld [vmem:[%s47 + $0x10] sm:$0xff]
  %v820 = vld [vmem:[%s47 + $0x18] sm:$0xff]
  %v821 = vld [vmem:[%s47 + $0x20] sm:$0xff]
  %v822 = vld [vmem:[%s47 + $0x28] sm:$0xff]
  %v823 = vld [vmem:[%s47 + $0x30] sm:$0xff]
  %v824 = vld [vmem:[%s47 + $0x38] sm:$0xff]
  %v825 = vld [vmem:[%s47 + $0x40] sm:$0xff]
  %v826 = vld [vmem:[%s47 + $0x48] sm:$0xff]
  %v827 = vld [vmem:[%s47 + $0x50] sm:$0xff]
  %v828 = vld [vmem:[%s47 + $0x58] sm:$0xff]
  %v829 = vld [vmem:[%s47 + $0x60] sm:$0xff]
  %v830 = vld [vmem:[%s47 + $0x68] sm:$0xff]
  %v831 = vld [vmem:[%s47 + $0x70] sm:$0xff]
  %v832 = vld [vmem:[%s47 + $0x78] sm:$0xff]
  %v833 = vld [vmem:[%s47 + $0x80] sm:$0xff]
  %v834 = vld [vmem:[%s47 + $0x88] sm:$0xff]
  %v835 = vld [vmem:[%s47 + $0x90] sm:$0xff]
  %v836 = vld [vmem:[%s47 + $0x98] sm:$0xff]
  %v837 = vld [vmem:[%s47 + $0xa0] sm:$0xff]
  %v838 = vld [vmem:[%s47 + $0xa8] sm:$0xff]
  %v839 = vld [vmem:[%s47 + $0xb0] sm:$0xff]
  %v840 = vld [vmem:[%s47 + $0xb8] sm:$0xff]
  %v841 = vld [vmem:[%s49] sm:$0x1]
  %v843 = vlaneseq
  %v844 = vshrl.u32 %v843, 7
  %v845 = vsub.s32 0, %v844
  %v846 = vrot.slane %v841, %v845
  %v849 = vsel %vm814, %v804, 0
  %v852 = vsel %vm814, %v805, 0
  %854 = vmatprep.subr.mxu0 0.0
  %855 = vmatpush1.msra.mxu0 %v817
  %856 = vmatprep.subr.mxu0 0.0
  %857 = vmatpush1.msra.mxu0 %v818
  %858 = vmatprep.subr.mxu0 0.0
  %859 = vmatpush1.msra.mxu0 %v819
  %860 = vmatprep.subr.mxu0 0.0
  %861 = vmatpush1.msra.mxu0 %v820
  %862 = vmatprep.subr.mxu0 0.0
  %863 = vmatpush1.msra.mxu0 %v821
  %864 = vmatprep.subr.mxu0 0.0
  %865 = vmatpush1.msra.mxu0 %v822
  %866 = vmatprep.subr.mxu0 0.0
  %867 = vmatpush1.msra.mxu0 %v823
  %868 = vmatprep.subr.mxu0 0.0
  %869 = vmatpush1.msra.mxu0 %v824
  %870 = vmatprep.subr.mxu0 0.0
  %871 = vmatpush1.msra.mxu0 %v825
  %872 = vmatprep.subr.mxu0 0.0
  %873 = vmatpush1.msra.mxu0 %v826
  %874 = vmatprep.subr.mxu0 0.0
  %875 = vmatpush1.msra.mxu0 %v827
  %876 = vmatprep.subr.mxu0 0.0
  %877 = vmatpush1.msra.mxu0 %v828
  %878 = vmatprep.subr.mxu0 0.0
  %879 = vmatpush1.msra.mxu0 %v829
  %880 = vmatprep.subr.mxu0 0.0
  %881 = vmatpush1.msra.mxu0 %v830
  %882 = vmatprep.subr.mxu0 0.0
  %883 = vmatpush1.msra.mxu0 %v831
  %884 = vmatprep.subr.mxu0 0.0
  %885 = vmatpush1.msra.mxu0 %v832
  %886 = vmatprep.subr.mxu0 0.0
  %887 = vmatpush1.msra.mxu0 %v833
  %888 = vmatprep.subr.mxu0 0.0
  %889 = vmatpush1.msra.mxu0 %v834
  %890 = vmatprep.subr.mxu0 0.0
  %891 = vmatpush1.msra.mxu0 %v835
  %892 = vmatprep.subr.mxu0 0.0
  %893 = vmatpush1.msra.mxu0 %v836
  %894 = vmatprep.subr.mxu0 0.0
  %895 = vmatpush1.msra.mxu0 %v837
  %896 = vmatprep.subr.mxu0 0.0
  %897 = vmatpush1.msra.mxu0 %v838
  %898 = vmatprep.subr.mxu0 0.0
  %899 = vmatpush1.msra.mxu0 %v839
  %900 = vmatprep.subr.mxu0 0.0
  %901 = vmatpush1.msra.mxu0 %v840
  %902 = vmatprep.subr.mxu0 0.0
  %903 = vmatpush1.msra.mxu0 0.0
  %904 = vmatprep.subr.mxu0 0.0
  %905 = vmatpush1.msra.mxu0 0.0
  %906 = vmatprep.subr.mxu0 0.0
  %907 = vmatpush1.msra.mxu0 0.0
  %908 = vmatprep.subr.mxu0 0.0
  %909 = vmatpush1.msra.mxu0 0.0
  %910 = vmatprep.subr.mxu0 0.0
  %911 = vmatpush1.msra.mxu0 0.0
  %912 = vmatprep.subr.mxu0 0.0
  %913 = vmatpush1.msra.mxu0 0.0
  %914 = vmatprep.subr.mxu0 0.0
  %915 = vmatpush1.msra.mxu0 0.0
  %916 = vmatprep.subr.mxu0 0.0
  %917 = vmatpush1.msra.mxu0 0.0
  %918 = vmatprep.mubr.f32.mxu0 %v849
  %919 = vmatmul.mubr.f32.gmra.mrb[0].mxu0 %v815
  %v920 = vpop.f32.mrb[0].mxu0
  %v921 = vadd.f32 %v846, %v920
  %v922 = vpop.f32.mrb[0].mxu0
  %923 = vmatprep.mubr.f32.mxu0 %v852
  %924 = vmatmul.mubr.f32.gmra.mrb[0].mxu0 %v816
  %v925 = vpop.f32.mrb[0].mxu0
  %v926 = vadd.f32 %v846, %v925
  %v927 = vpop.f32.mrb[0].mxu0
  %928 = vdwg.mxu0
  %v929 = vmax.f32 %v921, 0.0
  %v930 = vmax.f32 %v926, 0.0
  %v931 = vrot.slane %v929, 7
  %v932 = vrot.slane %v930, 7
  %v933 = vsel %vm770, %v931, %v932
  %v934 = vsel %vm770, %v932, %v931
  %v935 = vmul.f32 %v934, %v778
  %v936 = vmul.f32 %v933, %v783
  %v937 = vrot.slane %v929, 1
  %v938 = vrot.slane %v930, 1
  %v939 = vsel %vm789, %v937, %v938
  %v940 = vsel %vm789, %v938, %v937
  %v941 = vmul.f32 %v939, %v797
  %v942 = vmul.f32 %v940, %v802
  %v943 = vld [vmem:[%s51] sm:$0xff]
  %v944 = vld [vmem:[%s51 + $0x8] sm:$0xff]
  %v945 = vld [vmem:[%s51 + $0x10] sm:$0xff]
  %v946 = vld [vmem:[%s51 + $0x18] sm:$0xff]
  %v947 = vld [vmem:[%s51 + $0x20] sm:$0xff]
  %v948 = vld [vmem:[%s51 + $0x28] sm:$0xff]
  %v949 = vld [vmem:[%s51 + $0x30] sm:$0xff]
  %v950 = vld [vmem:[%s51 + $0x38] sm:$0xff]
  %v951 = vld [vmem:[%s51 + $0x40] sm:$0xff]
  %v952 = vld [vmem:[%s51 + $0x48] sm:$0xff]
  %v953 = vld [vmem:[%s51 + $0x50] sm:$0xff]
  %v954 = vld [vmem:[%s51 + $0x58] sm:$0xff]
  %v955 = vld [vmem:[%s51 + $0x60] sm:$0xff]
  %v956 = vld [vmem:[%s51 + $0x68] sm:$0xff]
  %v957 = vld [vmem:[%s51 + $0x70] sm:$0xff]
  %v958 = vld [vmem:[%s51 + $0x78] sm:$0xff]
  %v959 = vld [vmem:[%s51 + $0x80] sm:$0xff]
  %v960 = vld [vmem:[%s51 + $0x88] sm:$0xff]
  %v961 = vld [vmem:[%s51 + $0x90] sm:$0xff]
  %v962 = vld [vmem:[%s51 + $0x98] sm:$0xff]
  %v963 = vld [vmem:[%s51 + $0xa0] sm:$0xff]
  %v964 = vld [vmem:[%s51 + $0xa8] sm:$0xff]
  %v965 = vld [vmem:[%s51 + $0xb0] sm:$0xff]
  %v966 = vld [vmem:[%s51 + $0xb8] sm:$0xff]
  %v967 = vld [vmem:[%s51 + $0xc0] sm:$0xff]
  %v968 = vld [vmem:[%s51 + $0xc8] sm:$0xff]
  %v969 = vld [vmem:[%s51 + $0xd0] sm:$0xff]
  %v970 = vld [vmem:[%s51 + $0xd8] sm:$0xff]
  %v971 = vld [vmem:[%s51 + $0xe0] sm:$0xff]
  %v972 = vld [vmem:[%s51 + $0xe8] sm:$0xff]
  %v973 = vld [vmem:[%s51 + $0xf0] sm:$0xff]
  %v974 = vld [vmem:[%s51 + $0xf8] sm:$0xff]
  %v975 = vld [vmem:[%s51 + $0x100] sm:$0xff]
  %v976 = vld [vmem:[%s51 + $0x108] sm:$0xff]
  %v977 = vld [vmem:[%s51 + $0x110] sm:$0xff]
  %v978 = vld [vmem:[%s51 + $0x118] sm:$0xff]
  %v979 = vld [vmem:[%s51 + $0x120] sm:$0xff]
  %v980 = vld [vmem:[%s51 + $0x128] sm:$0xff]
  %v981 = vld [vmem:[%s51 + $0x130] sm:$0xff]
  %v982 = vld [vmem:[%s51 + $0x138] sm:$0xff]
  %v983 = vld [vmem:[%s51 + $0x140] sm:$0xff]
  %v984 = vld [vmem:[%s51 + $0x148] sm:$0xff]
  %v985 = vld [vmem:[%s51 + $0x150] sm:$0xff]
  %v986 = vld [vmem:[%s51 + $0x158] sm:$0xff]
  %v987 = vld [vmem:[%s51 + $0x160] sm:$0xff]
  %v988 = vld [vmem:[%s51 + $0x168] sm:$0xff]
  %v989 = vld [vmem:[%s51 + $0x170] sm:$0xff]
  %v990 = vld [vmem:[%s51 + $0x178] sm:$0xff]
  %v991 = vld [vmem:[%s53] sm:$0x1]
  %v993 = vlaneseq
  %v994 = vshrl.u32 %v993, 7
  %v995 = vsub.s32 0, %v994
  %v996 = vrot.slane %v991, %v995
  %998 = vmatprep.subr.mxu0 0.0
  %999 = vmatpush1.msra.mxu0 %v943
  %1000 = vmatprep.subr.mxu0 0.0
  %1001 = vmatpush1.msra.mxu0 %v944
  %1002 = vmatprep.subr.mxu0 0.0
  %1003 = vmatpush1.msra.mxu0 %v945
  %1004 = vmatprep.subr.mxu0 0.0
  %1005 = vmatpush1.msra.mxu0 %v946
  %1006 = vmatprep.subr.mxu0 0.0
  %1007 = vmatpush1.msra.mxu0 %v947
  %1008 = vmatprep.subr.mxu0 0.0
  %1009 = vmatpush1.msra.mxu0 %v948
  %1010 = vmatprep.subr.mxu0 0.0
  %1011 = vmatpush1.msra.mxu0 %v949
  %1012 = vmatprep.subr.mxu0 0.0
  %1013 = vmatpush1.msra.mxu0 %v950
  %1014 = vmatprep.subr.mxu0 0.0
  %1015 = vmatpush1.msra.mxu0 %v951
  %1016 = vmatprep.subr.mxu0 0.0
  %1017 = vmatpush1.msra.mxu0 %v952
  %1018 = vmatprep.subr.mxu0 0.0
  %1019 = vmatpush1.msra.mxu0 %v953
  %1020 = vmatprep.subr.mxu0 0.0
  %1021 = vmatpush1.msra.mxu0 %v954
  %1022 = vmatprep.subr.mxu0 0.0
  %1023 = vmatpush1.msra.mxu0 %v955
  %1024 = vmatprep.subr.mxu0 0.0
  %1025 = vmatpush1.msra.mxu0 %v956
  %1026 = vmatprep.subr.mxu0 0.0
  %1027 = vmatpush1.msra.mxu0 %v957
  %1028 = vmatprep.subr.mxu0 0.0
  %1029 = vmatpush1.msra.mxu0 %v958
  %1030 = vmatprep.subr.mxu0 0.0
  %1031 = vmatpush1.msra.mxu0 %v959
  %1032 = vmatprep.subr.mxu0 0.0
  %1033 = vmatpush1.msra.mxu0 %v960
  %1034 = vmatprep.subr.mxu0 0.0
  %1035 = vmatpush1.msra.mxu0 %v961
  %1036 = vmatprep.subr.mxu0 0.0
  %1037 = vmatpush1.msra.mxu0 %v962
  %1038 = vmatprep.subr.mxu0 0.0
  %1039 = vmatpush1.msra.mxu0 %v963
  %1040 = vmatprep.subr.mxu0 0.0
  %1041 = vmatpush1.msra.mxu0 %v964
  %1042 = vmatprep.subr.mxu0 0.0
  %1043 = vmatpush1.msra.mxu0 %v965
  %1044 = vmatprep.subr.mxu0 0.0
  %1045 = vmatpush1.msra.mxu0 %v966
  %1046 = vmatprep.subr.mxu0 0.0
  %1047 = vmatpush1.msra.mxu0 %v967
  %1048 = vmatprep.subr.mxu0 0.0
  %1049 = vmatpush1.msra.mxu0 %v968
  %1050 = vmatprep.subr.mxu0 0.0
  %1051 = vmatpush1.msra.mxu0 %v969
  %1052 = vmatprep.subr.mxu0 0.0
  %1053 = vmatpush1.msra.mxu0 %v970
  %1054 = vmatprep.subr.mxu0 0.0
  %1055 = vmatpush1.msra.mxu0 %v971
  %1056 = vmatprep.subr.mxu0 0.0
  %1057 = vmatpush1.msra.mxu0 %v972
  %1058 = vmatprep.subr.mxu0 0.0
  %1059 = vmatpush1.msra.mxu0 %v973
  %1060 = vmatprep.subr.mxu0 0.0
  %1061 = vmatpush1.msra.mxu0 %v974
  %1062 = vmatprep.mubr.f32.mxu0 %v929
  %1063 = vmatmul.mubr.f32.gmra.mrb[0].mxu0 %v935
  %v1064 = vpop.f32.mrb[0].mxu0
  %v1065 = vadd.f32 %v996, %v1064
  %v1066 = vpop.f32.mrb[0].mxu0
  %1067 = vmatprep.mubr.f32.mxu0 %v930
  %1068 = vmatmul.mubr.f32.gmra.mrb[0].mxu0 %v936
  %v1069 = vpop.f32.mrb[0].mxu0
  %v1070 = vadd.f32 %v996, %v1069
  %v1071 = vpop.f32.mrb[0].mxu0
  %1072 = vdwg.mxu0
  %1073 = vmatprep.subr.mxu0 0.0
  %1074 = vmatpush1.msra.mxu0 %v975
  %1075 = vmatprep.subr.mxu0 0.0
  %1076 = vmatpush1.msra.mxu0 %v976
  %1077 = vmatprep.subr.mxu0 0.0
  %1078 = vmatpush1.msra.mxu0 %v977
  %1079 = vmatprep.subr.mxu0 0.0
  %1080 = vmatpush1.msra.mxu0 %v978
  %1081 = vmatprep.subr.mxu0 0.0
  %1082 = vmatpush1.msra.mxu0 %v979
  %1083 = vmatprep.subr.mxu0 0.0
  %1084 = vmatpush1.msra.mxu0 %v980
  %1085 = vmatprep.subr.mxu0 0.0
  %1086 = vmatpush1.msra.mxu0 %v981
  %1087 = vmatprep.subr.mxu0 0.0
  %1088 = vmatpush1.msra.mxu0 %v982
  %1089 = vmatprep.subr.mxu0 0.0
  %1090 = vmatpush1.msra.mxu0 %v983
  %1091 = vmatprep.subr.mxu0 0.0
  %1092 = vmatpush1.msra.mxu0 %v984
  %1093 = vmatprep.subr.mxu0 0.0
  %1094 = vmatpush1.msra.mxu0 %v985
  %1095 = vmatprep.subr.mxu0 0.0
  %1096 = vmatpush1.msra.mxu0 %v986
  %1097 = vmatprep.subr.mxu0 0.0
  %1098 = vmatpush1.msra.mxu0 %v987
  %1099 = vmatprep.subr.mxu0 0.0
  %1100 = vmatpush1.msra.mxu0 %v988
  %1101 = vmatprep.subr.mxu0 0.0
  %1102 = vmatpush1.msra.mxu0 %v989
  %1103 = vmatprep.subr.mxu0 0.0
  %1104 = vmatpush1.msra.mxu0 %v990
  %1105 = vmatprep.subr.mxu0 0.0
  %1106 = vmatpush1.msra.mxu0 0.0
  %1107 = vmatprep.subr.mxu0 0.0
  %1108 = vmatpush1.msra.mxu0 0.0
  %1109 = vmatprep.subr.mxu0 0.0
  %1110 = vmatpush1.msra.mxu0 0.0
  %1111 = vmatprep.subr.mxu0 0.0
  %1112 = vmatpush1.msra.mxu0 0.0
  %1113 = vmatprep.subr.mxu0 0.0
  %1114 = vmatpush1.msra.mxu0 0.0
  %1115 = vmatprep.subr.mxu0 0.0
  %1116 = vmatpush1.msra.mxu0 0.0
  %1117 = vmatprep.subr.mxu0 0.0
  %1118 = vmatpush1.msra.mxu0 0.0
  %1119 = vmatprep.subr.mxu0 0.0
  %1120 = vmatpush1.msra.mxu0 0.0
  %1121 = vmatprep.subr.mxu0 0.0
  %1122 = vmatpush1.msra.mxu0 0.0
  %1123 = vmatprep.subr.mxu0 0.0
  %1124 = vmatpush1.msra.mxu0 0.0
  %1125 = vmatprep.subr.mxu0 0.0
  %1126 = vmatpush1.msra.mxu0 0.0
  %1127 = vmatprep.subr.mxu0 0.0
  %1128 = vmatpush1.msra.mxu0 0.0
  %1129 = vmatprep.subr.mxu0 0.0
  %1130 = vmatpush1.msra.mxu0 0.0
  %1131 = vmatprep.subr.mxu0 0.0
  %1132 = vmatpush1.msra.mxu0 0.0
  %1133 = vmatprep.subr.mxu0 0.0
  %1134 = vmatpush1.msra.mxu0 0.0
  %1135 = vmatprep.subr.mxu0 0.0
  %1136 = vmatpush1.msra.mxu0 0.0
  %1137 = vmatprep.mubr.f32.mxu0 0.0
  %1138 = vmatmul.mubr.f32.gmra.mrb[0].mxu0 %v941
  %v1139 = vpop.f32.mrb[0].mxu0
  %v1140 = vadd.f32 %v1065, %v1139
  %v1141 = vpop.f32.mrb[0].mxu0
  %1142 = vmatprep.mubr.f32.mxu0 0.0
  %1143 = vmatmul.mubr.f32.gmra.mrb[0].mxu0 %v942
  %v1144 = vpop.f32.mrb[0].mxu0
  %v1145 = vadd.f32 %v1070, %v1144
  %v1146 = vpop.f32.mrb[0].mxu0
  %1147 = vdwg.mxu0
  %v1148 = vmax.f32 %v1140, 0.0
  %v1149 = vmax.f32 %v1145, 0.0
  %v1150 = vld [vmem:[%s45] sm:$0xff]
  %v1151 = vld [vmem:[%s45 + $0x8] sm:$0xff]
  %v1152 = vld [vmem:[%s45 + $0x10] sm:$0xff]
  %v1153 = vld [vmem:[%s45 + $0x18] sm:$0xff]
  %v1154 = vld [vmem:[%s45 + $0x20] sm:$0xff]
  %v1155 = vld [vmem:[%s45 + $0x28] sm:$0xff]
  %v1156 = vld [vmem:[%s45 + $0x30] sm:$0xff]
  %v1157 = vld [vmem:[%s45 + $0x38] sm:$0xff]
  %v1158 = vld [vmem:[%s45 + $0x40] sm:$0xff]
  %v1159 = vld [vmem:[%s45 + $0x48] sm:$0xff]
  %v1160 = vld [vmem:[%s45 + $0x50] sm:$0xff]
  %v1161 = vld [vmem:[%s45 + $0x58] sm:$0xff]
  %v1162 = vld [vmem:[%s45 + $0x60] sm:$0xff]
  %v1163 = vld [vmem:[%s45 + $0x68] sm:$0xff]
  %v1164 = vld [vmem:[%s45 + $0x70] sm:$0xff]
  %v1165 = vld [vmem:[%s45 + $0x78] sm:$0xff]
  %vm1166 = vcmask 261120
  %v1168 = vsel %vm1166, %v1148, 0
  %v1171 = vsel %vm1166, %v1149, 0
  %1173 = vmatprep.subr.mxu0 %v1151
  %1174 = vmatpush1.msra.mxu0 %v1150
  %1175 = vmatprep.subr.mxu0 %v1155
  %1176 = vmatpush1.msra.mxu0 %v1154
  %1177 = vmatprep.subr.mxu0 %v1159
  %1178 = vmatpush1.msra.mxu0 %v1158
  %1179 = vmatprep.subr.mxu0 %v1163
  %1180 = vmatpush1.msra.mxu0 %v1162
  %1181 = vmatprep.subr.mxu0 0.0
  %1182 = vmatpush1.msra.mxu0 0.0
  %1183 = vmatprep.subr.mxu0 0.0
  %1184 = vmatpush1.msra.mxu0 0.0
  %1185 = vmatprep.subr.mxu0 0.0
  %1186 = vmatpush1.msra.mxu0 0.0
  %1187 = vmatprep.subr.mxu0 0.0
  %1188 = vmatpush1.msra.mxu0 0.0
  %1189 = vmatprep.subr.mxu0 0.0
  %1190 = vmatpush1.msra.mxu0 0.0
  %1191 = vmatprep.subr.mxu0 0.0
  %1192 = vmatpush1.msra.mxu0 0.0
  %1193 = vmatprep.subr.mxu0 0.0
  %1194 = vmatpush1.msra.mxu0 0.0
  %1195 = vmatprep.subr.mxu0 0.0
  %1196 = vmatpush1.msra.mxu0 0.0
  %1197 = vmatprep.subr.mxu0 0.0
  %1198 = vmatpush1.msra.mxu0 0.0
  %1199 = vmatprep.subr.mxu0 0.0
  %1200 = vmatpush1.msra.mxu0 0.0
  %1201 = vmatprep.subr.mxu0 0.0
  %1202 = vmatpush1.msra.mxu0 0.0
  %1203 = vmatprep.subr.mxu0 0.0
  %1204 = vmatpush1.msra.mxu0 0.0
  %1205 = vmatprep.subr.mxu0 0.0
  %1206 = vmatpush1.msra.mxu0 0.0
  %1207 = vmatprep.subr.mxu0 0.0
  %1208 = vmatpush1.msra.mxu0 0.0
  %1209 = vmatprep.subr.mxu0 0.0
  %1210 = vmatpush1.msra.mxu0 0.0
  %1211 = vmatprep.subr.mxu0 0.0
  %1212 = vmatpush1.msra.mxu0 0.0
  %1213 = vmatprep.subr.mxu0 0.0
  %1214 = vmatpush1.msra.mxu0 0.0
  %1215 = vmatprep.subr.mxu0 0.0
  %1216 = vmatpush1.msra.mxu0 0.0
  %1217 = vmatprep.subr.mxu0 0.0
  %1218 = vmatpush1.msra.mxu0 0.0
  %1219 = vmatprep.subr.mxu0 0.0
  %1220 = vmatpush1.msra.mxu0 0.0
  %1221 = vmatprep.subr.mxu0 0.0
  %1222 = vmatpush1.msra.mxu0 0.0
  %1223 = vmatprep.subr.mxu0 0.0
  %1224 = vmatpush1.msra.mxu0 0.0
  %1225 = vmatprep.subr.mxu0 0.0
  %1226 = vmatpush1.msra.mxu0 0.0
  %1227 = vmatprep.subr.mxu0 0.0
  %1228 = vmatpush1.msra.mxu0 0.0
  %1229 = vmatprep.subr.mxu0 0.0
  %1230 = vmatpush1.msra.mxu0 0.0
  %1231 = vmatprep.subr.mxu0 0.0
  %1232 = vmatpush1.msra.mxu0 0.0
  %1233 = vmatprep.subr.mxu0 0.0
  %1234 = vmatpush1.msra.mxu0 0.0
  %1235 = vmatprep.subr.mxu0 0.0
  %1236 = vmatpush1.msra.mxu0 0.0
  %1237 = vmatprep.mubr.f32.mxu0 0.0
  %1238 = vmatmul.mubr.f32.gmra.mrb[0].mxu0 %v1168
  %v1239 = vpop.f32.mrb[0].mxu0
  %v1240 = vadd.f32 0.0, %v1239
  %v1241 = vpop.f32.mrb[0].mxu0
  %v1242 = vadd.f32 0.0, %v1241
  %1243 = vmatprep.mubr.f32.mxu0 0.0
  %1244 = vmatmul.mubr.f32.gmra.mrb[0].mxu0 %v1171
  %v1245 = vpop.f32.mrb[0].mxu0
  %v1246 = vadd.f32 0.0, %v1245
  %v1247 = vpop.f32.mrb[0].mxu0
  %v1248 = vadd.f32 0.0, %v1247
  %1249 = vdwg.mxu0
  %1250 = vmatprep.subr.mxu0 %v1153
  %1251 = vmatpush1.msra.mxu0 %v1152
  %1252 = vmatprep.subr.mxu0 %v1157
  %1253 = vmatpush1.msra.mxu0 %v1156
  %1254 = vmatprep.subr.mxu0 %v1161
  %1255 = vmatpush1.msra.mxu0 %v1160
  %1256 = vmatprep.subr.mxu0 %v1165
  %1257 = vmatpush1.msra.mxu0 %v1164
  %1258 = vmatprep.subr.mxu0 0.0
  %1259 = vmatpush1.msra.mxu0 0.0
  %1260 = vmatprep.subr.mxu0 0.0
  %1261 = vmatpush1.msra.mxu0 0.0
  %1262 = vmatprep.subr.mxu0 0.0
  %1263 = vmatpush1.msra.mxu0 0.0
  %1264 = vmatprep.subr.mxu0 0.0
  %1265 = vmatpush1.msra.mxu0 0.0
  %1266 = vmatprep.subr.mxu0 0.0
  %1267 = vmatpush1.msra.mxu0 0.0
  %1268 = vmatprep.subr.mxu0 0.0
  %1269 = vmatpush1.msra.mxu0 0.0
  %1270 = vmatprep.subr.mxu0 0.0
  %1271 = vmatpush1.msra.mxu0 0.0
  %1272 = vmatprep.subr.mxu0 0.0
  %1273 = vmatpush1.msra.mxu0 0.0
  %1274 = vmatprep.subr.mxu0 0.0
  %1275 = vmatpush1.msra.mxu0 0.0
  %1276 = vmatprep.subr.mxu0 0.0
  %1277 = vmatpush1.msra.mxu0 0.0
  %1278 = vmatprep.subr.mxu0 0.0
  %1279 = vmatpush1.msra.mxu0 0.0
  %1280 = vmatprep.subr.mxu0 0.0
  %1281 = vmatpush1.msra.mxu0 0.0
  %1282 = vmatprep.subr.mxu0 0.0
  %1283 = vmatpush1.msra.mxu0 0.0
  %1284 = vmatprep.subr.mxu0 0.0
  %1285 = vmatpush1.msra.mxu0 0.0
  %1286 = vmatprep.subr.mxu0 0.0
  %1287 = vmatpush1.msra.mxu0 0.0
  %1288 = vmatprep.subr.mxu0 0.0
  %1289 = vmatpush1.msra.mxu0 0.0
  %1290 = vmatprep.subr.mxu0 0.0
  %1291 = vmatpush1.msra.mxu0 0.0
  %1292 = vmatprep.subr.mxu0 0.0
  %1293 = vmatpush1.msra.mxu0 0.0
  %1294 = vmatprep.subr.mxu0 0.0
  %1295 = vmatpush1.msra.mxu0 0.0
  %1296 = vmatprep.subr.mxu0 0.0
  %1297 = vmatpush1.msra.mxu0 0.0
  %1298 = vmatprep.subr.mxu0 0.0
  %1299 = vmatpush1.msra.mxu0 0.0
  %1300 = vmatprep.subr.mxu0 0.0
  %1301 = vmatpush1.msra.mxu0 0.0
  %1302 = vmatprep.subr.mxu0 0.0
  %1303 = vmatpush1.msra.mxu0 0.0
  %1304 = vmatprep.subr.mxu0 0.0
  %1305 = vmatpush1.msra.mxu0 0.0
  %1306 = vmatprep.subr.mxu0 0.0
  %1307 = vmatpush1.msra.mxu0 0.0
  %1308 = vmatprep.subr.mxu0 0.0
  %1309 = vmatpush1.msra.mxu0 0.0
  %1310 = vmatprep.subr.mxu0 0.0
  %1311 = vmatpush1.msra.mxu0 0.0
  %1312 = vmatprep.subr.mxu0 0.0
  %1313 = vmatpush1.msra.mxu0 0.0
  %1314 = vmatprep.mubr.f32.mxu0 0.0
  %1315 = vmatmul.mubr.f32.gmra.mrb[0].mxu0 %v1168
  %v1316 = vpop.f32.mrb[0].mxu0
  %v1317 = vadd.f32 0.0, %v1316
  %v1318 = vpop.f32.mrb[0].mxu0
  %v1319 = vadd.f32 0.0, %v1318
  %1320 = vmatprep.mubr.f32.mxu0 0.0
  %1321 = vmatmul.mubr.f32.gmra.mrb[0].mxu0 %v1171
  %v1322 = vpop.f32.mrb[0].mxu0
  %v1323 = vadd.f32 0.0, %v1322
  %v1324 = vpop.f32.mrb[0].mxu0
  %v1325 = vadd.f32 0.0, %v1324
  %1326 = vdwg.mxu0
  %v1327 = vld [vmem:[%s3] sm:$0xff]
  %v1328 = vld [vmem:[%s3 + $0x8] sm:$0xff]
  %v1329 = vmul.f32 %v1240, %v1327
  %v1330 = vmul.f32 %v1246, %v1328
  %v1331 = vld [vmem:[%s5] sm:$0xff]
  %v1332 = vld [vmem:[%s5 + $0x8] sm:$0xff]
  %v1333 = vmul.f32 %v1240, %v1331
  %v1334 = vmul.f32 %v1246, %v1332
  %s1335 = scalar_lea.vmem %s3, 16
  %v1336 = vld [vmem:[%s1335] sm:$0xff]
  %v1337 = vld [vmem:[%s1335 + $0x8] sm:$0xff]
  %v1338 = vmul.f32 %v1242, %v1336
  %v1339 = vmul.f32 %v1248, %v1337
  %s1340 = scalar_lea.vmem %s5, 16
  %v1341 = vld [vmem:[%s1340] sm:$0xff]
  %v1342 = vld [vmem:[%s1340 + $0x8] sm:$0xff]
  %v1343 = vmul.f32 %v1242, %v1341
  %v1344 = vmul.f32 %v1248, %v1342
  %v1345 = vadd.f32 %v1329, %v1338
  %v1346 = vadd.f32 %v1330, %v1339
  %v1347 = vadd.f32 %v1333, %v1343
  %v1348 = vadd.f32 %v1334, %v1344
  %s1349 = scalar_lea.vmem %s3, 32
  %v1350 = vld [vmem:[%s1349] sm:$0xff]
  %v1351 = vld [vmem:[%s1349 + $0x8] sm:$0xff]
  %v1352 = vmul.f32 %v1317, %v1350
  %v1353 = vmul.f32 %v1323, %v1351
  %s1354 = scalar_lea.vmem %s5, 32
  %v1355 = vld [vmem:[%s1354] sm:$0xff]
  %v1356 = vld [vmem:[%s1354 + $0x8] sm:$0xff]
  %v1357 = vmul.f32 %v1317, %v1355
  %v1358 = vmul.f32 %v1323, %v1356
  %v1359 = vadd.f32 %v1345, %v1352
  %v1360 = vadd.f32 %v1346, %v1353
  %v1361 = vadd.f32 %v1347, %v1357
  %v1362 = vadd.f32 %v1348, %v1358
  %s1363 = scalar_lea.vmem %s3, 48
  %v1364 = vld [vmem:[%s1363] sm:$0xff]
  %v1365 = vld [vmem:[%s1363 + $0x8] sm:$0xff]
  %v1366 = vmul.f32 %v1319, %v1364
  %v1367 = vmul.f32 %v1325, %v1365
  %s1368 = scalar_lea.vmem %s5, 48
  %v1369 = vld [vmem:[%s1368] sm:$0xff]
  %v1370 = vld [vmem:[%s1368 + $0x8] sm:$0xff]
  %v1371 = vmul.f32 %v1319, %v1369
  %v1372 = vmul.f32 %v1325, %v1370
  %v1373 = vadd.f32 %v1359, %v1366
  %v1374 = vadd.f32 %v1360, %v1367
  %v1375 = vadd.f32 %v1361, %v1371
  %v1376 = vadd.f32 %v1362, %v1372
  %v1377 = vrot.slane %v1373, 7
  %v1378 = vrot.slane %v1374, 7
  %v1379 = vsel %vm770, %v1377, %v1378
  %v1380 = vsel %vm770, %v1378, %v1377
  %v1381 = vmul.f32 %v1380, %v778
  %v1382 = vmul.f32 %v1379, %v783
  %v1383 = vrot.slane %v1373, 1
  %v1384 = vrot.slane %v1374, 1
  %v1385 = vsel %vm789, %v1383, %v1384
  %v1386 = vsel %vm789, %v1384, %v1383
  %v1387 = vmul.f32 %v1385, %v797
  %v1388 = vmul.f32 %v1386, %v802
  %v1389 = vrot.slane %v1375, 7
  %v1390 = vrot.slane %v1376, 7
  %v1391 = vsel %vm770, %v1389, %v1390
  %v1392 = vsel %vm770, %v1390, %v1389
  %v1393 = vmul.f32 %v1392, %v778
  %v1394 = vmul.f32 %v1391, %v783
  %v1395 = vrot.slane %v1375, 1
  %v1396 = vrot.slane %v1376, 1
  %v1397 = vsel %vm789, %v1395, %v1396
  %v1398 = vsel %vm789, %v1396, %v1395
  %v1399 = vmul.f32 %v1397, %v797
  %v1400 = vmul.f32 %v1398, %v802
  %1403 = vrot.lane.b32.xlu0 %v1381, 64
  %v1404 = vpop.permute.xlu0 %1403
  %1405 = vrot.lane.b32.xlu0 %v1382, 64
  %v1406 = vpop.permute.xlu0 %1405
  %1411 = vrot.lane.b32.xlu0 %v1373, 64
  %v1412 = vpop.permute.xlu0 %1411
  %1413 = vrot.lane.b32.xlu0 %v1374, 64
  %v1414 = vpop.permute.xlu0 %1413
  %1419 = vrot.lane.b32.xlu0 %v1387, 64
  %v1420 = vpop.permute.xlu0 %1419
  %1421 = vrot.lane.b32.xlu0 %v1388, 64
  %v1422 = vpop.permute.xlu0 %1421
  %1427 = vrot.lane.b32.xlu0 %v1393, 64
  %v1428 = vpop.permute.xlu0 %1427
  %1429 = vrot.lane.b32.xlu0 %v1394, 64
  %v1430 = vpop.permute.xlu0 %1429
  %1435 = vrot.lane.b32.xlu0 %v1375, 64
  %v1436 = vpop.permute.xlu0 %1435
  %1437 = vrot.lane.b32.xlu0 %v1376, 64
  %v1438 = vpop.permute.xlu0 %1437
  %1443 = vrot.lane.b32.xlu0 %v1399, 64
  %v1444 = vpop.permute.xlu0 %1443
  %1445 = vrot.lane.b32.xlu0 %v1400, 64
  %v1446 = vpop.permute.xlu0 %1445
  %v1449 = vsel %vm814, %v804, %v1404
  %v1450 = vsel %vm814, %v805, %v1406
  %v1451 = vsel %vm814, %v1404, %v1412
  %v1452 = vsel %vm814, %v1406, %v1414
  %v1453 = vsel %vm814, %v1412, %v1420
  %v1454 = vsel %vm814, %v1414, %v1422
  %v1455 = vsel %vm814, %v1420, %v1428
  %v1456 = vsel %vm814, %v1422, %v1430
  %v1457 = vsel %vm814, %v1428, %v1436
  %v1458 = vsel %vm814, %v1430, %v1438
  %v1459 = vsel %vm814, %v1436, %v1444
  %v1460 = vsel %vm814, %v1438, %v1446
  %v1461 = vld [vmem:[%s19] sm:$0xff]
  %v1462 = vld [vmem:[%s19 + $0x8] sm:$0xff]
  %v1463 = vld [vmem:[%s19 + $0x10] sm:$0xff]
  %v1464 = vld [vmem:[%s19 + $0x18] sm:$0xff]
  %v1465 = vld [vmem:[%s19 + $0x20] sm:$0xff]
  %v1466 = vld [vmem:[%s19 + $0x28] sm:$0xff]
  %v1467 = vld [vmem:[%s19 + $0x30] sm:$0xff]
  %v1468 = vld [vmem:[%s19 + $0x38] sm:$0xff]
  %v1469 = vld [vmem:[%s19 + $0x40] sm:$0xff]
  %v1470 = vld [vmem:[%s19 + $0x48] sm:$0xff]
  %v1471 = vld [vmem:[%s19 + $0x50] sm:$0xff]
  %v1472 = vld [vmem:[%s19 + $0x58] sm:$0xff]
  %v1473 = vld [vmem:[%s19 + $0x60] sm:$0xff]
  %v1474 = vld [vmem:[%s19 + $0x68] sm:$0xff]
  %v1475 = vld [vmem:[%s19 + $0x70] sm:$0xff]
  %v1476 = vld [vmem:[%s19 + $0x78] sm:$0xff]
  %v1477 = vld [vmem:[%s19 + $0x80] sm:$0xff]
  %v1478 = vld [vmem:[%s19 + $0x88] sm:$0xff]
  %v1479 = vld [vmem:[%s19 + $0x90] sm:$0xff]
  %v1480 = vld [vmem:[%s19 + $0x98] sm:$0xff]
  %v1481 = vld [vmem:[%s19 + $0xa0] sm:$0xff]
  %v1482 = vld [vmem:[%s19 + $0xa8] sm:$0xff]
  %v1483 = vld [vmem:[%s19 + $0xb0] sm:$0xff]
  %v1484 = vld [vmem:[%s19 + $0xb8] sm:$0xff]
  %v1485 = vld [vmem:[%s19 + $0xc0] sm:$0xff]
  %v1486 = vld [vmem:[%s19 + $0xc8] sm:$0xff]
  %v1487 = vld [vmem:[%s19 + $0xd0] sm:$0xff]
  %v1488 = vld [vmem:[%s19 + $0xd8] sm:$0xff]
  %v1489 = vld [vmem:[%s19 + $0xe0] sm:$0xff]
  %v1490 = vld [vmem:[%s19 + $0xe8] sm:$0xff]
  %v1491 = vld [vmem:[%s19 + $0xf0] sm:$0xff]
  %v1492 = vld [vmem:[%s19 + $0xf8] sm:$0xff]
  %v1493 = vld [vmem:[%s19 + $0x100] sm:$0xff]
  %v1494 = vld [vmem:[%s19 + $0x108] sm:$0xff]
  %v1495 = vld [vmem:[%s19 + $0x110] sm:$0xff]
  %v1496 = vld [vmem:[%s19 + $0x118] sm:$0xff]
  %v1497 = vld [vmem:[%s19 + $0x120] sm:$0xff]
  %v1498 = vld [vmem:[%s19 + $0x128] sm:$0xff]
  %v1499 = vld [vmem:[%s19 + $0x130] sm:$0xff]
  %v1500 = vld [vmem:[%s19 + $0x138] sm:$0xff]
  %v1501 = vld [vmem:[%s19 + $0x140] sm:$0xff]
  %v1502 = vld [vmem:[%s19 + $0x148] sm:$0xff]
  %v1503 = vld [vmem:[%s19 + $0x150] sm:$0xff]
  %v1504 = vld [vmem:[%s19 + $0x158] sm:$0xff]
  %v1505 = vld [vmem:[%s19 + $0x160] sm:$0xff]
  %v1506 = vld [vmem:[%s19 + $0x168] sm:$0xff]
  %v1507 = vld [vmem:[%s19 + $0x170] sm:$0xff]
  %v1508 = vld [vmem:[%s19 + $0x178] sm:$0xff]
  %v1509 = vld [vmem:[%s19 + $0x180] sm:$0xff]
  %v1510 = vld [vmem:[%s19 + $0x188] sm:$0xff]
  %v1511 = vld [vmem:[%s19 + $0x190] sm:$0xff]
  %v1512 = vld [vmem:[%s19 + $0x198] sm:$0xff]
  %v1513 = vld [vmem:[%s19 + $0x1a0] sm:$0xff]
  %v1514 = vld [vmem:[%s19 + $0x1a8] sm:$0xff]
  %v1515 = vld [vmem:[%s19 + $0x1b0] sm:$0xff]
  %v1516 = vld [vmem:[%s19 + $0x1b8] sm:$0xff]
  %v1517 = vld [vmem:[%s19 + $0x1c0] sm:$0xff]
  %v1518 = vld [vmem:[%s19 + $0x1c8] sm:$0xff]
  %v1519 = vld [vmem:[%s19 + $0x1d0] sm:$0xff]
  %v1520 = vld [vmem:[%s19 + $0x1d8] sm:$0xff]
  %v1521 = vld [vmem:[%s19 + $0x1e0] sm:$0xff]
  %v1522 = vld [vmem:[%s19 + $0x1e8] sm:$0xff]
  %v1523 = vld [vmem:[%s19 + $0x1f0] sm:$0xff]
  %v1524 = vld [vmem:[%s19 + $0x1f8] sm:$0xff]
  %v1525 = vld [vmem:[%s19 + $0x200] sm:$0xff]
  %v1526 = vld [vmem:[%s19 + $0x208] sm:$0xff]
  %v1527 = vld [vmem:[%s19 + $0x210] sm:$0xff]
  %v1528 = vld [vmem:[%s19 + $0x218] sm:$0xff]
  %v1529 = vld [vmem:[%s19 + $0x220] sm:$0xff]
  %v1530 = vld [vmem:[%s19 + $0x228] sm:$0xff]
  %v1531 = vld [vmem:[%s19 + $0x230] sm:$0xff]
  %v1532 = vld [vmem:[%s19 + $0x238] sm:$0xff]
  %v1533 = vld [vmem:[%s19 + $0x240] sm:$0xff]
  %v1534 = vld [vmem:[%s19 + $0x248] sm:$0xff]
  %v1535 = vld [vmem:[%s19 + $0x250] sm:$0xff]
  %v1536 = vld [vmem:[%s19 + $0x258] sm:$0xff]
  %v1537 = vld [vmem:[%s19 + $0x260] sm:$0xff]
  %v1538 = vld [vmem:[%s19 + $0x268] sm:$0xff]
  %v1539 = vld [vmem:[%s19 + $0x270] sm:$0xff]
  %v1540 = vld [vmem:[%s19 + $0x278] sm:$0xff]
  %v1541 = vld [vmem:[%s19 + $0x280] sm:$0xff]
  %v1542 = vld [vmem:[%s19 + $0x288] sm:$0xff]
  %v1543 = vld [vmem:[%s19 + $0x290] sm:$0xff]
  %v1544 = vld [vmem:[%s19 + $0x298] sm:$0xff]
  %v1545 = vld [vmem:[%s19 + $0x2a0] sm:$0xff]
  %v1546 = vld [vmem:[%s19 + $0x2a8] sm:$0xff]
  %v1547 = vld [vmem:[%s19 + $0x2b0] sm:$0xff]
  %v1548 = vld [vmem:[%s19 + $0x2b8] sm:$0xff]
  %v1549 = vld [vmem:[%s19 + $0x2c0] sm:$0xff]
  %v1550 = vld [vmem:[%s19 + $0x2c8] sm:$0xff]
  %v1551 = vld [vmem:[%s19 + $0x2d0] sm:$0xff]
  %v1552 = vld [vmem:[%s19 + $0x2d8] sm:$0xff]
  %v1553 = vld [vmem:[%s19 + $0x2e0] sm:$0xff]
  %v1554 = vld [vmem:[%s19 + $0x2e8] sm:$0xff]
  %v1555 = vld [vmem:[%s19 + $0x2f0] sm:$0xff]
  %v1556 = vld [vmem:[%s19 + $0x2f8] sm:$0xff]
  %v1557 = vld [vmem:[%s19 + $0x300] sm:$0xff]
  %v1558 = vld [vmem:[%s19 + $0x308] sm:$0xff]
  %v1559 = vld [vmem:[%s19 + $0x310] sm:$0xff]
  %v1560 = vld [vmem:[%s19 + $0x318] sm:$0xff]
  %v1561 = vld [vmem:[%s19 + $0x320] sm:$0xff]
  %v1562 = vld [vmem:[%s19 + $0x328] sm:$0xff]
  %v1563 = vld [vmem:[%s19 + $0x330] sm:$0xff]
  %v1564 = vld [vmem:[%s19 + $0x338] sm:$0xff]
  %v1565 = vld [vmem:[%s19 + $0x340] sm:$0xff]
  %v1566 = vld [vmem:[%s19 + $0x348] sm:$0xff]
  %v1567 = vld [vmem:[%s19 + $0x350] sm:$0xff]
  %v1568 = vld [vmem:[%s19 + $0x358] sm:$0xff]
  %v1569 = vld [vmem:[%s19 + $0x360] sm:$0xff]
  %v1570 = vld [vmem:[%s19 + $0x368] sm:$0xff]
  %v1571 = vld [vmem:[%s19 + $0x370] sm:$0xff]
  %v1572 = vld [vmem:[%s19 + $0x378] sm:$0xff]
  %v1573 = vld [vmem:[%s19 + $0x380] sm:$0xff]
  %v1574 = vld [vmem:[%s19 + $0x388] sm:$0xff]
  %v1575 = vld [vmem:[%s19 + $0x390] sm:$0xff]
  %v1576 = vld [vmem:[%s19 + $0x398] sm:$0xff]
  %v1577 = vld [vmem:[%s19 + $0x3a0] sm:$0xff]
  %v1578 = vld [vmem:[%s19 + $0x3a8] sm:$0xff]
  %v1579 = vld [vmem:[%s19 + $0x3b0] sm:$0xff]
  %v1580 = vld [vmem:[%s19 + $0x3b8] sm:$0xff]
  %v1581 = vld [vmem:[%s21] sm:$0x1]
  %v1583 = vlaneseq
  %v1584 = vshrl.u32 %v1583, 7
  %v1585 = vsub.s32 0, %v1584
  %v1586 = vrot.slane %v1581, %v1585
  %v1588 = vsel %vm814, %v1444, 0
  %v1590 = vsel %vm814, %v1446, 0
  %1592 = vmatprep.subr.mxu0 0.0
  %1593 = vmatpush1.msra.mxu0 %v1461
  %1594 = vmatprep.subr.mxu0 0.0
  %1595 = vmatpush1.msra.mxu0 %v1462
  %1596 = vmatprep.subr.mxu0 0.0
  %1597 = vmatpush1.msra.mxu0 %v1463
  %1598 = vmatprep.subr.mxu0 0.0
  %1599 = vmatpush1.msra.mxu0 %v1464
  %1600 = vmatprep.subr.mxu0 0.0
  %1601 = vmatpush1.msra.mxu0 %v1465
  %1602 = vmatprep.subr.mxu0 0.0
  %1603 = vmatpush1.msra.mxu0 %v1466
  %1604 = vmatprep.subr.mxu0 0.0
  %1605 = vmatpush1.msra.mxu0 %v1467
  %1606 = vmatprep.subr.mxu0 0.0
  %1607 = vmatpush1.msra.mxu0 %v1468
  %1608 = vmatprep.subr.mxu0 0.0
  %1609 = vmatpush1.msra.mxu0 %v1469
  %1610 = vmatprep.subr.mxu0 0.0
  %1611 = vmatpush1.msra.mxu0 %v1470
  %1612 = vmatprep.subr.mxu0 0.0
  %1613 = vmatpush1.msra.mxu0 %v1471
  %1614 = vmatprep.subr.mxu0 0.0
  %1615 = vmatpush1.msra.mxu0 %v1472
  %1616 = vmatprep.subr.mxu0 0.0
  %1617 = vmatpush1.msra.mxu0 %v1473
  %1618 = vmatprep.subr.mxu0 0.0
  %1619 = vmatpush1.msra.mxu0 %v1474
  %1620 = vmatprep.subr.mxu0 0.0
  %1621 = vmatpush1.msra.mxu0 %v1475
  %1622 = vmatprep.subr.mxu0 0.0
  %1623 = vmatpush1.msra.mxu0 %v1476
  %1624 = vmatprep.subr.mxu0 0.0
  %1625 = vmatpush1.msra.mxu0 %v1477
  %1626 = vmatprep.subr.mxu0 0.0
  %1627 = vmatpush1.msra.mxu0 %v1478
  %1628 = vmatprep.subr.mxu0 0.0
  %1629 = vmatpush1.msra.mxu0 %v1479
  %1630 = vmatprep.subr.mxu0 0.0
  %1631 = vmatpush1.msra.mxu0 %v1480
  %1632 = vmatprep.subr.mxu0 0.0
  %1633 = vmatpush1.msra.mxu0 %v1481
  %1634 = vmatprep.subr.mxu0 0.0
  %1635 = vmatpush1.msra.mxu0 %v1482
  %1636 = vmatprep.subr.mxu0 0.0
  %1637 = vmatpush1.msra.mxu0 %v1483
  %1638 = vmatprep.subr.mxu0 0.0
  %1639 = vmatpush1.msra.mxu0 %v1484
  %1640 = vmatprep.subr.mxu0 0.0
  %1641 = vmatpush1.msra.mxu0 %v1485
  %1642 = vmatprep.subr.mxu0 0.0
  %1643 = vmatpush1.msra.mxu0 %v1486
  %1644 = vmatprep.subr.mxu0 0.0
  %1645 = vmatpush1.msra.mxu0 %v1487
  %1646 = vmatprep.subr.mxu0 0.0
  %1647 = vmatpush1.msra.mxu0 %v1488
  %1648 = vmatprep.subr.mxu0 0.0
  %1649 = vmatpush1.msra.mxu0 %v1489
  %1650 = vmatprep.subr.mxu0 0.0
  %1651 = vmatpush1.msra.mxu0 %v1490
  %1652 = vmatprep.subr.mxu0 0.0
  %1653 = vmatpush1.msra.mxu0 %v1491
  %1654 = vmatprep.subr.mxu0 0.0
  %1655 = vmatpush1.msra.mxu0 %v1492
  %1656 = vmatprep.mubr.f32.mxu0 %v1449
  %1657 = vmatmul.mubr.f32.gmra.mrb[0].mxu0 %v815
  %v1658 = vpop.f32.mrb[0].mxu0
  %v1659 = vadd.f32 %v1586, %v1658
  %v1660 = vpop.f32.mrb[0].mxu0
  %1661 = vmatprep.mubr.f32.mxu0 %v1450
  %1662 = vmatmul.mubr.f32.gmra.mrb[0].mxu0 %v816
  %v1663 = vpop.f32.mrb[0].mxu0
  %v1664 = vadd.f32 %v1586, %v1663
  %v1665 = vpop.f32.mrb[0].mxu0
  %1666 = vdwg.mxu0
  %1667 = vmatprep.subr.mxu0 0.0
  %1668 = vmatpush1.msra.mxu0 %v1493
  %1669 = vmatprep.subr.mxu0 0.0
  %1670 = vmatpush1.msra.mxu0 %v1494
  %1671 = vmatprep.subr.mxu0 0.0
  %1672 = vmatpush1.msra.mxu0 %v1495
  %1673 = vmatprep.subr.mxu0 0.0
  %1674 = vmatpush1.msra.mxu0 %v1496
  %1675 = vmatprep.subr.mxu0 0.0
  %1676 = vmatpush1.msra.mxu0 %v1497
  %1677 = vmatprep.subr.mxu0 0.0
  %1678 = vmatpush1.msra.mxu0 %v1498
  %1679 = vmatprep.subr.mxu0 0.0
  %1680 = vmatpush1.msra.mxu0 %v1499
  %1681 = vmatprep.subr.mxu0 0.0
  %1682 = vmatpush1.msra.mxu0 %v1500
  %1683 = vmatprep.subr.mxu0 0.0
  %1684 = vmatpush1.msra.mxu0 %v1501
  %1685 = vmatprep.subr.mxu0 0.0
  %1686 = vmatpush1.msra.mxu0 %v1502
  %1687 = vmatprep.subr.mxu0 0.0
  %1688 = vmatpush1.msra.mxu0 %v1503
  %1689 = vmatprep.subr.mxu0 0.0
  %1690 = vmatpush1.msra.mxu0 %v1504
  %1691 = vmatprep.subr.mxu0 0.0
  %1692 = vmatpush1.msra.mxu0 %v1505
  %1693 = vmatprep.subr.mxu0 0.0
  %1694 = vmatpush1.msra.mxu0 %v1506
  %1695 = vmatprep.subr.mxu0 0.0
  %1696 = vmatpush1.msra.mxu0 %v1507
  %1697 = vmatprep.subr.mxu0 0.0
  %1698 = vmatpush1.msra.mxu0 %v1508
  %1699 = vmatprep.subr.mxu0 0.0
  %1700 = vmatpush1.msra.mxu0 %v1509
  %1701 = vmatprep.subr.mxu0 0.0
  %1702 = vmatpush1.msra.mxu0 %v1510
  %1703 = vmatprep.subr.mxu0 0.0
  %1704 = vmatpush1.msra.mxu0 %v1511
  %1705 = vmatprep.subr.mxu0 0.0
  %1706 = vmatpush1.msra.mxu0 %v1512
  %1707 = vmatprep.subr.mxu0 0.0
  %1708 = vmatpush1.msra.mxu0 %v1513
  %1709 = vmatprep.subr.mxu0 0.0
  %1710 = vmatpush1.msra.mxu0 %v1514
  %1711 = vmatprep.subr.mxu0 0.0
  %1712 = vmatpush1.msra.mxu0 %v1515
  %1713 = vmatprep.subr.mxu0 0.0
  %1714 = vmatpush1.msra.mxu0 %v1516
  %1715 = vmatprep.subr.mxu0 0.0
  %1716 = vmatpush1.msra.mxu0 %v1517
  %1717 = vmatprep.subr.mxu0 0.0
  %1718 = vmatpush1.msra.mxu0 %v1518
  %1719 = vmatprep.subr.mxu0 0.0
  %1720 = vmatpush1.msra.mxu0 %v1519
  %1721 = vmatprep.subr.mxu0 0.0
  %1722 = vmatpush1.msra.mxu0 %v1520
  %1723 = vmatprep.subr.mxu0 0.0
  %1724 = vmatpush1.msra.mxu0 %v1521
  %1725 = vmatprep.subr.mxu0 0.0
  %1726 = vmatpush1.msra.mxu0 %v1522
  %1727 = vmatprep.subr.mxu0 0.0
  %1728 = vmatpush1.msra.mxu0 %v1523
  %1729 = vmatprep.subr.mxu0 0.0
  %1730 = vmatpush1.msra.mxu0 %v1524
  %1731 = vmatprep.mubr.f32.mxu0 %v1453
  %1732 = vmatmul.mubr.f32.gmra.mrb[0].mxu0 %v1451
  %v1733 = vpop.f32.mrb[0].mxu0
  %v1734 = vadd.f32 %v1659, %v1733
  %v1735 = vpop.f32.mrb[0].mxu0
  %1736 = vmatprep.mubr.f32.mxu0 %v1454
  %1737 = vmatmul.mubr.f32.gmra.mrb[0].mxu0 %v1452
  %v1738 = vpop.f32.mrb[0].mxu0
  %v1739 = vadd.f32 %v1664, %v1738
  %v1740 = vpop.f32.mrb[0].mxu0
  %1741 = vdwg.mxu0
  %1742 = vmatprep.subr.mxu0 0.0
  %1743 = vmatpush1.msra.mxu0 %v1525
  %1744 = vmatprep.subr.mxu0 0.0
  %1745 = vmatpush1.msra.mxu0 %v1526
  %1746 = vmatprep.subr.mxu0 0.0
  %1747 = vmatpush1.msra.mxu0 %v1527
  %1748 = vmatprep.subr.mxu0 0.0
  %1749 = vmatpush1.msra.mxu0 %v1528
  %1750 = vmatprep.subr.mxu0 0.0
  %1751 = vmatpush1.msra.mxu0 %v1529
  %1752 = vmatprep.subr.mxu0 0.0
  %1753 = vmatpush1.msra.mxu0 %v1530
  %1754 = vmatprep.subr.mxu0 0.0
  %1755 = vmatpush1.msra.mxu0 %v1531
  %1756 = vmatprep.subr.mxu0 0.0
  %1757 = vmatpush1.msra.mxu0 %v1532
  %1758 = vmatprep.subr.mxu0 0.0
  %1759 = vmatpush1.msra.mxu0 %v1533
  %1760 = vmatprep.subr.mxu0 0.0
  %1761 = vmatpush1.msra.mxu0 %v1534
  %1762 = vmatprep.subr.mxu0 0.0
  %1763 = vmatpush1.msra.mxu0 %v1535
  %1764 = vmatprep.subr.mxu0 0.0
  %1765 = vmatpush1.msra.mxu0 %v1536
  %1766 = vmatprep.subr.mxu0 0.0
  %1767 = vmatpush1.msra.mxu0 %v1537
  %1768 = vmatprep.subr.mxu0 0.0
  %1769 = vmatpush1.msra.mxu0 %v1538
  %1770 = vmatprep.subr.mxu0 0.0
  %1771 = vmatpush1.msra.mxu0 %v1539
  %1772 = vmatprep.subr.mxu0 0.0
  %1773 = vmatpush1.msra.mxu0 %v1540
  %1774 = vmatprep.subr.mxu0 0.0
  %1775 = vmatpush1.msra.mxu0 %v1541
  %1776 = vmatprep.subr.mxu0 0.0
  %1777 = vmatpush1.msra.mxu0 %v1542
  %1778 = vmatprep.subr.mxu0 0.0
  %1779 = vmatpush1.msra.mxu0 %v1543
  %1780 = vmatprep.subr.mxu0 0.0
  %1781 = vmatpush1.msra.mxu0 %v1544
  %1782 = vmatprep.subr.mxu0 0.0
  %1783 = vmatpush1.msra.mxu0 %v1545
  %1784 = vmatprep.subr.mxu0 0.0
  %1785 = vmatpush1.msra.mxu0 %v1546
  %1786 = vmatprep.subr.mxu0 0.0
  %1787 = vmatpush1.msra.mxu0 %v1547
  %1788 = vmatprep.subr.mxu0 0.0
  %1789 = vmatpush1.msra.mxu0 %v1548
  %1790 = vmatprep.subr.mxu0 0.0
  %1791 = vmatpush1.msra.mxu0 %v1549
  %1792 = vmatprep.subr.mxu0 0.0
  %1793 = vmatpush1.msra.mxu0 %v1550
  %1794 = vmatprep.subr.mxu0 0.0
  %1795 = vmatpush1.msra.mxu0 %v1551
  %1796 = vmatprep.subr.mxu0 0.0
  %1797 = vmatpush1.msra.mxu0 %v1552
  %1798 = vmatprep.subr.mxu0 0.0
  %1799 = vmatpush1.msra.mxu0 %v1553
  %1800 = vmatprep.subr.mxu0 0.0
  %1801 = vmatpush1.msra.mxu0 %v1554
  %1802 = vmatprep.subr.mxu0 0.0
  %1803 = vmatpush1.msra.mxu0 %v1555
  %1804 = vmatprep.subr.mxu0 0.0
  %1805 = vmatpush1.msra.mxu0 %v1556
  %1806 = vmatprep.mubr.f32.mxu0 %v1457
  %1807 = vmatmul.mubr.f32.gmra.mrb[0].mxu0 %v1455
  %v1808 = vpop.f32.mrb[0].mxu0
  %v1809 = vadd.f32 %v1734, %v1808
  %v1810 = vpop.f32.mrb[0].mxu0
  %1811 = vmatprep.mubr.f32.mxu0 %v1458
  %1812 = vmatmul.mubr.f32.gmra.mrb[0].mxu0 %v1456
  %v1813 = vpop.f32.mrb[0].mxu0
  %v1814 = vadd.f32 %v1739, %v1813
  %v1815 = vpop.f32.mrb[0].mxu0
  %1816 = vdwg.mxu0
  %1817 = vmatprep.subr.mxu0 0.0
  %1818 = vmatpush1.msra.mxu0 %v1557
  %1819 = vmatprep.subr.mxu0 0.0
  %1820 = vmatpush1.msra.mxu0 %v1558
  %1821 = vmatprep.subr.mxu0 0.0
  %1822 = vmatpush1.msra.mxu0 %v1559
  %1823 = vmatprep.subr.mxu0 0.0
  %1824 = vmatpush1.msra.mxu0 %v1560
  %1825 = vmatprep.subr.mxu0 0.0
  %1826 = vmatpush1.msra.mxu0 %v1561
  %1827 = vmatprep.subr.mxu0 0.0
  %1828 = vmatpush1.msra.mxu0 %v1562
  %1829 = vmatprep.subr.mxu0 0.0
  %1830 = vmatpush1.msra.mxu0 %v1563
  %1831 = vmatprep.subr.mxu0 0.0
  %1832 = vmatpush1.msra.mxu0 %v1564
  %1833 = vmatprep.subr.mxu0 0.0
  %1834 = vmatpush1.msra.mxu0 %v1565
  %1835 = vmatprep.subr.mxu0 0.0
  %1836 = vmatpush1.msra.mxu0 %v1566
  %1837 = vmatprep.subr.mxu0 0.0
  %1838 = vmatpush1.msra.mxu0 %v1567
  %1839 = vmatprep.subr.mxu0 0.0
  %1840 = vmatpush1.msra.mxu0 %v1568
  %1841 = vmatprep.subr.mxu0 0.0
  %1842 = vmatpush1.msra.mxu0 %v1569
  %1843 = vmatprep.subr.mxu0 0.0
  %1844 = vmatpush1.msra.mxu0 %v1570
  %1845 = vmatprep.subr.mxu0 0.0
  %1846 = vmatpush1.msra.mxu0 %v1571
  %1847 = vmatprep.subr.mxu0 0.0
  %1848 = vmatpush1.msra.mxu0 %v1572
  %1849 = vmatprep.subr.mxu0 0.0
  %1850 = vmatpush1.msra.mxu0 %v1573
  %1851 = vmatprep.subr.mxu0 0.0
  %1852 = vmatpush1.msra.mxu0 %v1574
  %1853 = vmatprep.subr.mxu0 0.0
  %1854 = vmatpush1.msra.mxu0 %v1575
  %1855 = vmatprep.subr.mxu0 0.0
  %1856 = vmatpush1.msra.mxu0 %v1576
  %1857 = vmatprep.subr.mxu0 0.0
  %1858 = vmatpush1.msra.mxu0 %v1577
  %1859 = vmatprep.subr.mxu0 0.0
  %1860 = vmatpush1.msra.mxu0 %v1578
  %1861 = vmatprep.subr.mxu0 0.0
  %1862 = vmatpush1.msra.mxu0 %v1579
  %1863 = vmatprep.subr.mxu0 0.0
  %1864 = vmatpush1.msra.mxu0 %v1580
  %1865 = vmatprep.subr.mxu0 0.0
  %1866 = vmatpush1.msra.mxu0 0.0
  %1867 = vmatprep.subr.mxu0 0.0
  %1868 = vmatpush1.msra.mxu0 0.0
  %1869 = vmatprep.subr.mxu0 0.0
  %1870 = vmatpush1.msra.mxu0 0.0
  %1871 = vmatprep.subr.mxu0 0.0
  %1872 = vmatpush1.msra.mxu0 0.0
  %1873 = vmatprep.subr.mxu0 0.0
  %1874 = vmatpush1.msra.mxu0 0.0
  %1875 = vmatprep.subr.mxu0 0.0
  %1876 = vmatpush1.msra.mxu0 0.0
  %1877 = vmatprep.subr.mxu0 0.0
  %1878 = vmatpush1.msra.mxu0 0.0
  %1879 = vmatprep.subr.mxu0 0.0
  %1880 = vmatpush1.msra.mxu0 0.0
  %1881 = vmatprep.mubr.f32.mxu0 %v1588
  %1882 = vmatmul.mubr.f32.gmra.mrb[0].mxu0 %v1459
  %v1883 = vpop.f32.mrb[0].mxu0
  %v1884 = vadd.f32 %v1809, %v1883
  %v1885 = vpop.f32.mrb[0].mxu0
  %1886 = vmatprep.mubr.f32.mxu0 %v1590
  %1887 = vmatmul.mubr.f32.gmra.mrb[0].mxu0 %v1460
  %v1888 = vpop.f32.mrb[0].mxu0
  %v1889 = vadd.f32 %v1814, %v1888
  %v1890 = vpop.f32.mrb[0].mxu0
  %1891 = vdwg.mxu0
  %v1892 = vmax.f32 %v1884, 0.0
  %v1893 = vmax.f32 %v1889, 0.0
  %v1894 = vrot.slane %v1892, 7
  %v1895 = vrot.slane %v1893, 7
  %v1896 = vsel %vm770, %v1894, %v1895
  %v1897 = vsel %vm770, %v1895, %v1894
  %v1898 = vmul.f32 %v1897, %v778
  %v1899 = vmul.f32 %v1896, %v783
  %v1900 = vrot.slane %v1892, 1
  %v1901 = vrot.slane %v1893, 1
  %v1902 = vsel %vm789, %v1900, %v1901
  %v1903 = vsel %vm789, %v1901, %v1900
  %v1904 = vmul.f32 %v1902, %v797
  %v1905 = vmul.f32 %v1903, %v802
  %v1906 = vld [vmem:[%s23] sm:$0xff]
  %v1907 = vld [vmem:[%s23 + $0x8] sm:$0xff]
  %v1908 = vld [vmem:[%s23 + $0x10] sm:$0xff]
  %v1909 = vld [vmem:[%s23 + $0x18] sm:$0xff]
  %v1910 = vld [vmem:[%s23 + $0x20] sm:$0xff]
  %v1911 = vld [vmem:[%s23 + $0x28] sm:$0xff]
  %v1912 = vld [vmem:[%s23 + $0x30] sm:$0xff]
  %v1913 = vld [vmem:[%s23 + $0x38] sm:$0xff]
  %v1914 = vld [vmem:[%s23 + $0x40] sm:$0xff]
  %v1915 = vld [vmem:[%s23 + $0x48] sm:$0xff]
  %v1916 = vld [vmem:[%s23 + $0x50] sm:$0xff]
  %v1917 = vld [vmem:[%s23 + $0x58] sm:$0xff]
  %v1918 = vld [vmem:[%s23 + $0x60] sm:$0xff]
  %v1919 = vld [vmem:[%s23 + $0x68] sm:$0xff]
  %v1920 = vld [vmem:[%s23 + $0x70] sm:$0xff]
  %v1921 = vld [vmem:[%s23 + $0x78] sm:$0xff]
  %v1922 = vld [vmem:[%s23 + $0x80] sm:$0xff]
  %v1923 = vld [vmem:[%s23 + $0x88] sm:$0xff]
  %v1924 = vld [vmem:[%s23 + $0x90] sm:$0xff]
  %v1925 = vld [vmem:[%s23 + $0x98] sm:$0xff]
  %v1926 = vld [vmem:[%s23 + $0xa0] sm:$0xff]
  %v1927 = vld [vmem:[%s23 + $0xa8] sm:$0xff]
  %v1928 = vld [vmem:[%s23 + $0xb0] sm:$0xff]
  %v1929 = vld [vmem:[%s23 + $0xb8] sm:$0xff]
  %v1930 = vld [vmem:[%s23 + $0xc0] sm:$0xff]
  %v1931 = vld [vmem:[%s23 + $0xc8] sm:$0xff]
  %v1932 = vld [vmem:[%s23 + $0xd0] sm:$0xff]
  %v1933 = vld [vmem:[%s23 + $0xd8] sm:$0xff]
  %v1934 = vld [vmem:[%s23 + $0xe0] sm:$0xff]
  %v1935 = vld [vmem:[%s23 + $0xe8] sm:$0xff]
  %v1936 = vld [vmem:[%s23 + $0xf0] sm:$0xff]
  %v1937 = vld [vmem:[%s23 + $0xf8] sm:$0xff]
  %v1938 = vld [vmem:[%s23 + $0x100] sm:$0xff]
  %v1939 = vld [vmem:[%s23 + $0x108] sm:$0xff]
  %v1940 = vld [vmem:[%s23 + $0x110] sm:$0xff]
  %v1941 = vld [vmem:[%s23 + $0x118] sm:$0xff]
  %v1942 = vld [vmem:[%s23 + $0x120] sm:$0xff]
  %v1943 = vld [vmem:[%s23 + $0x128] sm:$0xff]
  %v1944 = vld [vmem:[%s23 + $0x130] sm:$0xff]
  %v1945 = vld [vmem:[%s23 + $0x138] sm:$0xff]
  %v1946 = vld [vmem:[%s23 + $0x140] sm:$0xff]
  %v1947 = vld [vmem:[%s23 + $0x148] sm:$0xff]
  %v1948 = vld [vmem:[%s23 + $0x150] sm:$0xff]
  %v1949 = vld [vmem:[%s23 + $0x158] sm:$0xff]
  %v1950 = vld [vmem:[%s23 + $0x160] sm:$0xff]
  %v1951 = vld [vmem:[%s23 + $0x168] sm:$0xff]
  %v1952 = vld [vmem:[%s23 + $0x170] sm:$0xff]
  %v1953 = vld [vmem:[%s23 + $0x178] sm:$0xff]
  %v1954 = vld [vmem:[%s25] sm:$0x1]
  %v1956 = vlaneseq
  %v1957 = vshrl.u32 %v1956, 7
  %v1958 = vsub.s32 0, %v1957
  %v1959 = vrot.slane %v1954, %v1958
  %1961 = vmatprep.subr.mxu0 0.0
  %1962 = vmatpush1.msra.mxu0 %v1906
  %1963 = vmatprep.subr.mxu0 0.0
  %1964 = vmatpush1.msra.mxu0 %v1907
  %1965 = vmatprep.subr.mxu0 0.0
  %1966 = vmatpush1.msra.mxu0 %v1908
  %1967 = vmatprep.subr.mxu0 0.0
  %1968 = vmatpush1.msra.mxu0 %v1909
  %1969 = vmatprep.subr.mxu0 0.0
  %1970 = vmatpush1.msra.mxu0 %v1910
  %1971 = vmatprep.subr.mxu0 0.0
  %1972 = vmatpush1.msra.mxu0 %v1911
  %1973 = vmatprep.subr.mxu0 0.0
  %1974 = vmatpush1.msra.mxu0 %v1912
  %1975 = vmatprep.subr.mxu0 0.0
  %1976 = vmatpush1.msra.mxu0 %v1913
  %1977 = vmatprep.subr.mxu0 0.0
  %1978 = vmatpush1.msra.mxu0 %v1914
  %1979 = vmatprep.subr.mxu0 0.0
  %1980 = vmatpush1.msra.mxu0 %v1915
  %1981 = vmatprep.subr.mxu0 0.0
  %1982 = vmatpush1.msra.mxu0 %v1916
  %1983 = vmatprep.subr.mxu0 0.0
  %1984 = vmatpush1.msra.mxu0 %v1917
  %1985 = vmatprep.subr.mxu0 0.0
  %1986 = vmatpush1.msra.mxu0 %v1918
  %1987 = vmatprep.subr.mxu0 0.0
  %1988 = vmatpush1.msra.mxu0 %v1919
  %1989 = vmatprep.subr.mxu0 0.0
  %1990 = vmatpush1.msra.mxu0 %v1920
  %1991 = vmatprep.subr.mxu0 0.0
  %1992 = vmatpush1.msra.mxu0 %v1921
  %1993 = vmatprep.subr.mxu0 0.0
  %1994 = vmatpush1.msra.mxu0 %v1922
  %1995 = vmatprep.subr.mxu0 0.0
  %1996 = vmatpush1.msra.mxu0 %v1923
  %1997 = vmatprep.subr.mxu0 0.0
  %1998 = vmatpush1.msra.mxu0 %v1924
  %1999 = vmatprep.subr.mxu0 0.0
  %2000 = vmatpush1.msra.mxu0 %v1925
  %2001 = vmatprep.subr.mxu0 0.0
  %2002 = vmatpush1.msra.mxu0 %v1926
  %2003 = vmatprep.subr.mxu0 0.0
  %2004 = vmatpush1.msra.mxu0 %v1927
  %2005 = vmatprep.subr.mxu0 0.0
  %2006 = vmatpush1.msra.mxu0 %v1928
  %2007 = vmatprep.subr.mxu0 0.0
  %2008 = vmatpush1.msra.mxu0 %v1929
  %2009 = vmatprep.subr.mxu0 0.0
  %2010 = vmatpush1.msra.mxu0 %v1930
  %2011 = vmatprep.subr.mxu0 0.0
  %2012 = vmatpush1.msra.mxu0 %v1931
  %2013 = vmatprep.subr.mxu0 0.0
  %2014 = vmatpush1.msra.mxu0 %v1932
  %2015 = vmatprep.subr.mxu0 0.0
  %2016 = vmatpush1.msra.mxu0 %v1933
  %2017 = vmatprep.subr.mxu0 0.0
  %2018 = vmatpush1.msra.mxu0 %v1934
  %2019 = vmatprep.subr.mxu0 0.0
  %2020 = vmatpush1.msra.mxu0 %v1935
  %2021 = vmatprep.subr.mxu0 0.0
  %2022 = vmatpush1.msra.mxu0 %v1936
  %2023 = vmatprep.subr.mxu0 0.0
  %2024 = vmatpush1.msra.mxu0 %v1937
  %2025 = vmatprep.mubr.f32.mxu0 %v1892
  %2026 = vmatmul.mubr.f32.gmra.mrb[0].mxu0 %v1898
  %v2027 = vpop.f32.mrb[0].mxu0
  %v2028 = vadd.f32 %v1959, %v2027
  %v2029 = vpop.f32.mrb[0].mxu0
  %2030 = vmatprep.mubr.f32.mxu0 %v1893
  %2031 = vmatmul.mubr.f32.gmra.mrb[0].mxu0 %v1899
  %v2032 = vpop.f32.mrb[0].mxu0
  %v2033 = vadd.f32 %v1959, %v2032
  %v2034 = vpop.f32.mrb[0].mxu0
  %2035 = vdwg.mxu0
  %2036 = vmatprep.subr.mxu0 0.0
  %2037 = vmatpush1.msra.mxu0 %v1938
  %2038 = vmatprep.subr.mxu0 0.0
  %2039 = vmatpush1.msra.mxu0 %v1939
  %2040 = vmatprep.subr.mxu0 0.0
  %2041 = vmatpush1.msra.mxu0 %v1940
  %2042 = vmatprep.subr.mxu0 0.0
  %2043 = vmatpush1.msra.mxu0 %v1941
  %2044 = vmatprep.subr.mxu0 0.0
  %2045 = vmatpush1.msra.mxu0 %v1942
  %2046 = vmatprep.subr.mxu0 0.0
  %2047 = vmatpush1.msra.mxu0 %v1943
  %2048 = vmatprep.subr.mxu0 0.0
  %2049 = vmatpush1.msra.mxu0 %v1944
  %2050 = vmatprep.subr.mxu0 0.0
  %2051 = vmatpush1.msra.mxu0 %v1945
  %2052 = vmatprep.subr.mxu0 0.0
  %2053 = vmatpush1.msra.mxu0 %v1946
  %2054 = vmatprep.subr.mxu0 0.0
  %2055 = vmatpush1.msra.mxu0 %v1947
  %2056 = vmatprep.subr.mxu0 0.0
  %2057 = vmatpush1.msra.mxu0 %v1948
  %2058 = vmatprep.subr.mxu0 0.0
  %2059 = vmatpush1.msra.mxu0 %v1949
  %2060 = vmatprep.subr.mxu0 0.0
  %2061 = vmatpush1.msra.mxu0 %v1950
  %2062 = vmatprep.subr.mxu0 0.0
  %2063 = vmatpush1.msra.mxu0 %v1951
  %2064 = vmatprep.subr.mxu0 0.0
  %2065 = vmatpush1.msra.mxu0 %v1952
  %2066 = vmatprep.subr.mxu0 0.0
  %2067 = vmatpush1.msra.mxu0 %v1953
  %2068 = vmatprep.subr.mxu0 0.0
  %2069 = vmatpush1.msra.mxu0 0.0
  %2070 = vmatprep.subr.mxu0 0.0
  %2071 = vmatpush1.msra.mxu0 0.0
  %2072 = vmatprep.subr.mxu0 0.0
  %2073 = vmatpush1.msra.mxu0 0.0
  %2074 = vmatprep.subr.mxu0 0.0
  %2075 = vmatpush1.msra.mxu0 0.0
  %2076 = vmatprep.subr.mxu0 0.0
  %2077 = vmatpush1.msra.mxu0 0.0
  %2078 = vmatprep.subr.mxu0 0.0
  %2079 = vmatpush1.msra.mxu0 0.0
  %2080 = vmatprep.subr.mxu0 0.0
  %2081 = vmatpush1.msra.mxu0 0.0
  %2082 = vmatprep.subr.mxu0 0.0
  %2083 = vmatpush1.msra.mxu0 0.0
  %2084 = vmatprep.subr.mxu0 0.0
  %2085 = vmatpush1.msra.mxu0 0.0
  %2086 = vmatprep.subr.mxu0 0.0
  %2087 = vmatpush1.msra.mxu0 0.0
  %2088 = vmatprep.subr.mxu0 0.0
  %2089 = vmatpush1.msra.mxu0 0.0
  %2090 = vmatprep.subr.mxu0 0.0
  %2091 = vmatpush1.msra.mxu0 0.0
  %2092 = vmatprep.subr.mxu0 0.0
  %2093 = vmatpush1.msra.mxu0 0.0
  %2094 = vmatprep.subr.mxu0 0.0
  %2095 = vmatpush1.msra.mxu0 0.0
  %2096 = vmatprep.subr.mxu0 0.0
  %2097 = vmatpush1.msra.mxu0 0.0
  %2098 = vmatprep.subr.mxu0 0.0
  %2099 = vmatpush1.msra.mxu0 0.0
  %2100 = vmatprep.mubr.f32.mxu0 0.0
  %2101 = vmatmul.mubr.f32.gmra.mrb[0].mxu0 %v1904
  %v2102 = vpop.f32.mrb[0].mxu0
  %v2103 = vadd.f32 %v2028, %v2102
  %v2104 = vpop.f32.mrb[0].mxu0
  %2105 = vmatprep.mubr.f32.mxu0 0.0
  %2106 = vmatmul.mubr.f32.gmra.mrb[0].mxu0 %v1905
  %v2107 = vpop.f32.mrb[0].mxu0
  %v2108 = vadd.f32 %v2033, %v2107
  %v2109 = vpop.f32.mrb[0].mxu0
  %2110 = vdwg.mxu0
  %v2111 = vmax.f32 %v2103, 0.0
  %v2112 = vmax.f32 %v2108, 0.0
  %v2113 = vld [vmem:[%s67] sm:$0xff]
  %v2114 = vld [vmem:[%s67 + $0x8] sm:$0xff]
  %v2115 = vld [vmem:[%s67 + $0x10] sm:$0xff]
  %v2116 = vld [vmem:[%s67 + $0x18] sm:$0xff]
  %vm2117 = vcmask 130048
  %v2119 = vsel %vm2117, %v2113, 0
  %v2122 = vsel %vm2117, %v2114, 0
  %v2125 = vsel %vm2117, %v2115, 0
  %v2128 = vsel %vm2117, %v2116, 0
  %2130 = vmatprep.subr.mxu0 0.0
  %2131 = vmatpush1.msra.mxu0 %v2111
  %2132 = vmatprep.subr.mxu0 0.0
  %2133 = vmatpush1.msra.mxu0 %v2112
  %2134 = vmatprep.subr.mxu0 0.0
  %2135 = vmatpush1.msra.mxu0 0.0
  %2136 = vmatprep.subr.mxu0 0.0
  %2137 = vmatpush1.msra.mxu0 0.0
  %2138 = vmatprep.subr.mxu0 0.0
  %2139 = vmatpush1.msra.mxu0 0.0
  %2140 = vmatprep.subr.mxu0 0.0
  %2141 = vmatpush1.msra.mxu0 0.0
  %2142 = vmatprep.subr.mxu0 0.0
  %2143 = vmatpush1.msra.mxu0 0.0
  %2144 = vmatprep.subr.mxu0 0.0
  %2145 = vmatpush1.msra.mxu0 0.0
  %2146 = vmatprep.subr.mxu0 0.0
  %2147 = vmatpush1.msra.mxu0 0.0
  %2148 = vmatprep.subr.mxu0 0.0
  %2149 = vmatpush1.msra.mxu0 0.0
  %2150 = vmatprep.subr.mxu0 0.0
  %2151 = vmatpush1.msra.mxu0 0.0
  %2152 = vmatprep.subr.mxu0 0.0
  %2153 = vmatpush1.msra.mxu0 0.0
  %2154 = vmatprep.subr.mxu0 0.0
  %2155 = vmatpush1.msra.mxu0 0.0
  %2156 = vmatprep.subr.mxu0 0.0
  %2157 = vmatpush1.msra.mxu0 0.0
  %2158 = vmatprep.subr.mxu0 0.0
  %2159 = vmatpush1.msra.mxu0 0.0
  %2160 = vmatprep.subr.mxu0 0.0
  %2161 = vmatpush1.msra.mxu0 0.0
  %2162 = vmatprep.subr.mxu0 0.0
  %2163 = vmatpush1.msra.mxu0 0.0
  %2164 = vmatprep.subr.mxu0 0.0
  %2165 = vmatpush1.msra.mxu0 0.0
  %2166 = vmatprep.subr.mxu0 0.0
  %2167 = vmatpush1.msra.mxu0 0.0
  %2168 = vmatprep.subr.mxu0 0.0
  %2169 = vmatpush1.msra.mxu0 0.0
  %2170 = vmatprep.subr.mxu0 0.0
  %2171 = vmatpush1.msra.mxu0 0.0
  %2172 = vmatprep.subr.mxu0 0.0
  %2173 = vmatpush1.msra.mxu0 0.0
  %2174 = vmatprep.subr.mxu0 0.0
  %2175 = vmatpush1.msra.mxu0 0.0
  %2176 = vmatprep.subr.mxu0 0.0
  %2177 = vmatpush1.msra.mxu0 0.0
  %2178 = vmatprep.subr.mxu0 0.0
  %2179 = vmatpush1.msra.mxu0 0.0
  %2180 = vmatprep.subr.mxu0 0.0
  %2181 = vmatpush1.msra.mxu0 0.0
  %2182 = vmatprep.subr.mxu0 0.0
  %2183 = vmatpush1.msra.mxu0 0.0
  %2184 = vmatprep.subr.mxu0 0.0
  %2185 = vmatpush1.msra.mxu0 0.0
  %2186 = vmatprep.subr.mxu0 0.0
  %2187 = vmatpush1.msra.mxu0 0.0
  %2188 = vmatprep.subr.mxu0 0.0
  %2189 = vmatpush1.msra.mxu0 0.0
  %2190 = vmatprep.subr.mxu0 0.0
  %2191 = vmatpush1.msra.mxu0 0.0
  %2192 = vmatprep.subr.mxu0 0.0
  %2193 = vmatpush1.msra.mxu0 0.0
  %2194 = vmatprep.mubr.f32.mxu0 0.0
  %2195 = vmatmul.mubr.f32.gmra.mrb[0].mxu0 %v2119
  %v2196 = vpop.f32.mrb[0].mxu0
  %v2197 = vadd.f32 0.0, %v2196
  %v2198 = vpop.f32.mrb[0].mxu0
  %2199 = vmatprep.mubr.f32.mxu0 0.0
  %2200 = vmatmul.mubr.f32.gmra.mrb[0].mxu0 %v2122
  %v2201 = vpop.f32.mrb[0].mxu0
  %v2202 = vadd.f32 0.0, %v2201
  %v2203 = vpop.f32.mrb[0].mxu0
  %2204 = vmatprep.mubr.f32.mxu0 0.0
  %2205 = vmatmul.mubr.f32.gmra.mrb[0].mxu0 %v2125
  %v2206 = vpop.f32.mrb[0].mxu0
  %v2207 = vadd.f32 0.0, %v2206
  %v2208 = vpop.f32.mrb[0].mxu0
  %2209 = vmatprep.mubr.f32.mxu0 0.0
  %2210 = vmatmul.mubr.f32.gmra.mrb[0].mxu0 %v2128
  %v2211 = vpop.f32.mrb[0].mxu0
  %v2212 = vadd.f32 0.0, %v2211
  %v2213 = vpop.f32.mrb[0].mxu0
  %2214 = vdwg.mxu0
  %v2215 = vrot.slane %v2197, 7
  %v2216 = vrot.slane %v2202, 7
  %v2217 = vrot.slane %v2207, 7
  %v2218 = vrot.slane %v2212, 7
  %v2219 = vsel %vm770, %v2217, %v2218
  %v2220 = vsel %vm770, %v2216, %v2217
  %v2221 = vsel %vm770, %v2215, %v2216
  %v2222 = vsel %vm770, %v2218, %v2215
  %v2223 = vld [vmem:[%s61] sm:$0xff]
  %v2224 = vld [vmem:[%s61 + $0x8] sm:$0xff]
  %v2225 = vld [vmem:[%s61 + $0x10] sm:$0xff]
  %v2226 = vld [vmem:[%s61 + $0x18] sm:$0xff]
  %2228 = vset.pattern.permute.xlu0 0
  %2229 = vperm.xlu0 %2228, %v2223
  %v2230 = vpop.permute.xlu0 %2229
  %2233 = vset.pattern.permute.xlu0 0
  %2234 = vperm.xlu0 %2233, %v2224
  %v2235 = vpop.permute.xlu0 %2234
  %2238 = vset.pattern.permute.xlu0 0
  %2239 = vperm.xlu0 %2238, %v2225
  %v2240 = vpop.permute.xlu0 %2239
  %2243 = vset.pattern.permute.xlu0 0
  %2244 = vperm.xlu0 %2243, %v2226
  %v2245 = vpop.permute.xlu0 %2244
  %v2247 = vmul.f32 %v2222, %v2230
  %v2248 = vmul.f32 %v2221, %v2235
  %v2249 = vmul.f32 %v2220, %v2240
  %v2250 = vmul.f32 %v2219, %v2245
  %v2251 = vrot.slane %v2197, 1
  %v2252 = vrot.slane %v2202, 1
  %v2253 = vrot.slane %v2207, 1
  %v2254 = vrot.slane %v2212, 1
  %v2255 = vsel %vm789, %v2253, %v2254
  %v2256 = vsel %vm789, %v2252, %v2253
  %v2257 = vsel %vm789, %v2251, %v2252
  %v2258 = vsel %vm789, %v2254, %v2251
  %v2259 = vld [vmem:[%s55] sm:$0xff]
  %v2260 = vld [vmem:[%s55 + $0x8] sm:$0xff]
  %v2261 = vld [vmem:[%s55 + $0x10] sm:$0xff]
  %v2262 = vld [vmem:[%s55 + $0x18] sm:$0xff]
  %2264 = vset.pattern.permute.xlu0 0
  %2265 = vperm.xlu0 %2264, %v2259
  %v2266 = vpop.permute.xlu0 %2265
  %2269 = vset.pattern.permute.xlu0 0
  %2270 = vperm.xlu0 %2269, %v2260
  %v2271 = vpop.permute.xlu0 %2270
  %2274 = vset.pattern.permute.xlu0 0
  %2275 = vperm.xlu0 %2274, %v2261
  %v2276 = vpop.permute.xlu0 %2275
  %2279 = vset.pattern.permute.xlu0 0
  %2280 = vperm.xlu0 %2279, %v2262
  %v2281 = vpop.permute.xlu0 %2280
  %v2283 = vmul.f32 %v2257, %v2266
  %v2284 = vmul.f32 %v2256, %v2271
  %v2285 = vmul.f32 %v2255, %v2276
  %v2286 = vmul.f32 %v2258, %v2281
  %2291 = vrot.lane.b32.xlu0 %v2197, 64
  %v2292 = vpop.permute.xlu0 %2291
  %2293 = vrot.lane.b32.xlu0 %v2202, 64
  %v2294 = vpop.permute.xlu0 %2293
  %2295 = vrot.lane.b32.xlu0 %v2207, 64
  %v2296 = vpop.permute.xlu0 %2295
  %2297 = vrot.lane.b32.xlu0 %v2212, 64
  %v2298 = vpop.permute.xlu0 %2297
  %v2303 = vsel %vm814, %v2247, %v2292
  %v2304 = vsel %vm814, %v2248, %v2294
  %v2305 = vsel %vm814, %v2249, %v2296
  %v2306 = vsel %vm814, %v2250, %v2298
  %v2307 = vld [vmem:[%s37] sm:$0xff]
  %v2308 = vld [vmem:[%s37 + $0x8] sm:$0xff]
  %v2309 = vld [vmem:[%s37 + $0x10] sm:$0xff]
  %v2310 = vld [vmem:[%s37 + $0x18] sm:$0xff]
  %v2311 = vld [vmem:[%s37 + $0x20] sm:$0xff]
  %v2312 = vld [vmem:[%s37 + $0x28] sm:$0xff]
  %v2313 = vld [vmem:[%s37 + $0x30] sm:$0xff]
  %v2314 = vld [vmem:[%s37 + $0x38] sm:$0xff]
  %v2315 = vld [vmem:[%s37 + $0x40] sm:$0xff]
  %v2316 = vld [vmem:[%s37 + $0x48] sm:$0xff]
  %v2317 = vld [vmem:[%s37 + $0x50] sm:$0xff]
  %v2318 = vld [vmem:[%s37 + $0x58] sm:$0xff]
  %v2319 = vld [vmem:[%s37 + $0x60] sm:$0xff]
  %v2320 = vld [vmem:[%s37 + $0x68] sm:$0xff]
  %v2321 = vld [vmem:[%s37 + $0x70] sm:$0xff]
  %v2322 = vld [vmem:[%s37 + $0x78] sm:$0xff]
  %v2323 = vld [vmem:[%s37 + $0x80] sm:$0xff]
  %v2324 = vld [vmem:[%s37 + $0x88] sm:$0xff]
  %v2325 = vld [vmem:[%s37 + $0x90] sm:$0xff]
  %v2326 = vld [vmem:[%s37 + $0x98] sm:$0xff]
  %v2327 = vld [vmem:[%s37 + $0xa0] sm:$0xff]
  %v2328 = vld [vmem:[%s37 + $0xa8] sm:$0xff]
  %v2329 = vld [vmem:[%s37 + $0xb0] sm:$0xff]
  %v2330 = vld [vmem:[%s37 + $0xb8] sm:$0xff]
  %v2331 = vld [vmem:[%s39] sm:$0x1]
  %v2333 = vlaneseq
  %v2334 = vshrl.u32 %v2333, 7
  %v2335 = vsub.s32 0, %v2334
  %v2336 = vrot.slane %v2331, %v2335
  %v2339 = vsel %vm814, %v2283, 0
  %v2342 = vsel %vm814, %v2284, 0
  %v2345 = vsel %vm814, %v2285, 0
  %v2348 = vsel %vm814, %v2286, 0
  %2350 = vmatprep.subr.mxu0 0.0
  %2351 = vmatpush1.msra.mxu0 %v2307
  %2352 = vmatprep.subr.mxu0 0.0
  %2353 = vmatpush1.msra.mxu0 %v2308
  %2354 = vmatprep.subr.mxu0 0.0
  %2355 = vmatpush1.msra.mxu0 %v2309
  %2356 = vmatprep.subr.mxu0 0.0
  %2357 = vmatpush1.msra.mxu0 %v2310
  %2358 = vmatprep.subr.mxu0 0.0
  %2359 = vmatpush1.msra.mxu0 %v2311
  %2360 = vmatprep.subr.mxu0 0.0
  %2361 = vmatpush1.msra.mxu0 %v2312
  %2362 = vmatprep.subr.mxu0 0.0
  %2363 = vmatpush1.msra.mxu0 %v2313
  %2364 = vmatprep.subr.mxu0 0.0
  %2365 = vmatpush1.msra.mxu0 %v2314
  %2366 = vmatprep.subr.mxu0 0.0
  %2367 = vmatpush1.msra.mxu0 %v2315
  %2368 = vmatprep.subr.mxu0 0.0
  %2369 = vmatpush1.msra.mxu0 %v2316
  %2370 = vmatprep.subr.mxu0 0.0
  %2371 = vmatpush1.msra.mxu0 %v2317
  %2372 = vmatprep.subr.mxu0 0.0
  %2373 = vmatpush1.msra.mxu0 %v2318
  %2374 = vmatprep.subr.mxu0 0.0
  %2375 = vmatpush1.msra.mxu0 %v2319
  %2376 = vmatprep.subr.mxu0 0.0
  %2377 = vmatpush1.msra.mxu0 %v2320
  %2378 = vmatprep.subr.mxu0 0.0
  %2379 = vmatpush1.msra.mxu0 %v2321
  %2380 = vmatprep.subr.mxu0 0.0
  %2381 = vmatpush1.msra.mxu0 %v2322
  %2382 = vmatprep.subr.mxu0 0.0
  %2383 = vmatpush1.msra.mxu0 %v2323
  %2384 = vmatprep.subr.mxu0 0.0
  %2385 = vmatpush1.msra.mxu0 %v2324
  %2386 = vmatprep.subr.mxu0 0.0
  %2387 = vmatpush1.msra.mxu0 %v2325
  %2388 = vmatprep.subr.mxu0 0.0
  %2389 = vmatpush1.msra.mxu0 %v2326
  %2390 = vmatprep.subr.mxu0 0.0
  %2391 = vmatpush1.msra.mxu0 %v2327
  %2392 = vmatprep.subr.mxu0 0.0
  %2393 = vmatpush1.msra.mxu0 %v2328
  %2394 = vmatprep.subr.mxu0 0.0
  %2395 = vmatpush1.msra.mxu0 %v2329
  %2396 = vmatprep.subr.mxu0 0.0
  %2397 = vmatpush1.msra.mxu0 %v2330
  %2398 = vmatprep.subr.mxu0 0.0
  %2399 = vmatpush1.msra.mxu0 0.0
  %2400 = vmatprep.subr.mxu0 0.0
  %2401 = vmatpush1.msra.mxu0 0.0
  %2402 = vmatprep.subr.mxu0 0.0
  %2403 = vmatpush1.msra.mxu0 0.0
  %2404 = vmatprep.subr.mxu0 0.0
  %2405 = vmatpush1.msra.mxu0 0.0
  %2406 = vmatprep.subr.mxu0 0.0
  %2407 = vmatpush1.msra.mxu0 0.0
  %2408 = vmatprep.subr.mxu0 0.0
  %2409 = vmatpush1.msra.mxu0 0.0
  %2410 = vmatprep.subr.mxu0 0.0
  %2411 = vmatpush1.msra.mxu0 0.0
  %2412 = vmatprep.subr.mxu0 0.0
  %2413 = vmatpush1.msra.mxu0 0.0
  %2414 = vmatprep.mubr.f32.mxu0 %v2339
  %2415 = vmatmul.mubr.f32.gmra.mrb[0].mxu0 %v2303
  %v2416 = vpop.f32.mrb[0].mxu0
  %v2417 = vadd.f32 %v2336, %v2416
  %v2418 = vpop.f32.mrb[0].mxu0
  %2419 = vmatprep.mubr.f32.mxu0 %v2342
  %2420 = vmatmul.mubr.f32.gmra.mrb[0].mxu0 %v2304
  %v2421 = vpop.f32.mrb[0].mxu0
  %v2422 = vadd.f32 %v2336, %v2421
  %v2423 = vpop.f32.mrb[0].mxu0
  %2424 = vmatprep.mubr.f32.mxu0 %v2345
  %2425 = vmatmul.mubr.f32.gmra.mrb[0].mxu0 %v2305
  %v2426 = vpop.f32.mrb[0].mxu0
  %v2427 = vadd.f32 %v2336, %v2426
  %v2428 = vpop.f32.mrb[0].mxu0
  %2429 = vmatprep.mubr.f32.mxu0 %v2348
  %2430 = vmatmul.mubr.f32.gmra.mrb[0].mxu0 %v2306
  %v2431 = vpop.f32.mrb[0].mxu0
  %v2432 = vadd.f32 %v2336, %v2431
  %v2433 = vpop.f32.mrb[0].mxu0
  %2434 = vdwg.mxu0
  %v2435 = vmax.f32 %v2417, 0.0
  %v2436 = vmax.f32 %v2422, 0.0
  %v2437 = vmax.f32 %v2427, 0.0
  %v2438 = vmax.f32 %v2432, 0.0
  %v2439 = vrot.slane %v2435, 7
  %v2440 = vrot.slane %v2436, 7
  %v2441 = vrot.slane %v2437, 7
  %v2442 = vrot.slane %v2438, 7
  %v2443 = vsel %vm770, %v2441, %v2442
  %v2444 = vsel %vm770, %v2440, %v2441
  %v2445 = vsel %vm770, %v2439, %v2440
  %v2446 = vsel %vm770, %v2442, %v2439
  %v2447 = vmul.f32 %v2446, %v2230
  %v2448 = vmul.f32 %v2445, %v2235
  %v2449 = vmul.f32 %v2444, %v2240
  %v2450 = vmul.f32 %v2443, %v2245
  %v2451 = vrot.slane %v2435, 1
  %v2452 = vrot.slane %v2436, 1
  %v2453 = vrot.slane %v2437, 1
  %v2454 = vrot.slane %v2438, 1
  %v2455 = vsel %vm789, %v2453, %v2454
  %v2456 = vsel %vm789, %v2452, %v2453
  %v2457 = vsel %vm789, %v2451, %v2452
  %v2458 = vsel %vm789, %v2454, %v2451
  %v2459 = vmul.f32 %v2457, %v2266
  %v2460 = vmul.f32 %v2456, %v2271
  %v2461 = vmul.f32 %v2455, %v2276
  %v2462 = vmul.f32 %v2458, %v2281
  %v2463 = vld [vmem:[%s41] sm:$0xff]
  %v2464 = vld [vmem:[%s41 + $0x8] sm:$0xff]
  %v2465 = vld [vmem:[%s41 + $0x10] sm:$0xff]
  %v2466 = vld [vmem:[%s41 + $0x18] sm:$0xff]
  %v2467 = vld [vmem:[%s41 + $0x20] sm:$0xff]
  %v2468 = vld [vmem:[%s41 + $0x28] sm:$0xff]
  %v2469 = vld [vmem:[%s41 + $0x30] sm:$0xff]
  %v2470 = vld [vmem:[%s41 + $0x38] sm:$0xff]
  %v2471 = vld [vmem:[%s41 + $0x40] sm:$0xff]
  %v2472 = vld [vmem:[%s41 + $0x48] sm:$0xff]
  %v2473 = vld [vmem:[%s41 + $0x50] sm:$0xff]
  %v2474 = vld [vmem:[%s41 + $0x58] sm:$0xff]
  %v2475 = vld [vmem:[%s41 + $0x60] sm:$0xff]
  %v2476 = vld [vmem:[%s41 + $0x68] sm:$0xff]
  %v2477 = vld [vmem:[%s41 + $0x70] sm:$0xff]
  %v2478 = vld [vmem:[%s41 + $0x78] sm:$0xff]
  %v2479 = vld [vmem:[%s41 + $0x80] sm:$0xff]
  %v2480 = vld [vmem:[%s41 + $0x88] sm:$0xff]
  %v2481 = vld [vmem:[%s41 + $0x90] sm:$0xff]
  %v2482 = vld [vmem:[%s41 + $0x98] sm:$0xff]
  %v2483 = vld [vmem:[%s41 + $0xa0] sm:$0xff]
  %v2484 = vld [vmem:[%s41 + $0xa8] sm:$0xff]
  %v2485 = vld [vmem:[%s41 + $0xb0] sm:$0xff]
  %v2486 = vld [vmem:[%s41 + $0xb8] sm:$0xff]
  %v2487 = vld [vmem:[%s41 + $0xc0] sm:$0xff]
  %v2488 = vld [vmem:[%s41 + $0xc8] sm:$0xff]
  %v2489 = vld [vmem:[%s41 + $0xd0] sm:$0xff]
  %v2490 = vld [vmem:[%s41 + $0xd8] sm:$0xff]
  %v2491 = vld [vmem:[%s41 + $0xe0] sm:$0xff]
  %v2492 = vld [vmem:[%s41 + $0xe8] sm:$0xff]
  %v2493 = vld [vmem:[%s41 + $0xf0] sm:$0xff]
  %v2494 = vld [vmem:[%s41 + $0xf8] sm:$0xff]
  %v2495 = vld [vmem:[%s41 + $0x100] sm:$0xff]
  %v2496 = vld [vmem:[%s41 + $0x108] sm:$0xff]
  %v2497 = vld [vmem:[%s41 + $0x110] sm:$0xff]
  %v2498 = vld [vmem:[%s41 + $0x118] sm:$0xff]
  %v2499 = vld [vmem:[%s41 + $0x120] sm:$0xff]
  %v2500 = vld [vmem:[%s41 + $0x128] sm:$0xff]
  %v2501 = vld [vmem:[%s41 + $0x130] sm:$0xff]
  %v2502 = vld [vmem:[%s41 + $0x138] sm:$0xff]
  %v2503 = vld [vmem:[%s41 + $0x140] sm:$0xff]
  %v2504 = vld [vmem:[%s41 + $0x148] sm:$0xff]
  %v2505 = vld [vmem:[%s41 + $0x150] sm:$0xff]
  %v2506 = vld [vmem:[%s41 + $0x158] sm:$0xff]
  %v2507 = vld [vmem:[%s41 + $0x160] sm:$0xff]
  %v2508 = vld [vmem:[%s41 + $0x168] sm:$0xff]
  %v2509 = vld [vmem:[%s41 + $0x170] sm:$0xff]
  %v2510 = vld [vmem:[%s41 + $0x178] sm:$0xff]
  %v2511 = vld [vmem:[%s43] sm:$0x1]
  %v2513 = vlaneseq
  %v2514 = vshrl.u32 %v2513, 7
  %v2515 = vsub.s32 0, %v2514
  %v2516 = vrot.slane %v2511, %v2515
  %2518 = vmatprep.subr.mxu0 0.0
  %2519 = vmatpush1.msra.mxu0 %v2463
  %2520 = vmatprep.subr.mxu0 0.0
  %2521 = vmatpush1.msra.mxu0 %v2464
  %2522 = vmatprep.subr.mxu0 0.0
  %2523 = vmatpush1.msra.mxu0 %v2465
  %2524 = vmatprep.subr.mxu0 0.0
  %2525 = vmatpush1.msra.mxu0 %v2466
  %2526 = vmatprep.subr.mxu0 0.0
  %2527 = vmatpush1.msra.mxu0 %v2467
  %2528 = vmatprep.subr.mxu0 0.0
  %2529 = vmatpush1.msra.mxu0 %v2468
  %2530 = vmatprep.subr.mxu0 0.0
  %2531 = vmatpush1.msra.mxu0 %v2469
  %2532 = vmatprep.subr.mxu0 0.0
  %2533 = vmatpush1.msra.mxu0 %v2470
  %2534 = vmatprep.subr.mxu0 0.0
  %2535 = vmatpush1.msra.mxu0 %v2471
  %2536 = vmatprep.subr.mxu0 0.0
  %2537 = vmatpush1.msra.mxu0 %v2472
  %2538 = vmatprep.subr.mxu0 0.0
  %2539 = vmatpush1.msra.mxu0 %v2473
  %2540 = vmatprep.subr.mxu0 0.0
  %2541 = vmatpush1.msra.mxu0 %v2474
  %2542 = vmatprep.subr.mxu0 0.0
  %2543 = vmatpush1.msra.mxu0 %v2475
  %2544 = vmatprep.subr.mxu0 0.0
  %2545 = vmatpush1.msra.mxu0 %v2476
  %2546 = vmatprep.subr.mxu0 0.0
  %2547 = vmatpush1.msra.mxu0 %v2477
  %2548 = vmatprep.subr.mxu0 0.0
  %2549 = vmatpush1.msra.mxu0 %v2478
  %2550 = vmatprep.subr.mxu0 0.0
  %2551 = vmatpush1.msra.mxu0 %v2479
  %2552 = vmatprep.subr.mxu0 0.0
  %2553 = vmatpush1.msra.mxu0 %v2480
  %2554 = vmatprep.subr.mxu0 0.0
  %2555 = vmatpush1.msra.mxu0 %v2481
  %2556 = vmatprep.subr.mxu0 0.0
  %2557 = vmatpush1.msra.mxu0 %v2482
  %2558 = vmatprep.subr.mxu0 0.0
  %2559 = vmatpush1.msra.mxu0 %v2483
  %2560 = vmatprep.subr.mxu0 0.0
  %2561 = vmatpush1.msra.mxu0 %v2484
  %2562 = vmatprep.subr.mxu0 0.0
  %2563 = vmatpush1.msra.mxu0 %v2485
  %2564 = vmatprep.subr.mxu0 0.0
  %2565 = vmatpush1.msra.mxu0 %v2486
  %2566 = vmatprep.subr.mxu0 0.0
  %2567 = vmatpush1.msra.mxu0 %v2487
  %2568 = vmatprep.subr.mxu0 0.0
  %2569 = vmatpush1.msra.mxu0 %v2488
  %2570 = vmatprep.subr.mxu0 0.0
  %2571 = vmatpush1.msra.mxu0 %v2489
  %2572 = vmatprep.subr.mxu0 0.0
  %2573 = vmatpush1.msra.mxu0 %v2490
  %2574 = vmatprep.subr.mxu0 0.0
  %2575 = vmatpush1.msra.mxu0 %v2491
  %2576 = vmatprep.subr.mxu0 0.0
  %2577 = vmatpush1.msra.mxu0 %v2492
  %2578 = vmatprep.subr.mxu0 0.0
  %2579 = vmatpush1.msra.mxu0 %v2493
  %2580 = vmatprep.subr.mxu0 0.0
  %2581 = vmatpush1.msra.mxu0 %v2494
  %2582 = vmatprep.mubr.f32.mxu0 %v2435
  %2583 = vmatmul.mubr.f32.gmra.mrb[0].mxu0 %v2447
  %v2584 = vpop.f32.mrb[0].mxu0
  %v2585 = vadd.f32 %v2516, %v2584
  %v2586 = vpop.f32.mrb[0].mxu0
  %2587 = vmatprep.mubr.f32.mxu0 %v2436
  %2588 = vmatmul.mubr.f32.gmra.mrb[0].mxu0 %v2448
  %v2589 = vpop.f32.mrb[0].mxu0
  %v2590 = vadd.f32 %v2516, %v2589
  %v2591 = vpop.f32.mrb[0].mxu0
  %2592 = vmatprep.mubr.f32.mxu0 %v2437
  %2593 = vmatmul.mubr.f32.gmra.mrb[0].mxu0 %v2449
  %v2594 = vpop.f32.mrb[0].mxu0
  %v2595 = vadd.f32 %v2516, %v2594
  %v2596 = vpop.f32.mrb[0].mxu0
  %2597 = vmatprep.mubr.f32.mxu0 %v2438
  %2598 = vmatmul.mubr.f32.gmra.mrb[0].mxu0 %v2450
  %v2599 = vpop.f32.mrb[0].mxu0
  %v2600 = vadd.f32 %v2516, %v2599
  %v2601 = vpop.f32.mrb[0].mxu0
  %2602 = vdwg.mxu0
  %2603 = vmatprep.subr.mxu0 0.0
  %2604 = vmatpush1.msra.mxu0 %v2495
  %2605 = vmatprep.subr.mxu0 0.0
  %2606 = vmatpush1.msra.mxu0 %v2496
  %2607 = vmatprep.subr.mxu0 0.0
  %2608 = vmatpush1.msra.mxu0 %v2497
  %2609 = vmatprep.subr.mxu0 0.0
  %2610 = vmatpush1.msra.mxu0 %v2498
  %2611 = vmatprep.subr.mxu0 0.0
  %2612 = vmatpush1.msra.mxu0 %v2499
  %2613 = vmatprep.subr.mxu0 0.0
  %2614 = vmatpush1.msra.mxu0 %v2500
  %2615 = vmatprep.subr.mxu0 0.0
  %2616 = vmatpush1.msra.mxu0 %v2501
  %2617 = vmatprep.subr.mxu0 0.0
  %2618 = vmatpush1.msra.mxu0 %v2502
  %2619 = vmatprep.subr.mxu0 0.0
  %2620 = vmatpush1.msra.mxu0 %v2503
  %2621 = vmatprep.subr.mxu0 0.0
  %2622 = vmatpush1.msra.mxu0 %v2504
  %2623 = vmatprep.subr.mxu0 0.0
  %2624 = vmatpush1.msra.mxu0 %v2505
  %2625 = vmatprep.subr.mxu0 0.0
  %2626 = vmatpush1.msra.mxu0 %v2506
  %2627 = vmatprep.subr.mxu0 0.0
  %2628 = vmatpush1.msra.mxu0 %v2507
  %2629 = vmatprep.subr.mxu0 0.0
  %2630 = vmatpush1.msra.mxu0 %v2508
  %2631 = vmatprep.subr.mxu0 0.0
  %2632 = vmatpush1.msra.mxu0 %v2509
  %2633 = vmatprep.subr.mxu0 0.0
  %2634 = vmatpush1.msra.mxu0 %v2510
  %2635 = vmatprep.subr.mxu0 0.0
  %2636 = vmatpush1.msra.mxu0 0.0
  %2637 = vmatprep.subr.mxu0 0.0
  %2638 = vmatpush1.msra.mxu0 0.0
  %2639 = vmatprep.subr.mxu0 0.0
  %2640 = vmatpush1.msra.mxu0 0.0
  %2641 = vmatprep.subr.mxu0 0.0
  %2642 = vmatpush1.msra.mxu0 0.0
  %2643 = vmatprep.subr.mxu0 0.0
  %2644 = vmatpush1.msra.mxu0 0.0
  %2645 = vmatprep.subr.mxu0 0.0
  %2646 = vmatpush1.msra.mxu0 0.0
  %2647 = vmatprep.subr.mxu0 0.0
  %2648 = vmatpush1.msra.mxu0 0.0
  %2649 = vmatprep.subr.mxu0 0.0
  %2650 = vmatpush1.msra.mxu0 0.0
  %2651 = vmatprep.subr.mxu0 0.0
  %2652 = vmatpush1.msra.mxu0 0.0
  %2653 = vmatprep.subr.mxu0 0.0
  %2654 = vmatpush1.msra.mxu0 0.0
  %2655 = vmatprep.subr.mxu0 0.0
  %2656 = vmatpush1.msra.mxu0 0.0
  %2657 = vmatprep.subr.mxu0 0.0
  %2658 = vmatpush1.msra.mxu0 0.0
  %2659 = vmatprep.subr.mxu0 0.0
  %2660 = vmatpush1.msra.mxu0 0.0
  %2661 = vmatprep.subr.mxu0 0.0
  %2662 = vmatpush1.msra.mxu0 0.0
  %2663 = vmatprep.subr.mxu0 0.0
  %2664 = vmatpush1.msra.mxu0 0.0
  %2665 = vmatprep.subr.mxu0 0.0
  %2666 = vmatpush1.msra.mxu0 0.0
  %2667 = vmatprep.mubr.f32.mxu0 0.0
  %2668 = vmatmul.mubr.f32.gmra.mrb[0].mxu0 %v2459
  %v2669 = vpop.f32.mrb[0].mxu0
  %v2670 = vadd.f32 %v2585, %v2669
  %v2671 = vpop.f32.mrb[0].mxu0
  %2672 = vmatprep.mubr.f32.mxu0 0.0
  %2673 = vmatmul.mubr.f32.gmra.mrb[0].mxu0 %v2460
  %v2674 = vpop.f32.mrb[0].mxu0
  %v2675 = vadd.f32 %v2590, %v2674
  %v2676 = vpop.f32.mrb[0].mxu0
  %2677 = vmatprep.mubr.f32.mxu0 0.0
  %2678 = vmatmul.mubr.f32.gmra.mrb[0].mxu0 %v2461
  %v2679 = vpop.f32.mrb[0].mxu0
  %v2680 = vadd.f32 %v2595, %v2679
  %v2681 = vpop.f32.mrb[0].mxu0
  %2682 = vmatprep.mubr.f32.mxu0 0.0
  %2683 = vmatmul.mubr.f32.gmra.mrb[0].mxu0 %v2462
  %v2684 = vpop.f32.mrb[0].mxu0
  %v2685 = vadd.f32 %v2600, %v2684
  %v2686 = vpop.f32.mrb[0].mxu0
  %2687 = vdwg.mxu0
  %v2688 = vmax.f32 %v2670, 0.0
  %v2689 = vmax.f32 %v2675, 0.0
  %v2690 = vmax.f32 %v2680, 0.0
  %v2691 = vmax.f32 %v2685, 0.0
  %v2692 = vld [vmem:[%s35] sm:$0xff]
  %v2693 = vld [vmem:[%s35 + $0x8] sm:$0xff]
  %v2694 = vld [vmem:[%s35 + $0x10] sm:$0xff]
  %v2695 = vld [vmem:[%s35 + $0x18] sm:$0xff]
  %v2696 = vld [vmem:[%s35 + $0x20] sm:$0xff]
  %v2697 = vld [vmem:[%s35 + $0x28] sm:$0xff]
  %v2698 = vld [vmem:[%s35 + $0x30] sm:$0xff]
  %v2699 = vld [vmem:[%s35 + $0x38] sm:$0xff]
  %v2700 = vld [vmem:[%s35 + $0x40] sm:$0xff]
  %v2701 = vld [vmem:[%s35 + $0x48] sm:$0xff]
  %v2702 = vld [vmem:[%s35 + $0x50] sm:$0xff]
  %v2703 = vld [vmem:[%s35 + $0x58] sm:$0xff]
  %v2704 = vld [vmem:[%s35 + $0x60] sm:$0xff]
  %v2705 = vld [vmem:[%s35 + $0x68] sm:$0xff]
  %v2706 = vld [vmem:[%s35 + $0x70] sm:$0xff]
  %v2707 = vld [vmem:[%s35 + $0x78] sm:$0xff]
  %v2708 = vld [vmem:[%s35 + $0x80] sm:$0xff]
  %v2709 = vld [vmem:[%s35 + $0x88] sm:$0xff]
  %v2710 = vld [vmem:[%s35 + $0x90] sm:$0xff]
  %v2711 = vld [vmem:[%s35 + $0x98] sm:$0xff]
  %v2712 = vld [vmem:[%s35 + $0xa0] sm:$0xff]
  %v2713 = vld [vmem:[%s35 + $0xa8] sm:$0xff]
  %v2714 = vld [vmem:[%s35 + $0xb0] sm:$0xff]
  %v2715 = vld [vmem:[%s35 + $0xb8] sm:$0xff]
  %v2716 = vld [vmem:[%s35 + $0xc0] sm:$0xff]
  %v2717 = vld [vmem:[%s35 + $0xc8] sm:$0xff]
  %v2718 = vld [vmem:[%s35 + $0xd0] sm:$0xff]
  %v2719 = vld [vmem:[%s35 + $0xd8] sm:$0xff]
  %v2720 = vld [vmem:[%s35 + $0xe0] sm:$0xff]
  %v2721 = vld [vmem:[%s35 + $0xe8] sm:$0xff]
  %v2722 = vld [vmem:[%s35 + $0xf0] sm:$0xff]
  %v2723 = vld [vmem:[%s35 + $0xf8] sm:$0xff]
  %v2724 = vld [vmem:[%s35 + $0x100] sm:$0xff]
  %v2725 = vld [vmem:[%s35 + $0x108] sm:$0xff]
  %v2726 = vld [vmem:[%s35 + $0x110] sm:$0xff]
  %v2727 = vld [vmem:[%s35 + $0x118] sm:$0xff]
  %v2728 = vld [vmem:[%s35 + $0x120] sm:$0xff]
  %v2729 = vld [vmem:[%s35 + $0x128] sm:$0xff]
  %v2730 = vld [vmem:[%s35 + $0x130] sm:$0xff]
  %v2731 = vld [vmem:[%s35 + $0x138] sm:$0xff]
  %v2732 = vld [vmem:[%s35 + $0x140] sm:$0xff]
  %v2733 = vld [vmem:[%s35 + $0x148] sm:$0xff]
  %v2734 = vld [vmem:[%s35 + $0x150] sm:$0xff]
  %v2735 = vld [vmem:[%s35 + $0x158] sm:$0xff]
  %v2736 = vld [vmem:[%s35 + $0x160] sm:$0xff]
  %v2737 = vld [vmem:[%s35 + $0x168] sm:$0xff]
  %v2738 = vld [vmem:[%s35 + $0x170] sm:$0xff]
  %v2739 = vld [vmem:[%s35 + $0x178] sm:$0xff]
  %v2740 = vld [vmem:[%s35 + $0x180] sm:$0xff]
  %v2741 = vld [vmem:[%s35 + $0x188] sm:$0xff]
  %v2742 = vld [vmem:[%s35 + $0x190] sm:$0xff]
  %v2743 = vld [vmem:[%s35 + $0x198] sm:$0xff]
  %v2744 = vld [vmem:[%s35 + $0x1a0] sm:$0xff]
  %v2745 = vld [vmem:[%s35 + $0x1a8] sm:$0xff]
  %v2746 = vld [vmem:[%s35 + $0x1b0] sm:$0xff]
  %v2747 = vld [vmem:[%s35 + $0x1b8] sm:$0xff]
  %v2748 = vld [vmem:[%s35 + $0x1c0] sm:$0xff]
  %v2749 = vld [vmem:[%s35 + $0x1c8] sm:$0xff]
  %v2750 = vld [vmem:[%s35 + $0x1d0] sm:$0xff]
  %v2751 = vld [vmem:[%s35 + $0x1d8] sm:$0xff]
  %v2752 = vld [vmem:[%s35 + $0x1e0] sm:$0xff]
  %v2753 = vld [vmem:[%s35 + $0x1e8] sm:$0xff]
  %v2754 = vld [vmem:[%s35 + $0x1f0] sm:$0xff]
  %v2755 = vld [vmem:[%s35 + $0x1f8] sm:$0xff]
  %v2756 = vld [vmem:[%s35 + $0x200] sm:$0xff]
  %v2757 = vld [vmem:[%s35 + $0x208] sm:$0xff]
  %v2758 = vld [vmem:[%s35 + $0x210] sm:$0xff]
  %v2759 = vld [vmem:[%s35 + $0x218] sm:$0xff]
  %v2760 = vld [vmem:[%s35 + $0x220] sm:$0xff]
  %v2761 = vld [vmem:[%s35 + $0x228] sm:$0xff]
  %v2762 = vld [vmem:[%s35 + $0x230] sm:$0xff]
  %v2763 = vld [vmem:[%s35 + $0x238] sm:$0xff]
  %v2764 = vld [vmem:[%s35 + $0x240] sm:$0xff]
  %v2765 = vld [vmem:[%s35 + $0x248] sm:$0xff]
  %v2766 = vld [vmem:[%s35 + $0x250] sm:$0xff]
  %v2767 = vld [vmem:[%s35 + $0x258] sm:$0xff]
  %v2768 = vld [vmem:[%s35 + $0x260] sm:$0xff]
  %v2769 = vld [vmem:[%s35 + $0x268] sm:$0xff]
  %v2770 = vld [vmem:[%s35 + $0x270] sm:$0xff]
  %v2771 = vld [vmem:[%s35 + $0x278] sm:$0xff]
  %v2772 = vld [vmem:[%s35 + $0x280] sm:$0xff]
  %v2773 = vld [vmem:[%s35 + $0x288] sm:$0xff]
  %v2774 = vld [vmem:[%s35 + $0x290] sm:$0xff]
  %v2775 = vld [vmem:[%s35 + $0x298] sm:$0xff]
  %v2776 = vld [vmem:[%s35 + $0x2a0] sm:$0xff]
  %v2777 = vld [vmem:[%s35 + $0x2a8] sm:$0xff]
  %v2778 = vld [vmem:[%s35 + $0x2b0] sm:$0xff]
  %v2779 = vld [vmem:[%s35 + $0x2b8] sm:$0xff]
  %v2780 = vld [vmem:[%s35 + $0x2c0] sm:$0xff]
  %v2781 = vld [vmem:[%s35 + $0x2c8] sm:$0xff]
  %v2782 = vld [vmem:[%s35 + $0x2d0] sm:$0xff]
  %v2783 = vld [vmem:[%s35 + $0x2d8] sm:$0xff]
  %v2784 = vld [vmem:[%s35 + $0x2e0] sm:$0xff]
  %v2785 = vld [vmem:[%s35 + $0x2e8] sm:$0xff]
  %v2786 = vld [vmem:[%s35 + $0x2f0] sm:$0xff]
  %v2787 = vld [vmem:[%s35 + $0x2f8] sm:$0xff]
  %v2788 = vld [vmem:[%s35 + $0x300] sm:$0xff]
  %v2789 = vld [vmem:[%s35 + $0x308] sm:$0xff]
  %v2790 = vld [vmem:[%s35 + $0x310] sm:$0xff]
  %v2791 = vld [vmem:[%s35 + $0x318] sm:$0xff]
  %v2792 = vld [vmem:[%s35 + $0x320] sm:$0xff]
  %v2793 = vld [vmem:[%s35 + $0x328] sm:$0xff]
  %v2794 = vld [vmem:[%s35 + $0x330] sm:$0xff]
  %v2795 = vld [vmem:[%s35 + $0x338] sm:$0xff]
  %v2796 = vld [vmem:[%s35 + $0x340] sm:$0xff]
  %v2797 = vld [vmem:[%s35 + $0x348] sm:$0xff]
  %v2798 = vld [vmem:[%s35 + $0x350] sm:$0xff]
  %v2799 = vld [vmem:[%s35 + $0x358] sm:$0xff]
  %v2800 = vld [vmem:[%s35 + $0x360] sm:$0xff]
  %v2801 = vld [vmem:[%s35 + $0x368] sm:$0xff]
  %v2802 = vld [vmem:[%s35 + $0x370] sm:$0xff]
  %v2803 = vld [vmem:[%s35 + $0x378] sm:$0xff]
  %v2804 = vld [vmem:[%s35 + $0x380] sm:$0xff]
  %v2805 = vld [vmem:[%s35 + $0x388] sm:$0xff]
  %v2806 = vld [vmem:[%s35 + $0x390] sm:$0xff]
  %v2807 = vld [vmem:[%s35 + $0x398] sm:$0xff]
  %v2808 = vld [vmem:[%s35 + $0x3a0] sm:$0xff]
  %v2809 = vld [vmem:[%s35 + $0x3a8] sm:$0xff]
  %v2810 = vld [vmem:[%s35 + $0x3b0] sm:$0xff]
  %v2811 = vld [vmem:[%s35 + $0x3b8] sm:$0xff]
  %v2812 = vld [vmem:[%s35 + $0x3c0] sm:$0xff]
  %v2813 = vld [vmem:[%s35 + $0x3c8] sm:$0xff]
  %v2814 = vld [vmem:[%s35 + $0x3d0] sm:$0xff]
  %v2815 = vld [vmem:[%s35 + $0x3d8] sm:$0xff]
  %v2816 = vld [vmem:[%s35 + $0x3e0] sm:$0xff]
  %v2817 = vld [vmem:[%s35 + $0x3e8] sm:$0xff]
  %v2818 = vld [vmem:[%s35 + $0x3f0] sm:$0xff]
  %v2819 = vld [vmem:[%s35 + $0x3f8] sm:$0xff]
  %2820 = vmatprep.subr.mxu0 %v2693
  %2821 = vmatpush1.msra.mxu0 %v2692
  %2822 = vmatprep.subr.mxu0 %v2701
  %2823 = vmatpush1.msra.mxu0 %v2700
  %2824 = vmatprep.subr.mxu0 %v2709
  %2825 = vmatpush1.msra.mxu0 %v2708
  %2826 = vmatprep.subr.mxu0 %v2717
  %2827 = vmatpush1.msra.mxu0 %v2716
  %2828 = vmatprep.subr.mxu0 %v2725
  %2829 = vmatpush1.msra.mxu0 %v2724
  %2830 = vmatprep.subr.mxu0 %v2733
  %2831 = vmatpush1.msra.mxu0 %v2732
  %2832 = vmatprep.subr.mxu0 %v2741
  %2833 = vmatpush1.msra.mxu0 %v2740
  %2834 = vmatprep.subr.mxu0 %v2749
  %2835 = vmatpush1.msra.mxu0 %v2748
  %2836 = vmatprep.subr.mxu0 %v2757
  %2837 = vmatpush1.msra.mxu0 %v2756
  %2838 = vmatprep.subr.mxu0 %v2765
  %2839 = vmatpush1.msra.mxu0 %v2764
  %2840 = vmatprep.subr.mxu0 %v2773
  %2841 = vmatpush1.msra.mxu0 %v2772
  %2842 = vmatprep.subr.mxu0 %v2781
  %2843 = vmatpush1.msra.mxu0 %v2780
  %2844 = vmatprep.subr.mxu0 %v2789
  %2845 = vmatpush1.msra.mxu0 %v2788
  %2846 = vmatprep.subr.mxu0 %v2797
  %2847 = vmatpush1.msra.mxu0 %v2796
  %2848 = vmatprep.subr.mxu0 %v2805
  %2849 = vmatpush1.msra.mxu0 %v2804
  %2850 = vmatprep.subr.mxu0 %v2813
  %2851 = vmatpush1.msra.mxu0 %v2812
  %2852 = vmatprep.subr.mxu0 0.0
  %2853 = vmatpush1.msra.mxu0 0.0
  %2854 = vmatprep.subr.mxu0 0.0
  %2855 = vmatpush1.msra.mxu0 0.0
  %2856 = vmatprep.subr.mxu0 0.0
  %2857 = vmatpush1.msra.mxu0 0.0
  %2858 = vmatprep.subr.mxu0 0.0
  %2859 = vmatpush1.msra.mxu0 0.0
  %2860 = vmatprep.subr.mxu0 0.0
  %2861 = vmatpush1.msra.mxu0 0.0
  %2862 = vmatprep.subr.mxu0 0.0
  %2863 = vmatpush1.msra.mxu0 0.0
  %2864 = vmatprep.subr.mxu0 0.0
  %2865 = vmatpush1.msra.mxu0 0.0
  %2866 = vmatprep.subr.mxu0 0.0
  %2867 = vmatpush1.msra.mxu0 0.0
  %2868 = vmatprep.subr.mxu0 0.0
  %2869 = vmatpush1.msra.mxu0 0.0
  %2870 = vmatprep.subr.mxu0 0.0
  %2871 = vmatpush1.msra.mxu0 0.0
  %2872 = vmatprep.subr.mxu0 0.0
  %2873 = vmatpush1.msra.mxu0 0.0
  %2874 = vmatprep.subr.mxu0 0.0
  %2875 = vmatpush1.msra.mxu0 0.0
  %2876 = vmatprep.subr.mxu0 0.0
  %2877 = vmatpush1.msra.mxu0 0.0
  %2878 = vmatprep.subr.mxu0 0.0
  %2879 = vmatpush1.msra.mxu0 0.0
  %2880 = vmatprep.subr.mxu0 0.0
  %2881 = vmatpush1.msra.mxu0 0.0
  %2882 = vmatprep.subr.mxu0 0.0
  %2883 = vmatpush1.msra.mxu0 0.0
  %2884 = vmatprep.mubr.f32.mxu0 0.0
  %2885 = vmatmul.mubr.f32.gmra.mrb[0].mxu0 %v2688
  %v2886 = vpop.f32.mrb[0].mxu0
  %v2887 = vadd.f32 0.0, %v2886
  %v2888 = vpop.f32.mrb[0].mxu0
  %v2889 = vadd.f32 0.0, %v2888
  %2890 = vmatprep.mubr.f32.mxu0 0.0
  %2891 = vmatmul.mubr.f32.gmra.mrb[0].mxu0 %v2689
  %v2892 = vpop.f32.mrb[0].mxu0
  %v2893 = vadd.f32 0.0, %v2892
  %v2894 = vpop.f32.mrb[0].mxu0
  %v2895 = vadd.f32 0.0, %v2894
  %2896 = vmatprep.mubr.f32.mxu0 0.0
  %2897 = vmatmul.mubr.f32.gmra.mrb[0].mxu0 %v2690
  %v2898 = vpop.f32.mrb[0].mxu0
  %v2899 = vadd.f32 0.0, %v2898
  %v2900 = vpop.f32.mrb[0].mxu0
  %v2901 = vadd.f32 0.0, %v2900
  %2902 = vmatprep.mubr.f32.mxu0 0.0
  %2903 = vmatmul.mubr.f32.gmra.mrb[0].mxu0 %v2691
  %v2904 = vpop.f32.mrb[0].mxu0
  %v2905 = vadd.f32 0.0, %v2904
  %v2906 = vpop.f32.mrb[0].mxu0
  %v2907 = vadd.f32 0.0, %v2906
  %2908 = vdwg.mxu0
  %2909 = vmatprep.subr.mxu0 %v2695
  %2910 = vmatpush1.msra.mxu0 %v2694
  %2911 = vmatprep.subr.mxu0 %v2703
  %2912 = vmatpush1.msra.mxu0 %v2702
  %2913 = vmatprep.subr.mxu0 %v2711
  %2914 = vmatpush1.msra.mxu0 %v2710
  %2915 = vmatprep.subr.mxu0 %v2719
  %2916 = vmatpush1.msra.mxu0 %v2718
  %2917 = vmatprep.subr.mxu0 %v2727
  %2918 = vmatpush1.msra.mxu0 %v2726
  %2919 = vmatprep.subr.mxu0 %v2735
  %2920 = vmatpush1.msra.mxu0 %v2734
  %2921 = vmatprep.subr.mxu0 %v2743
  %2922 = vmatpush1.msra.mxu0 %v2742
  %2923 = vmatprep.subr.mxu0 %v2751
  %2924 = vmatpush1.msra.mxu0 %v2750
  %2925 = vmatprep.subr.mxu0 %v2759
  %2926 = vmatpush1.msra.mxu0 %v2758
  %2927 = vmatprep.subr.mxu0 %v2767
  %2928 = vmatpush1.msra.mxu0 %v2766
  %2929 = vmatprep.subr.mxu0 %v2775
  %2930 = vmatpush1.msra.mxu0 %v2774
  %2931 = vmatprep.subr.mxu0 %v2783
  %2932 = vmatpush1.msra.mxu0 %v2782
  %2933 = vmatprep.subr.mxu0 %v2791
  %2934 = vmatpush1.msra.mxu0 %v2790
  %2935 = vmatprep.subr.mxu0 %v2799
  %2936 = vmatpush1.msra.mxu0 %v2798
  %2937 = vmatprep.subr.mxu0 %v2807
  %2938 = vmatpush1.msra.mxu0 %v2806
  %2939 = vmatprep.subr.mxu0 %v2815
  %2940 = vmatpush1.msra.mxu0 %v2814
  %2941 = vmatprep.subr.mxu0 0.0
  %2942 = vmatpush1.msra.mxu0 0.0
  %2943 = vmatprep.subr.mxu0 0.0
  %2944 = vmatpush1.msra.mxu0 0.0
  %2945 = vmatprep.subr.mxu0 0.0
  %2946 = vmatpush1.msra.mxu0 0.0
  %2947 = vmatprep.subr.mxu0 0.0
  %2948 = vmatpush1.msra.mxu0 0.0
  %2949 = vmatprep.subr.mxu0 0.0
  %2950 = vmatpush1.msra.mxu0 0.0
  %2951 = vmatprep.subr.mxu0 0.0
  %2952 = vmatpush1.msra.mxu0 0.0
  %2953 = vmatprep.subr.mxu0 0.0
  %2954 = vmatpush1.msra.mxu0 0.0
  %2955 = vmatprep.subr.mxu0 0.0
  %2956 = vmatpush1.msra.mxu0 0.0
  %2957 = vmatprep.subr.mxu0 0.0
  %2958 = vmatpush1.msra.mxu0 0.0
  %2959 = vmatprep.subr.mxu0 0.0
  %2960 = vmatpush1.msra.mxu0 0.0
  %2961 = vmatprep.subr.mxu0 0.0
  %2962 = vmatpush1.msra.mxu0 0.0
  %2963 = vmatprep.subr.mxu0 0.0
  %2964 = vmatpush1.msra.mxu0 0.0
  %2965 = vmatprep.subr.mxu0 0.0
  %2966 = vmatpush1.msra.mxu0 0.0
  %2967 = vmatprep.subr.mxu0 0.0
  %2968 = vmatpush1.msra.mxu0 0.0
  %2969 = vmatprep.subr.mxu0 0.0
  %2970 = vmatpush1.msra.mxu0 0.0
  %2971 = vmatprep.subr.mxu0 0.0
  %2972 = vmatpush1.msra.mxu0 0.0
  %2973 = vmatprep.mubr.f32.mxu0 0.0
  %2974 = vmatmul.mubr.f32.gmra.mrb[0].mxu0 %v2688
  %v2975 = vpop.f32.mrb[0].mxu0
  %v2976 = vadd.f32 0.0, %v2975
  %v2977 = vpop.f32.mrb[0].mxu0
  %v2978 = vadd.f32 0.0, %v2977
  %2979 = vmatprep.mubr.f32.mxu0 0.0
  %2980 = vmatmul.mubr.f32.gmra.mrb[0].mxu0 %v2689
  %v2981 = vpop.f32.mrb[0].mxu0
  %v2982 = vadd.f32 0.0, %v2981
  %v2983 = vpop.f32.mrb[0].mxu0
  %v2984 = vadd.f32 0.0, %v2983
  %2985 = vmatprep.mubr.f32.mxu0 0.0
  %2986 = vmatmul.mubr.f32.gmra.mrb[0].mxu0 %v2690
  %v2987 = vpop.f32.mrb[0].mxu0
  %v2988 = vadd.f32 0.0, %v2987
  %v2989 = vpop.f32.mrb[0].mxu0
  %v2990 = vadd.f32 0.0, %v2989
  %2991 = vmatprep.mubr.f32.mxu0 0.0
  %2992 = vmatmul.mubr.f32.gmra.mrb[0].mxu0 %v2691
  %v2993 = vpop.f32.mrb[0].mxu0
  %v2994 = vadd.f32 0.0, %v2993
  %v2995 = vpop.f32.mrb[0].mxu0
  %v2996 = vadd.f32 0.0, %v2995
  %2997 = vdwg.mxu0
  %2998 = vmatprep.subr.mxu0 %v2697
  %2999 = vmatpush1.msra.mxu0 %v2696
  %3000 = vmatprep.subr.mxu0 %v2705
  %3001 = vmatpush1.msra.mxu0 %v2704
  %3002 = vmatprep.subr.mxu0 %v2713
  %3003 = vmatpush1.msra.mxu0 %v2712
  %3004 = vmatprep.subr.mxu0 %v2721
  %3005 = vmatpush1.msra.mxu0 %v2720
  %3006 = vmatprep.subr.mxu0 %v2729
  %3007 = vmatpush1.msra.mxu0 %v2728
  %3008 = vmatprep.subr.mxu0 %v2737
  %3009 = vmatpush1.msra.mxu0 %v2736
  %3010 = vmatprep.subr.mxu0 %v2745
  %3011 = vmatpush1.msra.mxu0 %v2744
  %3012 = vmatprep.subr.mxu0 %v2753
  %3013 = vmatpush1.msra.mxu0 %v2752
  %3014 = vmatprep.subr.mxu0 %v2761
  %3015 = vmatpush1.msra.mxu0 %v2760
  %3016 = vmatprep.subr.mxu0 %v2769
  %3017 = vmatpush1.msra.mxu0 %v2768
  %3018 = vmatprep.subr.mxu0 %v2777
  %3019 = vmatpush1.msra.mxu0 %v2776
  %3020 = vmatprep.subr.mxu0 %v2785
  %3021 = vmatpush1.msra.mxu0 %v2784
  %3022 = vmatprep.subr.mxu0 %v2793
  %3023 = vmatpush1.msra.mxu0 %v2792
  %3024 = vmatprep.subr.mxu0 %v2801
  %3025 = vmatpush1.msra.mxu0 %v2800
  %3026 = vmatprep.subr.mxu0 %v2809
  %3027 = vmatpush1.msra.mxu0 %v2808
  %3028 = vmatprep.subr.mxu0 %v2817
  %3029 = vmatpush1.msra.mxu0 %v2816
  %3030 = vmatprep.subr.mxu0 0.0
  %3031 = vmatpush1.msra.mxu0 0.0
  %3032 = vmatprep.subr.mxu0 0.0
  %3033 = vmatpush1.msra.mxu0 0.0
  %3034 = vmatprep.subr.mxu0 0.0
  %3035 = vmatpush1.msra.mxu0 0.0
  %3036 = vmatprep.subr.mxu0 0.0
  %3037 = vmatpush1.msra.mxu0 0.0
  %3038 = vmatprep.subr.mxu0 0.0
  %3039 = vmatpush1.msra.mxu0 0.0
  %3040 = vmatprep.subr.mxu0 0.0
  %3041 = vmatpush1.msra.mxu0 0.0
  %3042 = vmatprep.subr.mxu0 0.0
  %3043 = vmatpush1.msra.mxu0 0.0
  %3044 = vmatprep.subr.mxu0 0.0
  %3045 = vmatpush1.msra.mxu0 0.0
  %3046 = vmatprep.subr.mxu0 0.0
  %3047 = vmatpush1.msra.mxu0 0.0
  %3048 = vmatprep.subr.mxu0 0.0
  %3049 = vmatpush1.msra.mxu0 0.0
  %3050 = vmatprep.subr.mxu0 0.0
  %3051 = vmatpush1.msra.mxu0 0.0
  %3052 = vmatprep.subr.mxu0 0.0
  %3053 = vmatpush1.msra.mxu0 0.0
  %3054 = vmatprep.subr.mxu0 0.0
  %3055 = vmatpush1.msra.mxu0 0.0
  %3056 = vmatprep.subr.mxu0 0.0
  %3057 = vmatpush1.msra.mxu0 0.0
  %3058 = vmatprep.subr.mxu0 0.0
  %3059 = vmatpush1.msra.mxu0 0.0
  %3060 = vmatprep.subr.mxu0 0.0
  %3061 = vmatpush1.msra.mxu0 0.0
  %3062 = vmatprep.mubr.f32.mxu0 0.0
  %3063 = vmatmul.mubr.f32.gmra.mrb[0].mxu0 %v2688
  %v3064 = vpop.f32.mrb[0].mxu0
  %v3065 = vadd.f32 0.0, %v3064
  %v3066 = vpop.f32.mrb[0].mxu0
  %v3067 = vadd.f32 0.0, %v3066
  %3068 = vmatprep.mubr.f32.mxu0 0.0
  %3069 = vmatmul.mubr.f32.gmra.mrb[0].mxu0 %v2689
  %v3070 = vpop.f32.mrb[0].mxu0
  %v3071 = vadd.f32 0.0, %v3070
  %v3072 = vpop.f32.mrb[0].mxu0
  %v3073 = vadd.f32 0.0, %v3072
  %3074 = vmatprep.mubr.f32.mxu0 0.0
  %3075 = vmatmul.mubr.f32.gmra.mrb[0].mxu0 %v2690
  %v3076 = vpop.f32.mrb[0].mxu0
  %v3077 = vadd.f32 0.0, %v3076
  %v3078 = vpop.f32.mrb[0].mxu0
  %v3079 = vadd.f32 0.0, %v3078
  %3080 = vmatprep.mubr.f32.mxu0 0.0
  %3081 = vmatmul.mubr.f32.gmra.mrb[0].mxu0 %v2691
  %v3082 = vpop.f32.mrb[0].mxu0
  %v3083 = vadd.f32 0.0, %v3082
  %v3084 = vpop.f32.mrb[0].mxu0
  %v3085 = vadd.f32 0.0, %v3084
  %3086 = vdwg.mxu0
  %3087 = vmatprep.subr.mxu0 %v2699
  %3088 = vmatpush1.msra.mxu0 %v2698
  %3089 = vmatprep.subr.mxu0 %v2707
  %3090 = vmatpush1.msra.mxu0 %v2706
  %3091 = vmatprep.subr.mxu0 %v2715
  %3092 = vmatpush1.msra.mxu0 %v2714
  %3093 = vmatprep.subr.mxu0 %v2723
  %3094 = vmatpush1.msra.mxu0 %v2722
  %3095 = vmatprep.subr.mxu0 %v2731
  %3096 = vmatpush1.msra.mxu0 %v2730
  %3097 = vmatprep.subr.mxu0 %v2739
  %3098 = vmatpush1.msra.mxu0 %v2738
  %3099 = vmatprep.subr.mxu0 %v2747
  %3100 = vmatpush1.msra.mxu0 %v2746
  %3101 = vmatprep.subr.mxu0 %v2755
  %3102 = vmatpush1.msra.mxu0 %v2754
  %3103 = vmatprep.subr.mxu0 %v2763
  %3104 = vmatpush1.msra.mxu0 %v2762
  %3105 = vmatprep.subr.mxu0 %v2771
  %3106 = vmatpush1.msra.mxu0 %v2770
  %3107 = vmatprep.subr.mxu0 %v2779
  %3108 = vmatpush1.msra.mxu0 %v2778
  %3109 = vmatprep.subr.mxu0 %v2787
  %3110 = vmatpush1.msra.mxu0 %v2786
  %3111 = vmatprep.subr.mxu0 %v2795
  %3112 = vmatpush1.msra.mxu0 %v2794
  %3113 = vmatprep.subr.mxu0 %v2803
  %3114 = vmatpush1.msra.mxu0 %v2802
  %3115 = vmatprep.subr.mxu0 %v2811
  %3116 = vmatpush1.msra.mxu0 %v2810
  %3117 = vmatprep.subr.mxu0 %v2819
  %3118 = vmatpush1.msra.mxu0 %v2818
  %3119 = vmatprep.subr.mxu0 0.0
  %3120 = vmatpush1.msra.mxu0 0.0
  %3121 = vmatprep.subr.mxu0 0.0
  %3122 = vmatpush1.msra.mxu0 0.0
  %3123 = vmatprep.subr.mxu0 0.0
  %3124 = vmatpush1.msra.mxu0 0.0
  %3125 = vmatprep.subr.mxu0 0.0
  %3126 = vmatpush1.msra.mxu0 0.0
  %3127 = vmatprep.subr.mxu0 0.0
  %3128 = vmatpush1.msra.mxu0 0.0
  %3129 = vmatprep.subr.mxu0 0.0
  %3130 = vmatpush1.msra.mxu0 0.0
  %3131 = vmatprep.subr.mxu0 0.0
  %3132 = vmatpush1.msra.mxu0 0.0
  %3133 = vmatprep.subr.mxu0 0.0
  %3134 = vmatpush1.msra.mxu0 0.0
  %3135 = vmatprep.subr.mxu0 0.0
  %3136 = vmatpush1.msra.mxu0 0.0
  %3137 = vmatprep.subr.mxu0 0.0
  %3138 = vmatpush1.msra.mxu0 0.0
  %3139 = vmatprep.subr.mxu0 0.0
  %3140 = vmatpush1.msra.mxu0 0.0
  %3141 = vmatprep.subr.mxu0 0.0
  %3142 = vmatpush1.msra.mxu0 0.0
  %3143 = vmatprep.subr.mxu0 0.0
  %3144 = vmatpush1.msra.mxu0 0.0
  %3145 = vmatprep.subr.mxu0 0.0
  %3146 = vmatpush1.msra.mxu0 0.0
  %3147 = vmatprep.subr.mxu0 0.0
  %3148 = vmatpush1.msra.mxu0 0.0
  %3149 = vmatprep.subr.mxu0 0.0
  %3150 = vmatpush1.msra.mxu0 0.0
  %3151 = vmatprep.mubr.f32.mxu0 0.0
  %3152 = vmatmul.mubr.f32.gmra.mrb[0].mxu0 %v2688
  %v3153 = vpop.f32.mrb[0].mxu0
  %v3154 = vadd.f32 0.0, %v3153
  %v3155 = vpop.f32.mrb[0].mxu0
  %v3156 = vadd.f32 0.0, %v3155
  %3157 = vmatprep.mubr.f32.mxu0 0.0
  %3158 = vmatmul.mubr.f32.gmra.mrb[0].mxu0 %v2689
  %v3159 = vpop.f32.mrb[0].mxu0
  %v3160 = vadd.f32 0.0, %v3159
  %v3161 = vpop.f32.mrb[0].mxu0
  %v3162 = vadd.f32 0.0, %v3161
  %3163 = vmatprep.mubr.f32.mxu0 0.0
  %3164 = vmatmul.mubr.f32.gmra.mrb[0].mxu0 %v2690
  %v3165 = vpop.f32.mrb[0].mxu0
  %v3166 = vadd.f32 0.0, %v3165
  %v3167 = vpop.f32.mrb[0].mxu0
  %v3168 = vadd.f32 0.0, %v3167
  %3169 = vmatprep.mubr.f32.mxu0 0.0
  %3170 = vmatmul.mubr.f32.gmra.mrb[0].mxu0 %v2691
  %v3171 = vpop.f32.mrb[0].mxu0
  %v3172 = vadd.f32 0.0, %v3171
  %v3173 = vpop.f32.mrb[0].mxu0
  %v3174 = vadd.f32 0.0, %v3173
  %3175 = vdwg.mxu0
  %v3176 = vld [vmem:[%s7] sm:$0xff]
  %v3177 = vld [vmem:[%s7 + $0x8] sm:$0xff]
  %v3178 = vld [vmem:[%s7 + $0x10] sm:$0xff]
  %v3179 = vld [vmem:[%s7 + $0x18] sm:$0xff]
  %v3180 = vmul.f32 %v2887, %v3176
  %v3181 = vmul.f32 %v2893, %v3177
  %v3182 = vmul.f32 %v2899, %v3178
  %v3183 = vmul.f32 %v2905, %v3179
  %v3184 = vld [vmem:[%s9] sm:$0xff]
  %v3185 = vld [vmem:[%s9 + $0x8] sm:$0xff]
  %v3186 = vld [vmem:[%s9 + $0x10] sm:$0xff]
  %v3187 = vld [vmem:[%s9 + $0x18] sm:$0xff]
  %v3188 = vmul.f32 %v2887, %v3184
  %v3189 = vmul.f32 %v2893, %v3185
  %v3190 = vmul.f32 %v2899, %v3186
  %v3191 = vmul.f32 %v2905, %v3187
  %s3192 = scalar_lea.vmem %s7, 32
  %v3193 = vld [vmem:[%s3192] sm:$0xff]
  %v3194 = vld [vmem:[%s3192 + $0x8] sm:$0xff]
  %v3195 = vld [vmem:[%s3192 + $0x10] sm:$0xff]
  %v3196 = vld [vmem:[%s3192 + $0x18] sm:$0xff]
  %v3197 = vmul.f32 %v2889, %v3193
  %v3198 = vmul.f32 %v2895, %v3194
  %v3199 = vmul.f32 %v2901, %v3195
  %v3200 = vmul.f32 %v2907, %v3196
  %s3201 = scalar_lea.vmem %s9, 32
  %v3202 = vld [vmem:[%s3201] sm:$0xff]
  %v3203 = vld [vmem:[%s3201 + $0x8] sm:$0xff]
  %v3204 = vld [vmem:[%s3201 + $0x10] sm:$0xff]
  %v3205 = vld [vmem:[%s3201 + $0x18] sm:$0xff]
  %v3206 = vmul.f32 %v2889, %v3202
  %v3207 = vmul.f32 %v2895, %v3203
  %v3208 = vmul.f32 %v2901, %v3204
  %v3209 = vmul.f32 %v2907, %v3205
  %v3210 = vadd.f32 %v3180, %v3197
  %v3211 = vadd.f32 %v3181, %v3198
  %v3212 = vadd.f32 %v3182, %v3199
  %v3213 = vadd.f32 %v3183, %v3200
  %v3214 = vadd.f32 %v3188, %v3206
  %v3215 = vadd.f32 %v3189, %v3207
  %v3216 = vadd.f32 %v3190, %v3208
  %v3217 = vadd.f32 %v3191, %v3209
  %s3218 = scalar_lea.vmem %s7, 64
  %v3219 = vld [vmem:[%s3218] sm:$0xff]
  %v3220 = vld [vmem:[%s3218 + $0x8] sm:$0xff]
  %v3221 = vld [vmem:[%s3218 + $0x10] sm:$0xff]
  %v3222 = vld [vmem:[%s3218 + $0x18] sm:$0xff]
  %v3223 = vmul.f32 %v2976, %v3219
  %v3224 = vmul.f32 %v2982, %v3220
  %v3225 = vmul.f32 %v2988, %v3221
  %v3226 = vmul.f32 %v2994, %v3222
  %s3227 = scalar_lea.vmem %s9, 64
  %v3228 = vld [vmem:[%s3227] sm:$0xff]
  %v3229 = vld [vmem:[%s3227 + $0x8] sm:$0xff]
  %v3230 = vld [vmem:[%s3227 + $0x10] sm:$0xff]
  %v3231 = vld [vmem:[%s3227 + $0x18] sm:$0xff]
  %v3232 = vmul.f32 %v2976, %v3228
  %v3233 = vmul.f32 %v2982, %v3229
  %v3234 = vmul.f32 %v2988, %v3230
  %v3235 = vmul.f32 %v2994, %v3231
  %v3236 = vadd.f32 %v3210, %v3223
  %v3237 = vadd.f32 %v3211, %v3224
  %v3238 = vadd.f32 %v3212, %v3225
  %v3239 = vadd.f32 %v3213, %v3226
  %v3240 = vadd.f32 %v3214, %v3232
  %v3241 = vadd.f32 %v3215, %v3233
  %v3242 = vadd.f32 %v3216, %v3234
  %v3243 = vadd.f32 %v3217, %v3235
  %s3244 = scalar_lea.vmem %s7, 96
  %v3245 = vld [vmem:[%s3244] sm:$0xff]
  %v3246 = vld [vmem:[%s3244 + $0x8] sm:$0xff]
  %v3247 = vld [vmem:[%s3244 + $0x10] sm:$0xff]
  %v3248 = vld [vmem:[%s3244 + $0x18] sm:$0xff]
  %v3249 = vmul.f32 %v2978, %v3245
  %v3250 = vmul.f32 %v2984, %v3246
  %v3251 = vmul.f32 %v2990, %v3247
  %v3252 = vmul.f32 %v2996, %v3248
  %s3253 = scalar_lea.vmem %s9, 96
  %v3254 = vld [vmem:[%s3253] sm:$0xff]
  %v3255 = vld [vmem:[%s3253 + $0x8] sm:$0xff]
  %v3256 = vld [vmem:[%s3253 + $0x10] sm:$0xff]
  %v3257 = vld [vmem:[%s3253 + $0x18] sm:$0xff]
  %v3258 = vmul.f32 %v2978, %v3254
  %v3259 = vmul.f32 %v2984, %v3255
  %v3260 = vmul.f32 %v2990, %v3256
  %v3261 = vmul.f32 %v2996, %v3257
  %v3262 = vadd.f32 %v3236, %v3249
  %v3263 = vadd.f32 %v3237, %v3250
  %v3264 = vadd.f32 %v3238, %v3251
  %v3265 = vadd.f32 %v3239, %v3252
  %v3266 = vadd.f32 %v3240, %v3258
  %v3267 = vadd.f32 %v3241, %v3259
  %v3268 = vadd.f32 %v3242, %v3260
  %v3269 = vadd.f32 %v3243, %v3261
  %s3270 = scalar_lea.vmem %s7, 128
  %v3271 = vld [vmem:[%s3270] sm:$0xff]
  %v3272 = vld [vmem:[%s3270 + $0x8] sm:$0xff]
  %v3273 = vld [vmem:[%s3270 + $0x10] sm:$0xff]
  %v3274 = vld [vmem:[%s3270 + $0x18] sm:$0xff]
  %v3275 = vmul.f32 %v3065, %v3271
  %v3276 = vmul.f32 %v3071, %v3272
  %v3277 = vmul.f32 %v3077, %v3273
  %v3278 = vmul.f32 %v3083, %v3274
  %s3279 = scalar_lea.vmem %s9, 128
  %v3280 = vld [vmem:[%s3279] sm:$0xff]
  %v3281 = vld [vmem:[%s3279 + $0x8] sm:$0xff]
  %v3282 = vld [vmem:[%s3279 + $0x10] sm:$0xff]
  %v3283 = vld [vmem:[%s3279 + $0x18] sm:$0xff]
  %v3284 = vmul.f32 %v3065, %v3280
  %v3285 = vmul.f32 %v3071, %v3281
  %v3286 = vmul.f32 %v3077, %v3282
  %v3287 = vmul.f32 %v3083, %v3283
  %v3288 = vadd.f32 %v3262, %v3275
  %v3289 = vadd.f32 %v3263, %v3276
  %v3290 = vadd.f32 %v3264, %v3277
  %v3291 = vadd.f32 %v3265, %v3278
  %v3292 = vadd.f32 %v3266, %v3284
  %v3293 = vadd.f32 %v3267, %v3285
  %v3294 = vadd.f32 %v3268, %v3286
  %v3295 = vadd.f32 %v3269, %v3287
  %s3296 = scalar_lea.vmem %s7, 160
  %v3297 = vld [vmem:[%s3296] sm:$0xff]
  %v3298 = vld [vmem:[%s3296 + $0x8] sm:$0xff]
  %v3299 = vld [vmem:[%s3296 + $0x10] sm:$0xff]
  %v3300 = vld [vmem:[%s3296 + $0x18] sm:$0xff]
  %v3301 = vmul.f32 %v3067, %v3297
  %v3302 = vmul.f32 %v3073, %v3298
  %v3303 = vmul.f32 %v3079, %v3299
  %v3304 = vmul.f32 %v3085, %v3300
  %s3305 = scalar_lea.vmem %s9, 160
  %v3306 = vld [vmem:[%s3305] sm:$0xff]
  %v3307 = vld [vmem:[%s3305 + $0x8] sm:$0xff]
  %v3308 = vld [vmem:[%s3305 + $0x10] sm:$0xff]
  %v3309 = vld [vmem:[%s3305 + $0x18] sm:$0xff]
  %v3310 = vmul.f32 %v3067, %v3306
  %v3311 = vmul.f32 %v3073, %v3307
  %v3312 = vmul.f32 %v3079, %v3308
  %v3313 = vmul.f32 %v3085, %v3309
  %v3314 = vadd.f32 %v3288, %v3301
  %v3315 = vadd.f32 %v3289, %v3302
  %v3316 = vadd.f32 %v3290, %v3303
  %v3317 = vadd.f32 %v3291, %v3304
  %v3318 = vadd.f32 %v3292, %v3310
  %v3319 = vadd.f32 %v3293, %v3311
  %v3320 = vadd.f32 %v3294, %v3312
  %v3321 = vadd.f32 %v3295, %v3313
  %s3322 = scalar_lea.vmem %s7, 192
  %v3323 = vld [vmem:[%s3322] sm:$0xff]
  %v3324 = vld [vmem:[%s3322 + $0x8] sm:$0xff]
  %v3325 = vld [vmem:[%s3322 + $0x10] sm:$0xff]
  %v3326 = vld [vmem:[%s3322 + $0x18] sm:$0xff]
  %v3327 = vmul.f32 %v3154, %v3323
  %v3328 = vmul.f32 %v3160, %v3324
  %v3329 = vmul.f32 %v3166, %v3325
  %v3330 = vmul.f32 %v3172, %v3326
  %s3331 = scalar_lea.vmem %s9, 192
  %v3332 = vld [vmem:[%s3331] sm:$0xff]
  %v3333 = vld [vmem:[%s3331 + $0x8] sm:$0xff]
  %v3334 = vld [vmem:[%s3331 + $0x10] sm:$0xff]
  %v3335 = vld [vmem:[%s3331 + $0x18] sm:$0xff]
  %v3336 = vmul.f32 %v3154, %v3332
  %v3337 = vmul.f32 %v3160, %v3333
  %v3338 = vmul.f32 %v3166, %v3334
  %v3339 = vmul.f32 %v3172, %v3335
  %v3340 = vadd.f32 %v3314, %v3327
  %v3341 = vadd.f32 %v3315, %v3328
  %v3342 = vadd.f32 %v3316, %v3329
  %v3343 = vadd.f32 %v3317, %v3330
  %v3344 = vadd.f32 %v3318, %v3336
  %v3345 = vadd.f32 %v3319, %v3337
  %v3346 = vadd.f32 %v3320, %v3338
  %v3347 = vadd.f32 %v3321, %v3339
  %s3348 = scalar_lea.vmem %s7, 224
  %v3349 = vld [vmem:[%s3348] sm:$0xff]
  %v3350 = vld [vmem:[%s3348 + $0x8] sm:$0xff]
  %v3351 = vld [vmem:[%s3348 + $0x10] sm:$0xff]
  %v3352 = vld [vmem:[%s3348 + $0x18] sm:$0xff]
  %v3353 = vmul.f32 %v3156, %v3349
  %v3354 = vmul.f32 %v3162, %v3350
  %v3355 = vmul.f32 %v3168, %v3351
  %v3356 = vmul.f32 %v3174, %v3352
  %s3357 = scalar_lea.vmem %s9, 224
  %v3358 = vld [vmem:[%s3357] sm:$0xff]
  %v3359 = vld [vmem:[%s3357 + $0x8] sm:$0xff]
  %v3360 = vld [vmem:[%s3357 + $0x10] sm:$0xff]
  %v3361 = vld [vmem:[%s3357 + $0x18] sm:$0xff]
  %v3362 = vmul.f32 %v3156, %v3358
  %v3363 = vmul.f32 %v3162, %v3359
  %v3364 = vmul.f32 %v3168, %v3360
  %v3365 = vmul.f32 %v3174, %v3361
  %v3366 = vadd.f32 %v3340, %v3353
  %v3367 = vadd.f32 %v3341, %v3354
  %v3368 = vadd.f32 %v3342, %v3355
  %v3369 = vadd.f32 %v3343, %v3356
  %v3370 = vadd.f32 %v3344, %v3362
  %v3371 = vadd.f32 %v3345, %v3363
  %v3372 = vadd.f32 %v3346, %v3364
  %v3373 = vadd.f32 %v3347, %v3365
  %v3374 = vrot.slane %v3366, 7
  %v3375 = vrot.slane %v3367, 7
  %v3376 = vrot.slane %v3368, 7
  %v3377 = vrot.slane %v3369, 7
  %v3378 = vsel %vm770, %v3376, %v3377
  %v3379 = vsel %vm770, %v3375, %v3376
  %v3380 = vsel %vm770, %v3374, %v3375
  %v3381 = vsel %vm770, %v3377, %v3374
  %v3382 = vmul.f32 %v3381, %v2230
  %v3383 = vmul.f32 %v3380, %v2235
  %v3384 = vmul.f32 %v3379, %v2240
  %v3385 = vmul.f32 %v3378, %v2245
  %v3386 = vrot.slane %v3366, 1
  %v3387 = vrot.slane %v3367, 1
  %v3388 = vrot.slane %v3368, 1
  %v3389 = vrot.slane %v3369, 1
  %v3390 = vsel %vm789, %v3388, %v3389
  %v3391 = vsel %vm789, %v3387, %v3388
  %v3392 = vsel %vm789, %v3386, %v3387
  %v3393 = vsel %vm789, %v3389, %v3386
  %v3394 = vmul.f32 %v3392, %v2266
  %v3395 = vmul.f32 %v3391, %v2271
  %v3396 = vmul.f32 %v3390, %v2276
  %v3397 = vmul.f32 %v3393, %v2281
  %v3398 = vrot.slane %v3370, 7
  %v3399 = vrot.slane %v3371, 7
  %v3400 = vrot.slane %v3372, 7
  %v3401 = vrot.slane %v3373, 7
  %v3402 = vsel %vm770, %v3400, %v3401
  %v3403 = vsel %vm770, %v3399, %v3400
  %v3404 = vsel %vm770, %v3398, %v3399
  %v3405 = vsel %vm770, %v3401, %v3398
  %v3406 = vmul.f32 %v3405, %v2230
  %v3407 = vmul.f32 %v3404, %v2235
  %v3408 = vmul.f32 %v3403, %v2240
  %v3409 = vmul.f32 %v3402, %v2245
  %v3410 = vrot.slane %v3370, 1
  %v3411 = vrot.slane %v3371, 1
  %v3412 = vrot.slane %v3372, 1
  %v3413 = vrot.slane %v3373, 1
  %v3414 = vsel %vm789, %v3412, %v3413
  %v3415 = vsel %vm789, %v3411, %v3412
  %v3416 = vsel %vm789, %v3410, %v3411
  %v3417 = vsel %vm789, %v3413, %v3410
  %v3418 = vmul.f32 %v3416, %v2266
  %v3419 = vmul.f32 %v3415, %v2271
  %v3420 = vmul.f32 %v3414, %v2276
  %v3421 = vmul.f32 %v3417, %v2281
  %3426 = vrot.lane.b32.xlu0 %v3382, 64
  %v3427 = vpop.permute.xlu0 %3426
  %3428 = vrot.lane.b32.xlu0 %v3383, 64
  %v3429 = vpop.permute.xlu0 %3428
  %3430 = vrot.lane.b32.xlu0 %v3384, 64
  %v3431 = vpop.permute.xlu0 %3430
  %3432 = vrot.lane.b32.xlu0 %v3385, 64
  %v3433 = vpop.permute.xlu0 %3432
  %3442 = vrot.lane.b32.xlu0 %v3366, 64
  %v3443 = vpop.permute.xlu0 %3442
  %3444 = vrot.lane.b32.xlu0 %v3367, 64
  %v3445 = vpop.permute.xlu0 %3444
  %3446 = vrot.lane.b32.xlu0 %v3368, 64
  %v3447 = vpop.permute.xlu0 %3446
  %3448 = vrot.lane.b32.xlu0 %v3369, 64
  %v3449 = vpop.permute.xlu0 %3448
  %3458 = vrot.lane.b32.xlu0 %v3394, 64
  %v3459 = vpop.permute.xlu0 %3458
  %3460 = vrot.lane.b32.xlu0 %v3395, 64
  %v3461 = vpop.permute.xlu0 %3460
  %3462 = vrot.lane.b32.xlu0 %v3396, 64
  %v3463 = vpop.permute.xlu0 %3462
  %3464 = vrot.lane.b32.xlu0 %v3397, 64
  %v3465 = vpop.permute.xlu0 %3464
  %3474 = vrot.lane.b32.xlu0 %v3406, 64
  %v3475 = vpop.permute.xlu0 %3474
  %3476 = vrot.lane.b32.xlu0 %v3407, 64
  %v3477 = vpop.permute.xlu0 %3476
  %3478 = vrot.lane.b32.xlu0 %v3408, 64
  %v3479 = vpop.permute.xlu0 %3478
  %3480 = vrot.lane.b32.xlu0 %v3409, 64
  %v3481 = vpop.permute.xlu0 %3480
  %3490 = vrot.lane.b32.xlu0 %v3370, 64
  %v3491 = vpop.permute.xlu0 %3490
  %3492 = vrot.lane.b32.xlu0 %v3371, 64
  %v3493 = vpop.permute.xlu0 %3492
  %3494 = vrot.lane.b32.xlu0 %v3372, 64
  %v3495 = vpop.permute.xlu0 %3494
  %3496 = vrot.lane.b32.xlu0 %v3373, 64
  %v3497 = vpop.permute.xlu0 %3496
  %3506 = vrot.lane.b32.xlu0 %v3418, 64
  %v3507 = vpop.permute.xlu0 %3506
  %3508 = vrot.lane.b32.xlu0 %v3419, 64
  %v3509 = vpop.permute.xlu0 %3508
  %3510 = vrot.lane.b32.xlu0 %v3420, 64
  %v3511 = vpop.permute.xlu0 %3510
  %3512 = vrot.lane.b32.xlu0 %v3421, 64
  %v3513 = vpop.permute.xlu0 %3512
  %v3518 = vsel %vm814, %v2283, %v3427
  %v3519 = vsel %vm814, %v2284, %v3429
  %v3520 = vsel %vm814, %v2285, %v3431
  %v3521 = vsel %vm814, %v2286, %v3433
  %v3522 = vsel %vm814, %v3427, %v3443
  %v3523 = vsel %vm814, %v3429, %v3445
  %v3524 = vsel %vm814, %v3431, %v3447
  %v3525 = vsel %vm814, %v3433, %v3449
  %v3526 = vsel %vm814, %v3443, %v3459
  %v3527 = vsel %vm814, %v3445, %v3461
  %v3528 = vsel %vm814, %v3447, %v3463
  %v3529 = vsel %vm814, %v3449, %v3465
  %v3530 = vsel %vm814, %v3459, %v3475
  %v3531 = vsel %vm814, %v3461, %v3477
  %v3532 = vsel %vm814, %v3463, %v3479
  %v3533 = vsel %vm814, %v3465, %v3481
  %v3534 = vsel %vm814, %v3475, %v3491
  %v3535 = vsel %vm814, %v3477, %v3493
  %v3536 = vsel %vm814, %v3479, %v3495
  %v3537 = vsel %vm814, %v3481, %v3497
  %v3538 = vsel %vm814, %v3491, %v3507
  %v3539 = vsel %vm814, %v3493, %v3509
  %v3540 = vsel %vm814, %v3495, %v3511
  %v3541 = vsel %vm814, %v3497, %v3513
  %v3542 = vld [vmem:[%s27] sm:$0xff]
  %v3543 = vld [vmem:[%s27 + $0x8] sm:$0xff]
  %v3544 = vld [vmem:[%s27 + $0x10] sm:$0xff]
  %v3545 = vld [vmem:[%s27 + $0x18] sm:$0xff]
  %v3546 = vld [vmem:[%s27 + $0x20] sm:$0xff]
  %v3547 = vld [vmem:[%s27 + $0x28] sm:$0xff]
  %v3548 = vld [vmem:[%s27 + $0x30] sm:$0xff]
  %v3549 = vld [vmem:[%s27 + $0x38] sm:$0xff]
  %v3550 = vld [vmem:[%s27 + $0x40] sm:$0xff]
  %v3551 = vld [vmem:[%s27 + $0x48] sm:$0xff]
  %v3552 = vld [vmem:[%s27 + $0x50] sm:$0xff]
  %v3553 = vld [vmem:[%s27 + $0x58] sm:$0xff]
  %v3554 = vld [vmem:[%s27 + $0x60] sm:$0xff]
  %v3555 = vld [vmem:[%s27 + $0x68] sm:$0xff]
  %v3556 = vld [vmem:[%s27 + $0x70] sm:$0xff]
  %v3557 = vld [vmem:[%s27 + $0x78] sm:$0xff]
  %v3558 = vld [vmem:[%s27 + $0x80] sm:$0xff]
  %v3559 = vld [vmem:[%s27 + $0x88] sm:$0xff]
  %v3560 = vld [vmem:[%s27 + $0x90] sm:$0xff]
  %v3561 = vld [vmem:[%s27 + $0x98] sm:$0xff]
  %v3562 = vld [vmem:[%s27 + $0xa0] sm:$0xff]
  %v3563 = vld [vmem:[%s27 + $0xa8] sm:$0xff]
  %v3564 = vld [vmem:[%s27 + $0xb0] sm:$0xff]
  %v3565 = vld [vmem:[%s27 + $0xb8] sm:$0xff]
  %v3566 = vld [vmem:[%s27 + $0xc0] sm:$0xff]
  %v3567 = vld [vmem:[%s27 + $0xc8] sm:$0xff]
  %v3568 = vld [vmem:[%s27 + $0xd0] sm:$0xff]
  %v3569 = vld [vmem:[%s27 + $0xd8] sm:$0xff]
  %v3570 = vld [vmem:[%s27 + $0xe0] sm:$0xff]
  %v3571 = vld [vmem:[%s27 + $0xe8] sm:$0xff]
  %v3572 = vld [vmem:[%s27 + $0xf0] sm:$0xff]
  %v3573 = vld [vmem:[%s27 + $0xf8] sm:$0xff]
  %v3574 = vld [vmem:[%s27 + $0x100] sm:$0xff]
  %v3575 = vld [vmem:[%s27 + $0x108] sm:$0xff]
  %v3576 = vld [vmem:[%s27 + $0x110] sm:$0xff]
  %v3577 = vld [vmem:[%s27 + $0x118] sm:$0xff]
  %v3578 = vld [vmem:[%s27 + $0x120] sm:$0xff]
  %v3579 = vld [vmem:[%s27 + $0x128] sm:$0xff]
  %v3580 = vld [vmem:[%s27 + $0x130] sm:$0xff]
  %v3581 = vld [vmem:[%s27 + $0x138] sm:$0xff]
  %v3582 = vld [vmem:[%s27 + $0x140] sm:$0xff]
  %v3583 = vld [vmem:[%s27 + $0x148] sm:$0xff]
  %v3584 = vld [vmem:[%s27 + $0x150] sm:$0xff]
  %v3585 = vld [vmem:[%s27 + $0x158] sm:$0xff]
  %v3586 = vld [vmem:[%s27 + $0x160] sm:$0xff]
  %v3587 = vld [vmem:[%s27 + $0x168] sm:$0xff]
  %v3588 = vld [vmem:[%s27 + $0x170] sm:$0xff]
  %v3589 = vld [vmem:[%s27 + $0x178] sm:$0xff]
  %v3590 = vld [vmem:[%s27 + $0x180] sm:$0xff]
  %v3591 = vld [vmem:[%s27 + $0x188] sm:$0xff]
  %v3592 = vld [vmem:[%s27 + $0x190] sm:$0xff]
  %v3593 = vld [vmem:[%s27 + $0x198] sm:$0xff]
  %v3594 = vld [vmem:[%s27 + $0x1a0] sm:$0xff]
  %v3595 = vld [vmem:[%s27 + $0x1a8] sm:$0xff]
  %v3596 = vld [vmem:[%s27 + $0x1b0] sm:$0xff]
  %v3597 = vld [vmem:[%s27 + $0x1b8] sm:$0xff]
  %v3598 = vld [vmem:[%s27 + $0x1c0] sm:$0xff]
  %v3599 = vld [vmem:[%s27 + $0x1c8] sm:$0xff]
  %v3600 = vld [vmem:[%s27 + $0x1d0] sm:$0xff]
  %v3601 = vld [vmem:[%s27 + $0x1d8] sm:$0xff]
  %v3602 = vld [vmem:[%s27 + $0x1e0] sm:$0xff]
  %v3603 = vld [vmem:[%s27 + $0x1e8] sm:$0xff]
  %v3604 = vld [vmem:[%s27 + $0x1f0] sm:$0xff]
  %v3605 = vld [vmem:[%s27 + $0x1f8] sm:$0xff]
  %v3606 = vld [vmem:[%s27 + $0x200] sm:$0xff]
  %v3607 = vld [vmem:[%s27 + $0x208] sm:$0xff]
  %v3608 = vld [vmem:[%s27 + $0x210] sm:$0xff]
  %v3609 = vld [vmem:[%s27 + $0x218] sm:$0xff]
  %v3610 = vld [vmem:[%s27 + $0x220] sm:$0xff]
  %v3611 = vld [vmem:[%s27 + $0x228] sm:$0xff]
  %v3612 = vld [vmem:[%s27 + $0x230] sm:$0xff]
  %v3613 = vld [vmem:[%s27 + $0x238] sm:$0xff]
  %v3614 = vld [vmem:[%s27 + $0x240] sm:$0xff]
  %v3615 = vld [vmem:[%s27 + $0x248] sm:$0xff]
  %v3616 = vld [vmem:[%s27 + $0x250] sm:$0xff]
  %v3617 = vld [vmem:[%s27 + $0x258] sm:$0xff]
  %v3618 = vld [vmem:[%s27 + $0x260] sm:$0xff]
  %v3619 = vld [vmem:[%s27 + $0x268] sm:$0xff]
  %v3620 = vld [vmem:[%s27 + $0x270] sm:$0xff]
  %v3621 = vld [vmem:[%s27 + $0x278] sm:$0xff]
  %v3622 = vld [vmem:[%s27 + $0x280] sm:$0xff]
  %v3623 = vld [vmem:[%s27 + $0x288] sm:$0xff]
  %v3624 = vld [vmem:[%s27 + $0x290] sm:$0xff]
  %v3625 = vld [vmem:[%s27 + $0x298] sm:$0xff]
  %v3626 = vld [vmem:[%s27 + $0x2a0] sm:$0xff]
  %v3627 = vld [vmem:[%s27 + $0x2a8] sm:$0xff]
  %v3628 = vld [vmem:[%s27 + $0x2b0] sm:$0xff]
  %v3629 = vld [vmem:[%s27 + $0x2b8] sm:$0xff]
  %v3630 = vld [vmem:[%s27 + $0x2c0] sm:$0xff]
  %v3631 = vld [vmem:[%s27 + $0x2c8] sm:$0xff]
  %v3632 = vld [vmem:[%s27 + $0x2d0] sm:$0xff]
  %v3633 = vld [vmem:[%s27 + $0x2d8] sm:$0xff]
  %v3634 = vld [vmem:[%s27 + $0x2e0] sm:$0xff]
  %v3635 = vld [vmem:[%s27 + $0x2e8] sm:$0xff]
  %v3636 = vld [vmem:[%s27 + $0x2f0] sm:$0xff]
  %v3637 = vld [vmem:[%s27 + $0x2f8] sm:$0xff]
  %v3638 = vld [vmem:[%s27 + $0x300] sm:$0xff]
  %v3639 = vld [vmem:[%s27 + $0x308] sm:$0xff]
  %v3640 = vld [vmem:[%s27 + $0x310] sm:$0xff]
  %v3641 = vld [vmem:[%s27 + $0x318] sm:$0xff]
  %v3642 = vld [vmem:[%s27 + $0x320] sm:$0xff]
  %v3643 = vld [vmem:[%s27 + $0x328] sm:$0xff]
  %v3644 = vld [vmem:[%s27 + $0x330] sm:$0xff]
  %v3645 = vld [vmem:[%s27 + $0x338] sm:$0xff]
  %v3646 = vld [vmem:[%s27 + $0x340] sm:$0xff]
  %v3647 = vld [vmem:[%s27 + $0x348] sm:$0xff]
  %v3648 = vld [vmem:[%s27 + $0x350] sm:$0xff]
  %v3649 = vld [vmem:[%s27 + $0x358] sm:$0xff]
  %v3650 = vld [vmem:[%s27 + $0x360] sm:$0xff]
  %v3651 = vld [vmem:[%s27 + $0x368] sm:$0xff]
  %v3652 = vld [vmem:[%s27 + $0x370] sm:$0xff]
  %v3653 = vld [vmem:[%s27 + $0x378] sm:$0xff]
  %v3654 = vld [vmem:[%s27 + $0x380] sm:$0xff]
  %v3655 = vld [vmem:[%s27 + $0x388] sm:$0xff]
  %v3656 = vld [vmem:[%s27 + $0x390] sm:$0xff]
  %v3657 = vld [vmem:[%s27 + $0x398] sm:$0xff]
  %v3658 = vld [vmem:[%s27 + $0x3a0] sm:$0xff]
  %v3659 = vld [vmem:[%s27 + $0x3a8] sm:$0xff]
  %v3660 = vld [vmem:[%s27 + $0x3b0] sm:$0xff]
  %v3661 = vld [vmem:[%s27 + $0x3b8] sm:$0xff]
  %v3662 = vld [vmem:[%s29] sm:$0x1]
  %v3664 = vlaneseq
  %v3665 = vshrl.u32 %v3664, 7
  %v3666 = vsub.s32 0, %v3665
  %v3667 = vrot.slane %v3662, %v3666
  %v3669 = vsel %vm814, %v3507, 0
  %v3671 = vsel %vm814, %v3509, 0
  %v3673 = vsel %vm814, %v3511, 0
  %v3675 = vsel %vm814, %v3513, 0
  %3677 = vmatprep.subr.mxu0 0.0
  %3678 = vmatpush1.msra.mxu0 %v3542
  %3679 = vmatprep.subr.mxu0 0.0
  %3680 = vmatpush1.msra.mxu0 %v3543
  %3681 = vmatprep.subr.mxu0 0.0
  %3682 = vmatpush1.msra.mxu0 %v3544
  %3683 = vmatprep.subr.mxu0 0.0
  %3684 = vmatpush1.msra.mxu0 %v3545
  %3685 = vmatprep.subr.mxu0 0.0
  %3686 = vmatpush1.msra.mxu0 %v3546
  %3687 = vmatprep.subr.mxu0 0.0
  %3688 = vmatpush1.msra.mxu0 %v3547
  %3689 = vmatprep.subr.mxu0 0.0
  %3690 = vmatpush1.msra.mxu0 %v3548
  %3691 = vmatprep.subr.mxu0 0.0
  %3692 = vmatpush1.msra.mxu0 %v3549
  %3693 = vmatprep.subr.mxu0 0.0
  %3694 = vmatpush1.msra.mxu0 %v3550
  %3695 = vmatprep.subr.mxu0 0.0
  %3696 = vmatpush1.msra.mxu0 %v3551
  %3697 = vmatprep.subr.mxu0 0.0
  %3698 = vmatpush1.msra.mxu0 %v3552
  %3699 = vmatprep.subr.mxu0 0.0
  %3700 = vmatpush1.msra.mxu0 %v3553
  %3701 = vmatprep.subr.mxu0 0.0
  %3702 = vmatpush1.msra.mxu0 %v3554
  %3703 = vmatprep.subr.mxu0 0.0
  %3704 = vmatpush1.msra.mxu0 %v3555
  %3705 = vmatprep.subr.mxu0 0.0
  %3706 = vmatpush1.msra.mxu0 %v3556
  %3707 = vmatprep.subr.mxu0 0.0
  %3708 = vmatpush1.msra.mxu0 %v3557
  %3709 = vmatprep.subr.mxu0 0.0
  %3710 = vmatpush1.msra.mxu0 %v3558
  %3711 = vmatprep.subr.mxu0 0.0
  %3712 = vmatpush1.msra.mxu0 %v3559
  %3713 = vmatprep.subr.mxu0 0.0
  %3714 = vmatpush1.msra.mxu0 %v3560
  %3715 = vmatprep.subr.mxu0 0.0
  %3716 = vmatpush1.msra.mxu0 %v3561
  %3717 = vmatprep.subr.mxu0 0.0
  %3718 = vmatpush1.msra.mxu0 %v3562
  %3719 = vmatprep.subr.mxu0 0.0
  %3720 = vmatpush1.msra.mxu0 %v3563
  %3721 = vmatprep.subr.mxu0 0.0
  %3722 = vmatpush1.msra.mxu0 %v3564
  %3723 = vmatprep.subr.mxu0 0.0
  %3724 = vmatpush1.msra.mxu0 %v3565
  %3725 = vmatprep.subr.mxu0 0.0
  %3726 = vmatpush1.msra.mxu0 %v3566
  %3727 = vmatprep.subr.mxu0 0.0
  %3728 = vmatpush1.msra.mxu0 %v3567
  %3729 = vmatprep.subr.mxu0 0.0
  %3730 = vmatpush1.msra.mxu0 %v3568
  %3731 = vmatprep.subr.mxu0 0.0
  %3732 = vmatpush1.msra.mxu0 %v3569
  %3733 = vmatprep.subr.mxu0 0.0
  %3734 = vmatpush1.msra.mxu0 %v3570
  %3735 = vmatprep.subr.mxu0 0.0
  %3736 = vmatpush1.msra.mxu0 %v3571
  %3737 = vmatprep.subr.mxu0 0.0
  %3738 = vmatpush1.msra.mxu0 %v3572
  %3739 = vmatprep.subr.mxu0 0.0
  %3740 = vmatpush1.msra.mxu0 %v3573
  %3741 = vmatprep.mubr.f32.mxu0 %v3518
  %3742 = vmatmul.mubr.f32.gmra.mrb[0].mxu0 %v2303
  %v3743 = vpop.f32.mrb[0].mxu0
  %v3744 = vadd.f32 %v3667, %v3743
  %v3745 = vpop.f32.mrb[0].mxu0
  %3746 = vmatprep.mubr.f32.mxu0 %v3519
  %3747 = vmatmul.mubr.f32.gmra.mrb[0].mxu0 %v2304
  %v3748 = vpop.f32.mrb[0].mxu0
  %v3749 = vadd.f32 %v3667, %v3748
  %v3750 = vpop.f32.mrb[0].mxu0
  %3751 = vmatprep.mubr.f32.mxu0 %v3520
  %3752 = vmatmul.mubr.f32.gmra.mrb[0].mxu0 %v2305
  %v3753 = vpop.f32.mrb[0].mxu0
  %v3754 = vadd.f32 %v3667, %v3753
  %v3755 = vpop.f32.mrb[0].mxu0
  %3756 = vmatprep.mubr.f32.mxu0 %v3521
  %3757 = vmatmul.mubr.f32.gmra.mrb[0].mxu0 %v2306
  %v3758 = vpop.f32.mrb[0].mxu0
  %v3759 = vadd.f32 %v3667, %v3758
  %v3760 = vpop.f32.mrb[0].mxu0
  %3761 = vdwg.mxu0
  %3762 = vmatprep.subr.mxu0 0.0
  %3763 = vmatpush1.msra.mxu0 %v3574
  %3764 = vmatprep.subr.mxu0 0.0
  %3765 = vmatpush1.msra.mxu0 %v3575
  %3766 = vmatprep.subr.mxu0 0.0
  %3767 = vmatpush1.msra.mxu0 %v3576
  %3768 = vmatprep.subr.mxu0 0.0
  %3769 = vmatpush1.msra.mxu0 %v3577
  %3770 = vmatprep.subr.mxu0 0.0
  %3771 = vmatpush1.msra.mxu0 %v3578
  %3772 = vmatprep.subr.mxu0 0.0
  %3773 = vmatpush1.msra.mxu0 %v3579
  %3774 = vmatprep.subr.mxu0 0.0
  %3775 = vmatpush1.msra.mxu0 %v3580
  %3776 = vmatprep.subr.mxu0 0.0
  %3777 = vmatpush1.msra.mxu0 %v3581
  %3778 = vmatprep.subr.mxu0 0.0
  %3779 = vmatpush1.msra.mxu0 %v3582
  %3780 = vmatprep.subr.mxu0 0.0
  %3781 = vmatpush1.msra.mxu0 %v3583
  %3782 = vmatprep.subr.mxu0 0.0
  %3783 = vmatpush1.msra.mxu0 %v3584
  %3784 = vmatprep.subr.mxu0 0.0
  %3785 = vmatpush1.msra.mxu0 %v3585
  %3786 = vmatprep.subr.mxu0 0.0
  %3787 = vmatpush1.msra.mxu0 %v3586
  %3788 = vmatprep.subr.mxu0 0.0
  %3789 = vmatpush1.msra.mxu0 %v3587
  %3790 = vmatprep.subr.mxu0 0.0
  %3791 = vmatpush1.msra.mxu0 %v3588
  %3792 = vmatprep.subr.mxu0 0.0
  %3793 = vmatpush1.msra.mxu0 %v3589
  %3794 = vmatprep.subr.mxu0 0.0
  %3795 = vmatpush1.msra.mxu0 %v3590
  %3796 = vmatprep.subr.mxu0 0.0
  %3797 = vmatpush1.msra.mxu0 %v3591
  %3798 = vmatprep.subr.mxu0 0.0
  %3799 = vmatpush1.msra.mxu0 %v3592
  %3800 = vmatprep.subr.mxu0 0.0
  %3801 = vmatpush1.msra.mxu0 %v3593
  %3802 = vmatprep.subr.mxu0 0.0
  %3803 = vmatpush1.msra.mxu0 %v3594
  %3804 = vmatprep.subr.mxu0 0.0
  %3805 = vmatpush1.msra.mxu0 %v3595
  %3806 = vmatprep.subr.mxu0 0.0
  %3807 = vmatpush1.msra.mxu0 %v3596
  %3808 = vmatprep.subr.mxu0 0.0
  %3809 = vmatpush1.msra.mxu0 %v3597
  %3810 = vmatprep.subr.mxu0 0.0
  %3811 = vmatpush1.msra.mxu0 %v3598
  %3812 = vmatprep.subr.mxu0 0.0
  %3813 = vmatpush1.msra.mxu0 %v3599
  %3814 = vmatprep.subr.mxu0 0.0
  %3815 = vmatpush1.msra.mxu0 %v3600
  %3816 = vmatprep.subr.mxu0 0.0
  %3817 = vmatpush1.msra.mxu0 %v3601
  %3818 = vmatprep.subr.mxu0 0.0
  %3819 = vmatpush1.msra.mxu0 %v3602
  %3820 = vmatprep.subr.mxu0 0.0
  %3821 = vmatpush1.msra.mxu0 %v3603
  %3822 = vmatprep.subr.mxu0 0.0
  %3823 = vmatpush1.msra.mxu0 %v3604
  %3824 = vmatprep.subr.mxu0 0.0
  %3825 = vmatpush1.msra.mxu0 %v3605
  %3826 = vmatprep.mubr.f32.mxu0 %v3526
  %3827 = vmatmul.mubr.f32.gmra.mrb[0].mxu0 %v3522
  %v3828 = vpop.f32.mrb[0].mxu0
  %v3829 = vadd.f32 %v3744, %v3828
  %v3830 = vpop.f32.mrb[0].mxu0
  %3831 = vmatprep.mubr.f32.mxu0 %v3527
  %3832 = vmatmul.mubr.f32.gmra.mrb[0].mxu0 %v3523
  %v3833 = vpop.f32.mrb[0].mxu0
  %v3834 = vadd.f32 %v3749, %v3833
  %v3835 = vpop.f32.mrb[0].mxu0
  %3836 = vmatprep.mubr.f32.mxu0 %v3528
  %3837 = vmatmul.mubr.f32.gmra.mrb[0].mxu0 %v3524
  %v3838 = vpop.f32.mrb[0].mxu0
  %v3839 = vadd.f32 %v3754, %v3838
  %v3840 = vpop.f32.mrb[0].mxu0
  %3841 = vmatprep.mubr.f32.mxu0 %v3529
  %3842 = vmatmul.mubr.f32.gmra.mrb[0].mxu0 %v3525
  %v3843 = vpop.f32.mrb[0].mxu0
  %v3844 = vadd.f32 %v3759, %v3843
  %v3845 = vpop.f32.mrb[0].mxu0
  %3846 = vdwg.mxu0
  %3847 = vmatprep.subr.mxu0 0.0
  %3848 = vmatpush1.msra.mxu0 %v3606
  %3849 = vmatprep.subr.mxu0 0.0
  %3850 = vmatpush1.msra.mxu0 %v3607
  %3851 = vmatprep.subr.mxu0 0.0
  %3852 = vmatpush1.msra.mxu0 %v3608
  %3853 = vmatprep.subr.mxu0 0.0
  %3854 = vmatpush1.msra.mxu0 %v3609
  %3855 = vmatprep.subr.mxu0 0.0
  %3856 = vmatpush1.msra.mxu0 %v3610
  %3857 = vmatprep.subr.mxu0 0.0
  %3858 = vmatpush1.msra.mxu0 %v3611
  %3859 = vmatprep.subr.mxu0 0.0
  %3860 = vmatpush1.msra.mxu0 %v3612
  %3861 = vmatprep.subr.mxu0 0.0
  %3862 = vmatpush1.msra.mxu0 %v3613
  %3863 = vmatprep.subr.mxu0 0.0
  %3864 = vmatpush1.msra.mxu0 %v3614
  %3865 = vmatprep.subr.mxu0 0.0
  %3866 = vmatpush1.msra.mxu0 %v3615
  %3867 = vmatprep.subr.mxu0 0.0
  %3868 = vmatpush1.msra.mxu0 %v3616
  %3869 = vmatprep.subr.mxu0 0.0
  %3870 = vmatpush1.msra.mxu0 %v3617
  %3871 = vmatprep.subr.mxu0 0.0
  %3872 = vmatpush1.msra.mxu0 %v3618
  %3873 = vmatprep.subr.mxu0 0.0
  %3874 = vmatpush1.msra.mxu0 %v3619
  %3875 = vmatprep.subr.mxu0 0.0
  %3876 = vmatpush1.msra.mxu0 %v3620
  %3877 = vmatprep.subr.mxu0 0.0
  %3878 = vmatpush1.msra.mxu0 %v3621
  %3879 = vmatprep.subr.mxu0 0.0
  %3880 = vmatpush1.msra.mxu0 %v3622
  %3881 = vmatprep.subr.mxu0 0.0
  %3882 = vmatpush1.msra.mxu0 %v3623
  %3883 = vmatprep.subr.mxu0 0.0
  %3884 = vmatpush1.msra.mxu0 %v3624
  %3885 = vmatprep.subr.mxu0 0.0
  %3886 = vmatpush1.msra.mxu0 %v3625
  %3887 = vmatprep.subr.mxu0 0.0
  %3888 = vmatpush1.msra.mxu0 %v3626
  %3889 = vmatprep.subr.mxu0 0.0
  %3890 = vmatpush1.msra.mxu0 %v3627
  %3891 = vmatprep.subr.mxu0 0.0
  %3892 = vmatpush1.msra.mxu0 %v3628
  %3893 = vmatprep.subr.mxu0 0.0
  %3894 = vmatpush1.msra.mxu0 %v3629
  %3895 = vmatprep.subr.mxu0 0.0
  %3896 = vmatpush1.msra.mxu0 %v3630
  %3897 = vmatprep.subr.mxu0 0.0
  %3898 = vmatpush1.msra.mxu0 %v3631
  %3899 = vmatprep.subr.mxu0 0.0
  %3900 = vmatpush1.msra.mxu0 %v3632
  %3901 = vmatprep.subr.mxu0 0.0
  %3902 = vmatpush1.msra.mxu0 %v3633
  %3903 = vmatprep.subr.mxu0 0.0
  %3904 = vmatpush1.msra.mxu0 %v3634
  %3905 = vmatprep.subr.mxu0 0.0
  %3906 = vmatpush1.msra.mxu0 %v3635
  %3907 = vmatprep.subr.mxu0 0.0
  %3908 = vmatpush1.msra.mxu0 %v3636
  %3909 = vmatprep.subr.mxu0 0.0
  %3910 = vmatpush1.msra.mxu0 %v3637
  %3911 = vmatprep.mubr.f32.mxu0 %v3534
  %3912 = vmatmul.mubr.f32.gmra.mrb[0].mxu0 %v3530
  %v3913 = vpop.f32.mrb[0].mxu0
  %v3914 = vadd.f32 %v3829, %v3913
  %v3915 = vpop.f32.mrb[0].mxu0
  %3916 = vmatprep.mubr.f32.mxu0 %v3535
  %3917 = vmatmul.mubr.f32.gmra.mrb[0].mxu0 %v3531
  %v3918 = vpop.f32.mrb[0].mxu0
  %v3919 = vadd.f32 %v3834, %v3918
  %v3920 = vpop.f32.mrb[0].mxu0
  %3921 = vmatprep.mubr.f32.mxu0 %v3536
  %3922 = vmatmul.mubr.f32.gmra.mrb[0].mxu0 %v3532
  %v3923 = vpop.f32.mrb[0].mxu0
  %v3924 = vadd.f32 %v3839, %v3923
  %v3925 = vpop.f32.mrb[0].mxu0
  %3926 = vmatprep.mubr.f32.mxu0 %v3537
  %3927 = vmatmul.mubr.f32.gmra.mrb[0].mxu0 %v3533
  %v3928 = vpop.f32.mrb[0].mxu0
  %v3929 = vadd.f32 %v3844, %v3928
  %v3930 = vpop.f32.mrb[0].mxu0
  %3931 = vdwg.mxu0
  %3932 = vmatprep.subr.mxu0 0.0
  %3933 = vmatpush1.msra.mxu0 %v3638
  %3934 = vmatprep.subr.mxu0 0.0
  %3935 = vmatpush1.msra.mxu0 %v3639
  %3936 = vmatprep.subr.mxu0 0.0
  %3937 = vmatpush1.msra.mxu0 %v3640
  %3938 = vmatprep.subr.mxu0 0.0
  %3939 = vmatpush1.msra.mxu0 %v3641
  %3940 = vmatprep.subr.mxu0 0.0
  %3941 = vmatpush1.msra.mxu0 %v3642
  %3942 = vmatprep.subr.mxu0 0.0
  %3943 = vmatpush1.msra.mxu0 %v3643
  %3944 = vmatprep.subr.mxu0 0.0
  %3945 = vmatpush1.msra.mxu0 %v3644
  %3946 = vmatprep.subr.mxu0 0.0
  %3947 = vmatpush1.msra.mxu0 %v3645
  %3948 = vmatprep.subr.mxu0 0.0
  %3949 = vmatpush1.msra.mxu0 %v3646
  %3950 = vmatprep.subr.mxu0 0.0
  %3951 = vmatpush1.msra.mxu0 %v3647
  %3952 = vmatprep.subr.mxu0 0.0
  %3953 = vmatpush1.msra.mxu0 %v3648
  %3954 = vmatprep.subr.mxu0 0.0
  %3955 = vmatpush1.msra.mxu0 %v3649
  %3956 = vmatprep.subr.mxu0 0.0
  %3957 = vmatpush1.msra.mxu0 %v3650
  %3958 = vmatprep.subr.mxu0 0.0
  %3959 = vmatpush1.msra.mxu0 %v3651
  %3960 = vmatprep.subr.mxu0 0.0
  %3961 = vmatpush1.msra.mxu0 %v3652
  %3962 = vmatprep.subr.mxu0 0.0
  %3963 = vmatpush1.msra.mxu0 %v3653
  %3964 = vmatprep.subr.mxu0 0.0
  %3965 = vmatpush1.msra.mxu0 %v3654
  %3966 = vmatprep.subr.mxu0 0.0
  %3967 = vmatpush1.msra.mxu0 %v3655
  %3968 = vmatprep.subr.mxu0 0.0
  %3969 = vmatpush1.msra.mxu0 %v3656
  %3970 = vmatprep.subr.mxu0 0.0
  %3971 = vmatpush1.msra.mxu0 %v3657
  %3972 = vmatprep.subr.mxu0 0.0
  %3973 = vmatpush1.msra.mxu0 %v3658
  %3974 = vmatprep.subr.mxu0 0.0
  %3975 = vmatpush1.msra.mxu0 %v3659
  %3976 = vmatprep.subr.mxu0 0.0
  %3977 = vmatpush1.msra.mxu0 %v3660
  %3978 = vmatprep.subr.mxu0 0.0
  %3979 = vmatpush1.msra.mxu0 %v3661
  %3980 = vmatprep.subr.mxu0 0.0
  %3981 = vmatpush1.msra.mxu0 0.0
  %3982 = vmatprep.subr.mxu0 0.0
  %3983 = vmatpush1.msra.mxu0 0.0
  %3984 = vmatprep.subr.mxu0 0.0
  %3985 = vmatpush1.msra.mxu0 0.0
  %3986 = vmatprep.subr.mxu0 0.0
  %3987 = vmatpush1.msra.mxu0 0.0
  %3988 = vmatprep.subr.mxu0 0.0
  %3989 = vmatpush1.msra.mxu0 0.0
  %3990 = vmatprep.subr.mxu0 0.0
  %3991 = vmatpush1.msra.mxu0 0.0
  %3992 = vmatprep.subr.mxu0 0.0
  %3993 = vmatpush1.msra.mxu0 0.0
  %3994 = vmatprep.subr.mxu0 0.0
  %3995 = vmatpush1.msra.mxu0 0.0
  %3996 = vmatprep.mubr.f32.mxu0 %v3669
  %3997 = vmatmul.mubr.f32.gmra.mrb[0].mxu0 %v3538
  %v3998 = vpop.f32.mrb[0].mxu0
  %v3999 = vadd.f32 %v3914, %v3998
  %v4000 = vpop.f32.mrb[0].mxu0
  %4001 = vmatprep.mubr.f32.mxu0 %v3671
  %4002 = vmatmul.mubr.f32.gmra.mrb[0].mxu0 %v3539
  %v4003 = vpop.f32.mrb[0].mxu0
  %v4004 = vadd.f32 %v3919, %v4003
  %v4005 = vpop.f32.mrb[0].mxu0
  %4006 = vmatprep.mubr.f32.mxu0 %v3673
  %4007 = vmatmul.mubr.f32.gmra.mrb[0].mxu0 %v3540
  %v4008 = vpop.f32.mrb[0].mxu0
  %v4009 = vadd.f32 %v3924, %v4008
  %v4010 = vpop.f32.mrb[0].mxu0
  %4011 = vmatprep.mubr.f32.mxu0 %v3675
  %4012 = vmatmul.mubr.f32.gmra.mrb[0].mxu0 %v3541
  %v4013 = vpop.f32.mrb[0].mxu0
  %v4014 = vadd.f32 %v3929, %v4013
  %v4015 = vpop.f32.mrb[0].mxu0
  %4016 = vdwg.mxu0
  %v4017 = vmax.f32 %v3999, 0.0
  %v4018 = vmax.f32 %v4004, 0.0
  %v4019 = vmax.f32 %v4009, 0.0
  %v4020 = vmax.f32 %v4014, 0.0
  %v4021 = vrot.slane %v4017, 7
  %v4022 = vrot.slane %v4018, 7
  %v4023 = vrot.slane %v4019, 7
  %v4024 = vrot.slane %v4020, 7
  %v4025 = vsel %vm770, %v4023, %v4024
  %v4026 = vsel %vm770, %v4022, %v4023
  %v4027 = vsel %vm770, %v4021, %v4022
  %v4028 = vsel %vm770, %v4024, %v4021
  %v4029 = vmul.f32 %v4028, %v2230
  %v4030 = vmul.f32 %v4027, %v2235
  %v4031 = vmul.f32 %v4026, %v2240
  %v4032 = vmul.f32 %v4025, %v2245
  %v4033 = vrot.slane %v4017, 1
  %v4034 = vrot.slane %v4018, 1
  %v4035 = vrot.slane %v4019, 1
  %v4036 = vrot.slane %v4020, 1
  %v4037 = vsel %vm789, %v4035, %v4036
  %v4038 = vsel %vm789, %v4034, %v4035
  %v4039 = vsel %vm789, %v4033, %v4034
  %v4040 = vsel %vm789, %v4036, %v4033
  %v4041 = vmul.f32 %v4039, %v2266
  %v4042 = vmul.f32 %v4038, %v2271
  %v4043 = vmul.f32 %v4037, %v2276
  %v4044 = vmul.f32 %v4040, %v2281
  %v4045 = vld [vmem:[%s31] sm:$0xff]
  %v4046 = vld [vmem:[%s31 + $0x8] sm:$0xff]
  %v4047 = vld [vmem:[%s31 + $0x10] sm:$0xff]
  %v4048 = vld [vmem:[%s31 + $0x18] sm:$0xff]
  %v4049 = vld [vmem:[%s31 + $0x20] sm:$0xff]
  %v4050 = vld [vmem:[%s31 + $0x28] sm:$0xff]
  %v4051 = vld [vmem:[%s31 + $0x30] sm:$0xff]
  %v4052 = vld [vmem:[%s31 + $0x38] sm:$0xff]
  %v4053 = vld [vmem:[%s31 + $0x40] sm:$0xff]
  %v4054 = vld [vmem:[%s31 + $0x48] sm:$0xff]
  %v4055 = vld [vmem:[%s31 + $0x50] sm:$0xff]
  %v4056 = vld [vmem:[%s31 + $0x58] sm:$0xff]
  %v4057 = vld [vmem:[%s31 + $0x60] sm:$0xff]
  %v4058 = vld [vmem:[%s31 + $0x68] sm:$0xff]
  %v4059 = vld [vmem:[%s31 + $0x70] sm:$0xff]
  %v4060 = vld [vmem:[%s31 + $0x78] sm:$0xff]
  %v4061 = vld [vmem:[%s31 + $0x80] sm:$0xff]
  %v4062 = vld [vmem:[%s31 + $0x88] sm:$0xff]
  %v4063 = vld [vmem:[%s31 + $0x90] sm:$0xff]
  %v4064 = vld [vmem:[%s31 + $0x98] sm:$0xff]
  %v4065 = vld [vmem:[%s31 + $0xa0] sm:$0xff]
  %v4066 = vld [vmem:[%s31 + $0xa8] sm:$0xff]
  %v4067 = vld [vmem:[%s31 + $0xb0] sm:$0xff]
  %v4068 = vld [vmem:[%s31 + $0xb8] sm:$0xff]
  %v4069 = vld [vmem:[%s31 + $0xc0] sm:$0xff]
  %v4070 = vld [vmem:[%s31 + $0xc8] sm:$0xff]
  %v4071 = vld [vmem:[%s31 + $0xd0] sm:$0xff]
  %v4072 = vld [vmem:[%s31 + $0xd8] sm:$0xff]
  %v4073 = vld [vmem:[%s31 + $0xe0] sm:$0xff]
  %v4074 = vld [vmem:[%s31 + $0xe8] sm:$0xff]
  %v4075 = vld [vmem:[%s31 + $0xf0] sm:$0xff]
  %v4076 = vld [vmem:[%s31 + $0xf8] sm:$0xff]
  %v4077 = vld [vmem:[%s31 + $0x100] sm:$0xff]
  %v4078 = vld [vmem:[%s31 + $0x108] sm:$0xff]
  %v4079 = vld [vmem:[%s31 + $0x110] sm:$0xff]
  %v4080 = vld [vmem:[%s31 + $0x118] sm:$0xff]
  %v4081 = vld [vmem:[%s31 + $0x120] sm:$0xff]
  %v4082 = vld [vmem:[%s31 + $0x128] sm:$0xff]
  %v4083 = vld [vmem:[%s31 + $0x130] sm:$0xff]
  %v4084 = vld [vmem:[%s31 + $0x138] sm:$0xff]
  %v4085 = vld [vmem:[%s31 + $0x140] sm:$0xff]
  %v4086 = vld [vmem:[%s31 + $0x148] sm:$0xff]
  %v4087 = vld [vmem:[%s31 + $0x150] sm:$0xff]
  %v4088 = vld [vmem:[%s31 + $0x158] sm:$0xff]
  %v4089 = vld [vmem:[%s31 + $0x160] sm:$0xff]
  %v4090 = vld [vmem:[%s31 + $0x168] sm:$0xff]
  %v4091 = vld [vmem:[%s31 + $0x170] sm:$0xff]
  %v4092 = vld [vmem:[%s31 + $0x178] sm:$0xff]
  %v4093 = vld [vmem:[%s31 + $0x180] sm:$0xff]
  %v4094 = vld [vmem:[%s31 + $0x188] sm:$0xff]
  %v4095 = vld [vmem:[%s31 + $0x190] sm:$0xff]
  %v4096 = vld [vmem:[%s31 + $0x198] sm:$0xff]
  %v4097 = vld [vmem:[%s31 + $0x1a0] sm:$0xff]
  %v4098 = vld [vmem:[%s31 + $0x1a8] sm:$0xff]
  %v4099 = vld [vmem:[%s31 + $0x1b0] sm:$0xff]
  %v4100 = vld [vmem:[%s31 + $0x1b8] sm:$0xff]
  %v4101 = vld [vmem:[%s31 + $0x1c0] sm:$0xff]
  %v4102 = vld [vmem:[%s31 + $0x1c8] sm:$0xff]
  %v4103 = vld [vmem:[%s31 + $0x1d0] sm:$0xff]
  %v4104 = vld [vmem:[%s31 + $0x1d8] sm:$0xff]
  %v4105 = vld [vmem:[%s31 + $0x1e0] sm:$0xff]
  %v4106 = vld [vmem:[%s31 + $0x1e8] sm:$0xff]
  %v4107 = vld [vmem:[%s31 + $0x1f0] sm:$0xff]
  %v4108 = vld [vmem:[%s31 + $0x1f8] sm:$0xff]
  %v4109 = vld [vmem:[%s31 + $0x200] sm:$0xff]
  %v4110 = vld [vmem:[%s31 + $0x208] sm:$0xff]
  %v4111 = vld [vmem:[%s31 + $0x210] sm:$0xff]
  %v4112 = vld [vmem:[%s31 + $0x218] sm:$0xff]
  %v4113 = vld [vmem:[%s31 + $0x220] sm:$0xff]
  %v4114 = vld [vmem:[%s31 + $0x228] sm:$0xff]
  %v4115 = vld [vmem:[%s31 + $0x230] sm:$0xff]
  %v4116 = vld [vmem:[%s31 + $0x238] sm:$0xff]
  %v4117 = vld [vmem:[%s31 + $0x240] sm:$0xff]
  %v4118 = vld [vmem:[%s31 + $0x248] sm:$0xff]
  %v4119 = vld [vmem:[%s31 + $0x250] sm:$0xff]
  %v4120 = vld [vmem:[%s31 + $0x258] sm:$0xff]
  %v4121 = vld [vmem:[%s31 + $0x260] sm:$0xff]
  %v4122 = vld [vmem:[%s31 + $0x268] sm:$0xff]
  %v4123 = vld [vmem:[%s31 + $0x270] sm:$0xff]
  %v4124 = vld [vmem:[%s31 + $0x278] sm:$0xff]
  %v4125 = vld [vmem:[%s31 + $0x280] sm:$0xff]
  %v4126 = vld [vmem:[%s31 + $0x288] sm:$0xff]
  %v4127 = vld [vmem:[%s31 + $0x290] sm:$0xff]
  %v4128 = vld [vmem:[%s31 + $0x298] sm:$0xff]
  %v4129 = vld [vmem:[%s31 + $0x2a0] sm:$0xff]
  %v4130 = vld [vmem:[%s31 + $0x2a8] sm:$0xff]
  %v4131 = vld [vmem:[%s31 + $0x2b0] sm:$0xff]
  %v4132 = vld [vmem:[%s31 + $0x2b8] sm:$0xff]
  %v4133 = vld [vmem:[%s31 + $0x2c0] sm:$0xff]
  %v4134 = vld [vmem:[%s31 + $0x2c8] sm:$0xff]
  %v4135 = vld [vmem:[%s31 + $0x2d0] sm:$0xff]
  %v4136 = vld [vmem:[%s31 + $0x2d8] sm:$0xff]
  %v4137 = vld [vmem:[%s31 + $0x2e0] sm:$0xff]
  %v4138 = vld [vmem:[%s31 + $0x2e8] sm:$0xff]
  %v4139 = vld [vmem:[%s31 + $0x2f0] sm:$0xff]
  %v4140 = vld [vmem:[%s31 + $0x2f8] sm:$0xff]
  %v4141 = vld [vmem:[%s33] sm:$0x3]
  %v4143 = vlaneseq
  %v4144 = vshrl.u32 %v4143, 7
  %v4145 = vsub.s32 0, %v4144
  %v4146 = vrot.slane %v4141, %v4145
  %v4147 = vlaneseq
  %v4148 = vshrl.u32 %v4147, 7
  %v4149 = vsub.s32 1, %v4148
  %v4150 = vrot.slane %v4141, %v4149
  %4153 = vmatprep.subr.mxu0 %v4046
  %4154 = vmatpush1.msra.mxu0 %v4045
  %4155 = vmatprep.subr.mxu0 %v4048
  %4156 = vmatpush1.msra.mxu0 %v4047
  %4157 = vmatprep.subr.mxu0 %v4050
  %4158 = vmatpush1.msra.mxu0 %v4049
  %4159 = vmatprep.subr.mxu0 %v4052
  %4160 = vmatpush1.msra.mxu0 %v4051
  %4161 = vmatprep.subr.mxu0 %v4054
  %4162 = vmatpush1.msra.mxu0 %v4053
  %4163 = vmatprep.subr.mxu0 %v4056
  %4164 = vmatpush1.msra.mxu0 %v4055
  %4165 = vmatprep.subr.mxu0 %v4058
  %4166 = vmatpush1.msra.mxu0 %v4057
  %4167 = vmatprep.subr.mxu0 %v4060
  %4168 = vmatpush1.msra.mxu0 %v4059
  %4169 = vmatprep.subr.mxu0 %v4062
  %4170 = vmatpush1.msra.mxu0 %v4061
  %4171 = vmatprep.subr.mxu0 %v4064
  %4172 = vmatpush1.msra.mxu0 %v4063
  %4173 = vmatprep.subr.mxu0 %v4066
  %4174 = vmatpush1.msra.mxu0 %v4065
  %4175 = vmatprep.subr.mxu0 %v4068
  %4176 = vmatpush1.msra.mxu0 %v4067
  %4177 = vmatprep.subr.mxu0 %v4070
  %4178 = vmatpush1.msra.mxu0 %v4069
  %4179 = vmatprep.subr.mxu0 %v4072
  %4180 = vmatpush1.msra.mxu0 %v4071
  %4181 = vmatprep.subr.mxu0 %v4074
  %4182 = vmatpush1.msra.mxu0 %v4073
  %4183 = vmatprep.subr.mxu0 %v4076
  %4184 = vmatpush1.msra.mxu0 %v4075
  %4185 = vmatprep.subr.mxu0 %v4078
  %4186 = vmatpush1.msra.mxu0 %v4077
  %4187 = vmatprep.subr.mxu0 %v4080
  %4188 = vmatpush1.msra.mxu0 %v4079
  %4189 = vmatprep.subr.mxu0 %v4082
  %4190 = vmatpush1.msra.mxu0 %v4081
  %4191 = vmatprep.subr.mxu0 %v4084
  %4192 = vmatpush1.msra.mxu0 %v4083
  %4193 = vmatprep.subr.mxu0 %v4086
  %4194 = vmatpush1.msra.mxu0 %v4085
  %4195 = vmatprep.subr.mxu0 %v4088
  %4196 = vmatpush1.msra.mxu0 %v4087
  %4197 = vmatprep.subr.mxu0 %v4090
  %4198 = vmatpush1.msra.mxu0 %v4089
  %4199 = vmatprep.subr.mxu0 %v4092
  %4200 = vmatpush1.msra.mxu0 %v4091
  %4201 = vmatprep.subr.mxu0 %v4094
  %4202 = vmatpush1.msra.mxu0 %v4093
  %4203 = vmatprep.subr.mxu0 %v4096
  %4204 = vmatpush1.msra.mxu0 %v4095
  %4205 = vmatprep.subr.mxu0 %v4098
  %4206 = vmatpush1.msra.mxu0 %v4097
  %4207 = vmatprep.subr.mxu0 %v4100
  %4208 = vmatpush1.msra.mxu0 %v4099
  %4209 = vmatprep.subr.mxu0 %v4102
  %4210 = vmatpush1.msra.mxu0 %v4101
  %4211 = vmatprep.subr.mxu0 %v4104
  %4212 = vmatpush1.msra.mxu0 %v4103
  %4213 = vmatprep.subr.mxu0 %v4106
  %4214 = vmatpush1.msra.mxu0 %v4105
  %4215 = vmatprep.subr.mxu0 %v4108
  %4216 = vmatpush1.msra.mxu0 %v4107
  %4217 = vmatprep.mubr.f32.mxu0 %v4017
  %4218 = vmatmul.mubr.f32.gmra.mrb[0].mxu0 %v4029
  %v4219 = vpop.f32.mrb[0].mxu0
  %v4220 = vadd.f32 %v4146, %v4219
  %v4221 = vpop.f32.mrb[0].mxu0
  %v4222 = vadd.f32 %v4150, %v4221
  %4223 = vmatprep.mubr.f32.mxu0 %v4018
  %4224 = vmatmul.mubr.f32.gmra.mrb[0].mxu0 %v4030
  %v4225 = vpop.f32.mrb[0].mxu0
  %v4226 = vadd.f32 %v4146, %v4225
  %v4227 = vpop.f32.mrb[0].mxu0
  %v4228 = vadd.f32 %v4150, %v4227
  %4229 = vmatprep.mubr.f32.mxu0 %v4019
  %4230 = vmatmul.mubr.f32.gmra.mrb[0].mxu0 %v4031
  %v4231 = vpop.f32.mrb[0].mxu0
  %v4232 = vadd.f32 %v4146, %v4231
  %v4233 = vpop.f32.mrb[0].mxu0
  %v4234 = vadd.f32 %v4150, %v4233
  %4235 = vmatprep.mubr.f32.mxu0 %v4020
  %4236 = vmatmul.mubr.f32.gmra.mrb[0].mxu0 %v4032
  %v4237 = vpop.f32.mrb[0].mxu0
  %v4238 = vadd.f32 %v4146, %v4237
  %v4239 = vpop.f32.mrb[0].mxu0
  %v4240 = vadd.f32 %v4150, %v4239
  %4241 = vdwg.mxu0
  %4242 = vmatprep.subr.mxu0 %v4110
  %4243 = vmatpush1.msra.mxu0 %v4109
  %4244 = vmatprep.subr.mxu0 %v4112
  %4245 = vmatpush1.msra.mxu0 %v4111
  %4246 = vmatprep.subr.mxu0 %v4114
  %4247 = vmatpush1.msra.mxu0 %v4113
  %4248 = vmatprep.subr.mxu0 %v4116
  %4249 = vmatpush1.msra.mxu0 %v4115
  %4250 = vmatprep.subr.mxu0 %v4118
  %4251 = vmatpush1.msra.mxu0 %v4117
  %4252 = vmatprep.subr.mxu0 %v4120
  %4253 = vmatpush1.msra.mxu0 %v4119
  %4254 = vmatprep.subr.mxu0 %v4122
  %4255 = vmatpush1.msra.mxu0 %v4121
  %4256 = vmatprep.subr.mxu0 %v4124
  %4257 = vmatpush1.msra.mxu0 %v4123
  %4258 = vmatprep.subr.mxu0 %v4126
  %4259 = vmatpush1.msra.mxu0 %v4125
  %4260 = vmatprep.subr.mxu0 %v4128
  %4261 = vmatpush1.msra.mxu0 %v4127
  %4262 = vmatprep.subr.mxu0 %v4130
  %4263 = vmatpush1.msra.mxu0 %v4129
  %4264 = vmatprep.subr.mxu0 %v4132
  %4265 = vmatpush1.msra.mxu0 %v4131
  %4266 = vmatprep.subr.mxu0 %v4134
  %4267 = vmatpush1.msra.mxu0 %v4133
  %4268 = vmatprep.subr.mxu0 %v4136
  %4269 = vmatpush1.msra.mxu0 %v4135
  %4270 = vmatprep.subr.mxu0 %v4138
  %4271 = vmatpush1.msra.mxu0 %v4137
  %4272 = vmatprep.subr.mxu0 %v4140
  %4273 = vmatpush1.msra.mxu0 %v4139
  %4274 = vmatprep.subr.mxu0 0.0
  %4275 = vmatpush1.msra.mxu0 0.0
  %4276 = vmatprep.subr.mxu0 0.0
  %4277 = vmatpush1.msra.mxu0 0.0
  %4278 = vmatprep.subr.mxu0 0.0
  %4279 = vmatpush1.msra.mxu0 0.0
  %4280 = vmatprep.subr.mxu0 0.0
  %4281 = vmatpush1.msra.mxu0 0.0
  %4282 = vmatprep.subr.mxu0 0.0
  %4283 = vmatpush1.msra.mxu0 0.0
  %4284 = vmatprep.subr.mxu0 0.0
  %4285 = vmatpush1.msra.mxu0 0.0
  %4286 = vmatprep.subr.mxu0 0.0
  %4287 = vmatpush1.msra.mxu0 0.0
  %4288 = vmatprep.subr.mxu0 0.0
  %4289 = vmatpush1.msra.mxu0 0.0
  %4290 = vmatprep.subr.mxu0 0.0
  %4291 = vmatpush1.msra.mxu0 0.0
  %4292 = vmatprep.subr.mxu0 0.0
  %4293 = vmatpush1.msra.mxu0 0.0
  %4294 = vmatprep.subr.mxu0 0.0
  %4295 = vmatpush1.msra.mxu0 0.0
  %4296 = vmatprep.subr.mxu0 0.0
  %4297 = vmatpush1.msra.mxu0 0.0
  %4298 = vmatprep.subr.mxu0 0.0
  %4299 = vmatpush1.msra.mxu0 0.0
  %4300 = vmatprep.subr.mxu0 0.0
  %4301 = vmatpush1.msra.mxu0 0.0
  %4302 = vmatprep.subr.mxu0 0.0
  %4303 = vmatpush1.msra.mxu0 0.0
  %4304 = vmatprep.subr.mxu0 0.0
  %4305 = vmatpush1.msra.mxu0 0.0
  %4306 = vmatprep.mubr.f32.mxu0 0.0
  %4307 = vmatmul.mubr.f32.gmra.mrb[0].mxu0 %v4041
  %v4308 = vpop.f32.mrb[0].mxu0
  %v4309 = vadd.f32 %v4220, %v4308
  %v4310 = vpop.f32.mrb[0].mxu0
  %v4311 = vadd.f32 %v4222, %v4310
  %4312 = vmatprep.mubr.f32.mxu0 0.0
  %4313 = vmatmul.mubr.f32.gmra.mrb[0].mxu0 %v4042
  %v4314 = vpop.f32.mrb[0].mxu0
  %v4315 = vadd.f32 %v4226, %v4314
  %v4316 = vpop.f32.mrb[0].mxu0
  %v4317 = vadd.f32 %v4228, %v4316
  %4318 = vmatprep.mubr.f32.mxu0 0.0
  %4319 = vmatmul.mubr.f32.gmra.mrb[0].mxu0 %v4043
  %v4320 = vpop.f32.mrb[0].mxu0
  %v4321 = vadd.f32 %v4232, %v4320
  %v4322 = vpop.f32.mrb[0].mxu0
  %v4323 = vadd.f32 %v4234, %v4322
  %4324 = vmatprep.mubr.f32.mxu0 0.0
  %4325 = vmatmul.mubr.f32.gmra.mrb[0].mxu0 %v4044
  %v4326 = vpop.f32.mrb[0].mxu0
  %v4327 = vadd.f32 %v4238, %v4326
  %v4328 = vpop.f32.mrb[0].mxu0
  %v4329 = vadd.f32 %v4240, %v4328
  %4330 = vdwg.mxu0
  %v4331 = vmax.f32 %v4309, 0.0
  %v4332 = vmax.f32 %v4311, 0.0
  %v4333 = vmax.f32 %v4315, 0.0
  %v4334 = vmax.f32 %v4317, 0.0
  %v4335 = vmax.f32 %v4321, 0.0
  %v4336 = vmax.f32 %v4323, 0.0
  %v4337 = vmax.f32 %v4327, 0.0
  %v4338 = vmax.f32 %v4329, 0.0
  %4339 = vst [vmem:[%s71] sm:$0xff] %v4331
  %4340 = vst [vmem:[%s71 + $0x8] sm:$0xff] %v4332
  %4341 = vst [vmem:[%s71 + $0x10] sm:$0xff] %v4333
  %4342 = vst [vmem:[%s71 + $0x18] sm:$0xff] %v4334
  %4343 = vst [vmem:[%s71 + $0x20] sm:$0xff] %v4335
  %4344 = vst [vmem:[%s71 + $0x28] sm:$0xff] %v4336
  %4345 = vst [vmem:[%s71 + $0x30] sm:$0xff] %v4337
  %4346 = vst [vmem:[%s71 + $0x38] sm:$0xff] %v4338
  // Predicated region
  $region142: #{forward.1} parent=0 // pred_check
    _
  $region143: #{forward.1} parent=0 // pred_check_branch
    %4348 = sbr.rel (0) target = $region145
  $region144: #{forward.1} parent=0 // pred_region
    _
  $region145: #{forward.1} parent=0 // pred_fallthru
    _
  // Predicated region
  $region146: #{forward.1} parent=0 // pred_check
    _
  $region147: #{forward.1} parent=0 // pred_check_branch
    %4350 = sbr.rel (0) target = $region149
  $region148: #{forward.1} parent=0 // pred_region
    _
  $region149: #{forward.1} parent=0 // pred_fallthru
    _

</llo_original>
